<compile_context>
chip_gen: v7x
topology: tpu7x:2x2x1
jax: 0.10.0
libtpu: 0.0.40
codegen_flags: <defaults>
</compile_context>

<pallas_src>
import functools

import jax
import jax.numpy as jnp
from jax.experimental import pallas as pl
from jax.experimental.pallas import tpu as pltpu

# ----------------------------- model config (small) -----------------------------
IN_CHANNELS = 4        # (orig 12)
PATCH_SIZE = 20        # (orig 20)
SEQ_LENGTH = 160       # (orig 5000) -> 8 patches
HIDDEN = 32            # (orig 768)
DEPTH = 2              # (orig 12)
N_HEADS = 4
HEAD_DIM = HIDDEN // N_HEADS
MLP_HIDDEN = 4 * HIDDEN
N_CLASSES = 2
N_PATCHES = SEQ_LENGTH // PATCH_SIZE
SEQ = N_PATCHES + 1    # +1 for CLS token


# ----------------------------- fused Pallas kernel -------------------------------
def _vit_fused_kernel(
    xp_ref, pw_ref, pb_ref, cls_ref, pos_ref,
    ln1g_ref, ln1b_ref, wqkv_ref, bqkv_ref, wo_ref, bo_ref,
    ln2g_ref, ln2b_ref, w1_ref, b1_ref, w2_ref, b2_ref,
    hlng_ref, hlnb_ref, hw_ref, hb_ref,
    o_ref, *, batch, n_patches, depth,
):
    f32 = jnp.float32
    seq = n_patches + 1

    def layernorm(x, g, b):
        mu = jnp.mean(x, axis=-1, keepdims=True)
        var = jnp.mean((x - mu) ** 2, axis=-1, keepdims=True)
        return (x - mu) * jax.lax.rsqrt(var + 1e-5) * g + b

    def dot(a, bm):
        return jnp.dot(a, bm, preferred_element_type=f32)

    # --- patch embedding: Conv1d(k=stride=patch) == patchify + matmul, then CLS + pos ---
    tok = dot(xp_ref[...], pw_ref[...]) + pb_ref[...]            # (B*N, HIDDEN)
    rows = []
    for b in range(batch):
        tok_b = tok[b * n_patches:(b + 1) * n_patches, :]        # (N, HIDDEN)
        rows.append(jnp.concatenate([cls_ref[...], tok_b], axis=0) + pos_ref[...])
    h = jnp.concatenate(rows, axis=0)                            # (B*SEQ, HIDDEN)

    scale = 1.0 / jnp.sqrt(jnp.float32(HEAD_DIM))
    for l in range(depth):
        # --- multi-head self-attention (fused QKV matmul, all heads in-kernel) ---
        xn = layernorm(h, ln1g_ref[l], ln1b_ref[l])
        qkv = dot(xn, wqkv_ref[l]) + bqkv_ref[l]                 # (B*SEQ, 3*HIDDEN)
        ctx = []
        for b in range(batch):
            r = slice(b * seq, (b + 1) * seq)
            q_b = qkv[r, 0:HIDDEN] * scale                       # fold 1/sqrt(d) into Q
            k_b = qkv[r, HIDDEN:2 * HIDDEN]
            v_b = qkv[r, 2 * HIDDEN:3 * HIDDEN]
            head_outs = []
            for hh in range(N_HEADS):
                c = slice(hh * HEAD_DIM, (hh + 1) * HEAD_DIM)
                # TODO(synk): attention `mask` not implemented (mask=None path only).
                s = dot(q_b[:, c], k_b[:, c].T)                  # (SEQ, SEQ)
                m = jnp.max(s, axis=-1, keepdims=True)
                p = jnp.exp(s - m)
                p = p * pl.reciprocal(jnp.sum(p, axis=-1, keepdims=True), approx=True)
                head_outs.append(dot(p, v_b[:, c]))              # (SEQ, HD)
            ctx.append(jnp.concatenate(head_outs, axis=-1))      # (SEQ, HIDDEN)
        attn = jnp.concatenate(ctx, axis=0)                      # (B*SEQ, HIDDEN)
        h = h + dot(attn, wo_ref[l]) + bo_ref[l]

        # --- MLP ---
        xn = layernorm(h, ln2g_ref[l], ln2b_ref[l])
        # TODO(synk): PyTorch nn.GELU default is exact erf; tanh approximation used here.
        m1 = jax.nn.gelu(dot(xn, w1_ref[l]) + b1_ref[l], approximate=True)
        h = h + dot(m1, w2_ref[l]) + b2_ref[l]

    # --- classification head: per-batch CLS token -> LayerNorm -> Linear (fused epilogue) ---
    cls_tok = jnp.concatenate([h[b * seq:b * seq + 1, :] for b in range(batch)], axis=0)
    cls_tok = layernorm(cls_tok, hlng_ref[...], hlnb_ref[...])
    o_ref[...] = (dot(cls_tok, hw_ref[...]) + hb_ref[...]).astype(o_ref.dtype)


# ----------------------------- parameter init ------------------------------------
def init_params(key):
    def nrm(k, shape, scale=0.02):
        return scale * jax.random.normal(k, shape, dtype=jnp.float32)

    keys = jax.random.split(key, 6 + DEPTH)
    params = {
        # Conv1d(IN_CHANNELS, HIDDEN, kernel=PATCH, stride=PATCH) flattened to a matmul:
        # weight (HIDDEN, C, P) -> (C*P, HIDDEN)
        "patch_w": nrm(keys[0], (IN_CHANNELS * PATCH_SIZE, HIDDEN)),
        "patch_b": nrm(keys[1], (1, HIDDEN)),
        "cls": nrm(keys[2], (1, HIDDEN)),
        "pos": nrm(keys[3], (SEQ, HIDDEN)),
        "head_ln_g": jnp.ones((1, HIDDEN), jnp.float32),
        "head_ln_b": jnp.zeros((1, HIDDEN), jnp.float32),
        "head_w": nrm(keys[4], (HIDDEN, N_CLASSES)),
        "head_b": jnp.zeros((1, N_CLASSES), jnp.float32),
    }

    ln1_g, ln1_b, wqkv, bqkv, wo, bo = [], [], [], [], [], []
    ln2_g, ln2_b, w1, b1, w2, b2 = [], [], [], [], [], []
    for l in range(DEPTH):
        lk = jax.random.split(keys[6 + l], 6)
        ln1_g.append(jnp.ones((1, HIDDEN), jnp.float32))
        ln1_b.append(jnp.zeros((1, HIDDEN), jnp.float32))
        # fused QKV weight: [wq | wk | wv] along the output dim
        wqkv.append(jnp.concatenate([nrm(lk[0], (HIDDEN, HIDDEN)),
                                     nrm(lk[1], (HIDDEN, HIDDEN)),
                                     nrm(lk[2], (HIDDEN, HIDDEN))], axis=1))
        bqkv.append(jnp.zeros((1, 3 * HIDDEN), jnp.float32))
        wo.append(nrm(lk[3], (HIDDEN, HIDDEN)))
        bo.append(jnp.zeros((1, HIDDEN), jnp.float32))
        ln2_g.append(jnp.ones((1, HIDDEN), jnp.float32))
        ln2_b.append(jnp.zeros((1, HIDDEN), jnp.float32))
        w1.append(nrm(lk[4], (HIDDEN, MLP_HIDDEN)))
        b1.append(jnp.zeros((1, MLP_HIDDEN), jnp.float32))
        w2.append(nrm(lk[5], (MLP_HIDDEN, HIDDEN)))
        b2.append(jnp.zeros((1, HIDDEN), jnp.float32))

    stack = lambda xs: jnp.stack(xs, axis=0)   # (DEPTH, ...)
    params.update({
        "ln1_g": stack(ln1_g), "ln1_b": stack(ln1_b),
        "wqkv": stack(wqkv), "bqkv": stack(bqkv),
        "wo": stack(wo), "bo": stack(bo),
        "ln2_g": stack(ln2_g), "ln2_b": stack(ln2_b),
        "w1": stack(w1), "b1": stack(b1),
        "w2": stack(w2), "b2": stack(b2),
    })
    return params


# ----------------------------- forward pass ---------------------------------------
def vit_forward(params, x, mask=None):
    # x: (B, C, L)   [NCL, matches PyTorch Conv1d input layout]
    # TODO(synk): attention `mask` not implemented (mask=None path only).
    B, C, L = x.shape
    N = L // PATCH_SIZE

    # patchify once in the wrapper; everything else stays inside the fused kernel
    xp = x.reshape(B, C, N, PATCH_SIZE).transpose(0, 2, 1, 3).reshape(B * N, C * PATCH_SIZE)

    kernel = functools.partial(_vit_fused_kernel, batch=B, n_patches=N, depth=DEPTH)

    def full_spec(shape):
        nd = len(shape)
        return pl.BlockSpec(shape, lambda i, _nd=nd: (0,) * _nd)

    args = [
        xp, params["patch_w"], params["patch_b"], params["cls"], params["pos"],
        params["ln1_g"], params["ln1_b"], params["wqkv"], params["bqkv"],
        params["wo"], params["bo"], params["ln2_g"], params["ln2_b"],
        params["w1"], params["b1"], params["w2"], params["b2"],
        params["head_ln_g"], params["head_ln_b"], params["head_w"], params["head_b"],
    ]

    logits = pl.pallas_call(
        kernel,
        out_shape=jax.ShapeDtypeStruct((B, N_CLASSES), jnp.float32),
        grid=(1,),
        in_specs=[full_spec(a.shape) for a in args],
        out_specs=full_spec((B, N_CLASSES)),
        compiler_params=pltpu.CompilerParams(dimension_semantics=("arbitrary",)),
    )(*args)
    return logits


# ----------------------------- main ------------------------------------------------
if __name__ == "__main__":
    key = jax.random.PRNGKey(0)
    pkey, xkey = jax.random.split(key)
    params = init_params(pkey)
    x = jax.random.normal(xkey, (2, IN_CHANNELS, SEQ_LENGTH), dtype=jnp.float32)

    fwd = jax.jit(functools.partial(vit_forward, params))
    logits = fwd(x)
    jax.block_until_ready(logits)
    assert logits.shape == (2, N_CLASSES), logits.shape
    assert bool(jnp.all(jnp.isfinite(logits)))
    print("KERNEL_OK")
</pallas_src>

<mosaic_0001>
module attributes {stable_mosaic.version = 11 : i64} {
  func.func @_vit_fused_kernel(%arg0: i32, %arg1: memref<16x80xf32, #tpu.memory_space<vmem>>, %arg2: memref<80x32xf32, #tpu.memory_space<vmem>>, %arg3: memref<1x32xf32, #tpu.memory_space<vmem>>, %arg4: memref<1x32xf32, #tpu.memory_space<vmem>>, %arg5: memref<9x32xf32, #tpu.memory_space<vmem>>, %arg6: memref<2x1x32xf32, #tpu.memory_space<vmem>>, %arg7: memref<2x1x32xf32, #tpu.memory_space<vmem>>, %arg8: memref<2x32x96xf32, #tpu.memory_space<vmem>>, %arg9: memref<2x1x96xf32, #tpu.memory_space<vmem>>, %arg10: memref<2x32x32xf32, #tpu.memory_space<vmem>>, %arg11: memref<2x1x32xf32, #tpu.memory_space<vmem>>, %arg12: memref<2x1x32xf32, #tpu.memory_space<vmem>>, %arg13: memref<2x1x32xf32, #tpu.memory_space<vmem>>, %arg14: memref<2x32x128xf32, #tpu.memory_space<vmem>>, %arg15: memref<2x1x128xf32, #tpu.memory_space<vmem>>, %arg16: memref<2x128x32xf32, #tpu.memory_space<vmem>>, %arg17: memref<2x1x32xf32, #tpu.memory_space<vmem>>, %arg18: memref<1x32xf32, #tpu.memory_space<vmem>>, %arg19: memref<1x32xf32, #tpu.memory_space<vmem>>, %arg20: memref<32x2xf32, #tpu.memory_space<vmem>>, %arg21: memref<1x2xf32, #tpu.memory_space<vmem>>, %arg22: memref<2x2xf32, #tpu.memory_space<vmem>>) attributes {dimension_semantics = [#tpu.dimension_semantics<arbitrary>], iteration_bounds = array<i64: 1>, scalar_prefetch = 0 : i64, scratch_operands = 0 : i64, tpu.core_type = #tpu.core_type<tc>, window_params = [{pipeline_mode = #tpu.pipeline_mode<synchronous>, transform_indices = @transform_0, window_bounds = array<i64: 16, 80>}, {pipeline_mode = #tpu.pipeline_mode<synchronous>, transform_indices = @transform_1, window_bounds = array<i64: 80, 32>}, {pipeline_mode = #tpu.pipeline_mode<synchronous>, transform_indices = @transform_2, window_bounds = array<i64: 1, 32>}, {pipeline_mode = #tpu.pipeline_mode<synchronous>, transform_indices = @transform_3, window_bounds = array<i64: 1, 32>}, {pipeline_mode = #tpu.pipeline_mode<synchronous>, transform_indices = @transform_4, window_bounds = array<i64: 9, 32>}, {pipeline_mode = #tpu.pipeline_mode<synchronous>, transform_indices = @transform_5, window_bounds = array<i64: 2, 1, 32>}, {pipeline_mode = #tpu.pipeline_mode<synchronous>, transform_indices = @transform_6, window_bounds = array<i64: 2, 1, 32>}, {pipeline_mode = #tpu.pipeline_mode<synchronous>, transform_indices = @transform_7, window_bounds = array<i64: 2, 32, 96>}, {pipeline_mode = #tpu.pipeline_mode<synchronous>, transform_indices = @transform_8, window_bounds = array<i64: 2, 1, 96>}, {pipeline_mode = #tpu.pipeline_mode<synchronous>, transform_indices = @transform_9, window_bounds = array<i64: 2, 32, 32>}, {pipeline_mode = #tpu.pipeline_mode<synchronous>, transform_indices = @transform_10, window_bounds = array<i64: 2, 1, 32>}, {pipeline_mode = #tpu.pipeline_mode<synchronous>, transform_indices = @transform_11, window_bounds = array<i64: 2, 1, 32>}, {pipeline_mode = #tpu.pipeline_mode<synchronous>, transform_indices = @transform_12, window_bounds = array<i64: 2, 1, 32>}, {pipeline_mode = #tpu.pipeline_mode<synchronous>, transform_indices = @transform_13, window_bounds = array<i64: 2, 32, 128>}, {pipeline_mode = #tpu.pipeline_mode<synchronous>, transform_indices = @transform_14, window_bounds = array<i64: 2, 1, 128>}, {pipeline_mode = #tpu.pipeline_mode<synchronous>, transform_indices = @transform_15, window_bounds = array<i64: 2, 128, 32>}, {pipeline_mode = #tpu.pipeline_mode<synchronous>, transform_indices = @transform_16, window_bounds = array<i64: 2, 1, 32>}, {pipeline_mode = #tpu.pipeline_mode<synchronous>, transform_indices = @transform_17, window_bounds = array<i64: 1, 32>}, {pipeline_mode = #tpu.pipeline_mode<synchronous>, transform_indices = @transform_18, window_bounds = array<i64: 1, 32>}, {pipeline_mode = #tpu.pipeline_mode<synchronous>, transform_indices = @transform_19, window_bounds = array<i64: 32, 2>}, {pipeline_mode = #tpu.pipeline_mode<synchronous>, transform_indices = @transform_20, window_bounds = array<i64: 1, 2>}, {pipeline_mode = #tpu.pipeline_mode<synchronous>, transform_indices = @transform_21, window_bounds = array<i64: 2, 2>}]} {
    %c0 = arith.constant 0 : index
    %c0_0 = arith.constant 0 : index
    %0 = vector.load %arg1[%c0, %c0_0] : memref<16x80xf32, #tpu.memory_space<vmem>>, vector<16x80xf32>
    %c0_1 = arith.constant 0 : index
    %c0_2 = arith.constant 0 : index
    %1 = vector.load %arg2[%c0_1, %c0_2] : memref<80x32xf32, #tpu.memory_space<vmem>>, vector<80x32xf32>
    %cst = arith.constant dense<0.000000e+00> : vector<16x32xf32>
    %2 = tpu.matmul %0, %1, %cst {dimension_numbers = #tpu.dot_dimension_numbers<[1], [0], [0], [1], [0, 0, 1, 1], [], []>} : vector<16x80xf32>, vector<80x32xf32>, vector<16x32xf32> -> vector<16x32xf32>
    %c0_3 = arith.constant 0 : index
    %c0_4 = arith.constant 0 : index
    %3 = vector.load %arg3[%c0_3, %c0_4] : memref<1x32xf32, #tpu.memory_space<vmem>>, vector<1x32xf32>
    %4 = vector.broadcast %3 : vector<1x32xf32> to vector<16x32xf32>
    %5 = arith.addf %2, %4 : vector<16x32xf32>
    %6 = vector.extract_strided_slice %5 {offsets = [0, 0], sizes = [8, 32], strides = [1, 1]} : vector<16x32xf32> to vector<8x32xf32>
    %c0_5 = arith.constant 0 : index
    %c0_6 = arith.constant 0 : index
    %7 = vector.load %arg4[%c0_5, %c0_6] : memref<1x32xf32, #tpu.memory_space<vmem>>, vector<1x32xf32>
    %8 = tpu.concatenate %7, %6 in 0 : vector<1x32xf32>, vector<8x32xf32> -> vector<9x32xf32>
    %c0_7 = arith.constant 0 : index
    %c0_8 = arith.constant 0 : index
    %9 = vector.load %arg5[%c0_7, %c0_8] : memref<9x32xf32, #tpu.memory_space<vmem>>, vector<9x32xf32>
    %10 = arith.addf %8, %9 : vector<9x32xf32>
    %11 = vector.extract_strided_slice %5 {offsets = [8, 0], sizes = [8, 32], strides = [1, 1]} : vector<16x32xf32> to vector<8x32xf32>
    %c0_9 = arith.constant 0 : index
    %c0_10 = arith.constant 0 : index
    %12 = vector.load %arg4[%c0_9, %c0_10] : memref<1x32xf32, #tpu.memory_space<vmem>>, vector<1x32xf32>
    %13 = tpu.concatenate %12, %11 in 0 : vector<1x32xf32>, vector<8x32xf32> -> vector<9x32xf32>
    %c0_11 = arith.constant 0 : index
    %c0_12 = arith.constant 0 : index
    %14 = vector.load %arg5[%c0_11, %c0_12] : memref<9x32xf32, #tpu.memory_space<vmem>>, vector<9x32xf32>
    %15 = arith.addf %13, %14 : vector<9x32xf32>
    %16 = tpu.concatenate %10, %15 in 0 : vector<9x32xf32>, vector<9x32xf32> -> vector<18x32xf32>
    %cst_13 = arith.constant 8.000000e+00 : f32
    %17 = math.sqrt %cst_13 : f32
    %cst_14 = arith.constant 1.000000e+00 : f32
    %18 = arith.divf %cst_14, %17 : f32
    %c0_15 = arith.constant 0 : index
    %c0_16 = arith.constant 0 : index
    %c0_17 = arith.constant 0 : index
    %19 = vector.load %arg6[%c0_15, %c0_16, %c0_17] : memref<2x1x32xf32, #tpu.memory_space<vmem>>, vector<1x1x32xf32>
    %20 = vector.shape_cast %19 : vector<1x1x32xf32> to vector<1x32xf32>
    %c0_18 = arith.constant 0 : index
    %c0_19 = arith.constant 0 : index
    %c0_20 = arith.constant 0 : index
    %21 = vector.load %arg7[%c0_18, %c0_19, %c0_20] : memref<2x1x32xf32, #tpu.memory_space<vmem>>, vector<1x1x32xf32>
    %22 = vector.shape_cast %21 : vector<1x1x32xf32> to vector<1x32xf32>
    %cst_21 = arith.constant dense<0.000000e+00> : vector<18xf32>
    %23 = vector.multi_reduction <add>, %16, %cst_21 [1] : vector<18x32xf32> to vector<18xf32>
    %24 = vector.shape_cast %23 : vector<18xf32> to vector<18x1xf32>
    %cst_22 = arith.constant 3.200000e+01 : f32
    %25 = vector.broadcast %cst_22 : f32 to vector<18x1xf32>
    %26 = arith.divf %24, %25 : vector<18x1xf32>
    %27 = vector.broadcast %26 : vector<18x1xf32> to vector<18x32xf32>
    %28 = arith.subf %16, %27 : vector<18x32xf32>
    %29 = arith.mulf %28, %28 : vector<18x32xf32>
    %cst_23 = arith.constant dense<0.000000e+00> : vector<18xf32>
    %30 = vector.multi_reduction <add>, %29, %cst_23 [1] : vector<18x32xf32> to vector<18xf32>
    %31 = vector.shape_cast %30 : vector<18xf32> to vector<18x1xf32>
    %cst_24 = arith.constant 3.200000e+01 : f32
    %32 = vector.broadcast %cst_24 : f32 to vector<18x1xf32>
    %33 = arith.divf %31, %32 : vector<18x1xf32>
    %34 = vector.broadcast %26 : vector<18x1xf32> to vector<18x32xf32>
    %35 = arith.subf %16, %34 : vector<18x32xf32>
    %cst_25 = arith.constant 9.99999974E-6 : f32
    %36 = vector.broadcast %cst_25 : f32 to vector<18x1xf32>
    %37 = arith.addf %33, %36 : vector<18x1xf32>
    %38 = math.rsqrt %37 : vector<18x1xf32>
    %39 = vector.broadcast %38 : vector<18x1xf32> to vector<18x32xf32>
    %40 = arith.mulf %35, %39 : vector<18x32xf32>
    %41 = vector.broadcast %20 : vector<1x32xf32> to vector<18x32xf32>
    %42 = arith.mulf %40, %41 : vector<18x32xf32>
    %43 = vector.broadcast %22 : vector<1x32xf32> to vector<18x32xf32>
    %44 = arith.addf %42, %43 : vector<18x32xf32>
    %c0_26 = arith.constant 0 : index
    %c0_27 = arith.constant 0 : index
    %c0_28 = arith.constant 0 : index
    %45 = vector.load %arg8[%c0_26, %c0_27, %c0_28] : memref<2x32x96xf32, #tpu.memory_space<vmem>>, vector<1x32x96xf32>
    %46 = vector.shape_cast %45 : vector<1x32x96xf32> to vector<32x96xf32>
    %cst_29 = arith.constant dense<0.000000e+00> : vector<18x96xf32>
    %47 = tpu.matmul %44, %46, %cst_29 {dimension_numbers = #tpu.dot_dimension_numbers<[1], [0], [0], [1], [0, 0, 1, 1], [], []>} : vector<18x32xf32>, vector<32x96xf32>, vector<18x96xf32> -> vector<18x96xf32>
    %c0_30 = arith.constant 0 : index
    %c0_31 = arith.constant 0 : index
    %c0_32 = arith.constant 0 : index
    %48 = vector.load %arg9[%c0_30, %c0_31, %c0_32] : memref<2x1x96xf32, #tpu.memory_space<vmem>>, vector<1x1x96xf32>
    %49 = vector.shape_cast %48 : vector<1x1x96xf32> to vector<1x96xf32>
    %50 = vector.broadcast %49 : vector<1x96xf32> to vector<18x96xf32>
    %51 = arith.addf %47, %50 : vector<18x96xf32>
    %52 = vector.extract_strided_slice %51 {offsets = [0, 0], sizes = [9, 32], strides = [1, 1]} : vector<18x96xf32> to vector<9x32xf32>
    %53 = vector.broadcast %18 : f32 to vector<9x32xf32>
    %54 = arith.mulf %52, %53 : vector<9x32xf32>
    %55 = vector.extract_strided_slice %51 {offsets = [0, 32], sizes = [9, 32], strides = [1, 1]} : vector<18x96xf32> to vector<9x32xf32>
    %56 = vector.extract_strided_slice %51 {offsets = [0, 64], sizes = [9, 32], strides = [1, 1]} : vector<18x96xf32> to vector<9x32xf32>
    %57 = vector.extract_strided_slice %54 {offsets = [0, 0], sizes = [9, 8], strides = [1, 1]} : vector<9x32xf32> to vector<9x8xf32>
    %58 = vector.extract_strided_slice %55 {offsets = [0, 0], sizes = [9, 8], strides = [1, 1]} : vector<9x32xf32> to vector<9x8xf32>
    %59 = tpu.transpose %58, [1, 0] : vector<9x8xf32> -> vector<8x9xf32>
    %cst_33 = arith.constant dense<0.000000e+00> : vector<9x9xf32>
    %60 = tpu.matmul %57, %59, %cst_33 {dimension_numbers = #tpu.dot_dimension_numbers<[1], [0], [0], [1], [0, 0, 1, 1], [], []>} : vector<9x8xf32>, vector<8x9xf32>, vector<9x9xf32> -> vector<9x9xf32>
    %cst_34 = arith.constant dense<0xFF800000> : vector<9xf32>
    %61 = vector.multi_reduction <maximumf>, %60, %cst_34 [1] : vector<9x9xf32> to vector<9xf32>
    %62 = vector.shape_cast %61 : vector<9xf32> to vector<9x1xf32>
    %63 = vector.broadcast %62 : vector<9x1xf32> to vector<9x9xf32>
    %64 = arith.subf %60, %63 : vector<9x9xf32>
    %65 = math.exp %64 : vector<9x9xf32>
    %cst_35 = arith.constant dense<0.000000e+00> : vector<9xf32>
    %66 = vector.multi_reduction <add>, %65, %cst_35 [1] : vector<9x9xf32> to vector<9xf32>
    %67 = vector.shape_cast %66 : vector<9xf32> to vector<9x1xf32>
    %68 = tpu.reciprocal %67 {approx = true} : vector<9x1xf32> -> vector<9x1xf32>
    %69 = vector.broadcast %68 : vector<9x1xf32> to vector<9x9xf32>
    %70 = arith.mulf %65, %69 : vector<9x9xf32>
    %71 = vector.extract_strided_slice %56 {offsets = [0, 0], sizes = [9, 8], strides = [1, 1]} : vector<9x32xf32> to vector<9x8xf32>
    %cst_36 = arith.constant dense<0.000000e+00> : vector<9x8xf32>
    %72 = tpu.matmul %70, %71, %cst_36 {dimension_numbers = #tpu.dot_dimension_numbers<[1], [0], [0], [1], [0, 0, 1, 1], [], []>} : vector<9x9xf32>, vector<9x8xf32>, vector<9x8xf32> -> vector<9x8xf32>
    %73 = vector.extract_strided_slice %54 {offsets = [0, 8], sizes = [9, 8], strides = [1, 1]} : vector<9x32xf32> to vector<9x8xf32>
    %74 = vector.extract_strided_slice %55 {offsets = [0, 8], sizes = [9, 8], strides = [1, 1]} : vector<9x32xf32> to vector<9x8xf32>
    %75 = tpu.transpose %74, [1, 0] : vector<9x8xf32> -> vector<8x9xf32>
    %cst_37 = arith.constant dense<0.000000e+00> : vector<9x9xf32>
    %76 = tpu.matmul %73, %75, %cst_37 {dimension_numbers = #tpu.dot_dimension_numbers<[1], [0], [0], [1], [0, 0, 1, 1], [], []>} : vector<9x8xf32>, vector<8x9xf32>, vector<9x9xf32> -> vector<9x9xf32>
    %cst_38 = arith.constant dense<0xFF800000> : vector<9xf32>
    %77 = vector.multi_reduction <maximumf>, %76, %cst_38 [1] : vector<9x9xf32> to vector<9xf32>
    %78 = vector.shape_cast %77 : vector<9xf32> to vector<9x1xf32>
    %79 = vector.broadcast %78 : vector<9x1xf32> to vector<9x9xf32>
    %80 = arith.subf %76, %79 : vector<9x9xf32>
    %81 = math.exp %80 : vector<9x9xf32>
    %cst_39 = arith.constant dense<0.000000e+00> : vector<9xf32>
    %82 = vector.multi_reduction <add>, %81, %cst_39 [1] : vector<9x9xf32> to vector<9xf32>
    %83 = vector.shape_cast %82 : vector<9xf32> to vector<9x1xf32>
    %84 = tpu.reciprocal %83 {approx = true} : vector<9x1xf32> -> vector<9x1xf32>
    %85 = vector.broadcast %84 : vector<9x1xf32> to vector<9x9xf32>
    %86 = arith.mulf %81, %85 : vector<9x9xf32>
    %87 = vector.extract_strided_slice %56 {offsets = [0, 8], sizes = [9, 8], strides = [1, 1]} : vector<9x32xf32> to vector<9x8xf32>
    %cst_40 = arith.constant dense<0.000000e+00> : vector<9x8xf32>
    %88 = tpu.matmul %86, %87, %cst_40 {dimension_numbers = #tpu.dot_dimension_numbers<[1], [0], [0], [1], [0, 0, 1, 1], [], []>} : vector<9x9xf32>, vector<9x8xf32>, vector<9x8xf32> -> vector<9x8xf32>
    %89 = vector.extract_strided_slice %54 {offsets = [0, 16], sizes = [9, 8], strides = [1, 1]} : vector<9x32xf32> to vector<9x8xf32>
    %90 = vector.extract_strided_slice %55 {offsets = [0, 16], sizes = [9, 8], strides = [1, 1]} : vector<9x32xf32> to vector<9x8xf32>
    %91 = tpu.transpose %90, [1, 0] : vector<9x8xf32> -> vector<8x9xf32>
    %cst_41 = arith.constant dense<0.000000e+00> : vector<9x9xf32>
    %92 = tpu.matmul %89, %91, %cst_41 {dimension_numbers = #tpu.dot_dimension_numbers<[1], [0], [0], [1], [0, 0, 1, 1], [], []>} : vector<9x8xf32>, vector<8x9xf32>, vector<9x9xf32> -> vector<9x9xf32>
    %cst_42 = arith.constant dense<0xFF800000> : vector<9xf32>
    %93 = vector.multi_reduction <maximumf>, %92, %cst_42 [1] : vector<9x9xf32> to vector<9xf32>
    %94 = vector.shape_cast %93 : vector<9xf32> to vector<9x1xf32>
    %95 = vector.broadcast %94 : vector<9x1xf32> to vector<9x9xf32>
    %96 = arith.subf %92, %95 : vector<9x9xf32>
    %97 = math.exp %96 : vector<9x9xf32>
    %cst_43 = arith.constant dense<0.000000e+00> : vector<9xf32>
    %98 = vector.multi_reduction <add>, %97, %cst_43 [1] : vector<9x9xf32> to vector<9xf32>
    %99 = vector.shape_cast %98 : vector<9xf32> to vector<9x1xf32>
    %100 = tpu.reciprocal %99 {approx = true} : vector<9x1xf32> -> vector<9x1xf32>
    %101 = vector.broadcast %100 : vector<9x1xf32> to vector<9x9xf32>
    %102 = arith.mulf %97, %101 : vector<9x9xf32>
    %103 = vector.extract_strided_slice %56 {offsets = [0, 16], sizes = [9, 8], strides = [1, 1]} : vector<9x32xf32> to vector<9x8xf32>
    %cst_44 = arith.constant dense<0.000000e+00> : vector<9x8xf32>
    %104 = tpu.matmul %102, %103, %cst_44 {dimension_numbers = #tpu.dot_dimension_numbers<[1], [0], [0], [1], [0, 0, 1, 1], [], []>} : vector<9x9xf32>, vector<9x8xf32>, vector<9x8xf32> -> vector<9x8xf32>
    %105 = vector.extract_strided_slice %54 {offsets = [0, 24], sizes = [9, 8], strides = [1, 1]} : vector<9x32xf32> to vector<9x8xf32>
    %106 = vector.extract_strided_slice %55 {offsets = [0, 24], sizes = [9, 8], strides = [1, 1]} : vector<9x32xf32> to vector<9x8xf32>
    %107 = tpu.transpose %106, [1, 0] : vector<9x8xf32> -> vector<8x9xf32>
    %cst_45 = arith.constant dense<0.000000e+00> : vector<9x9xf32>
    %108 = tpu.matmul %105, %107, %cst_45 {dimension_numbers = #tpu.dot_dimension_numbers<[1], [0], [0], [1], [0, 0, 1, 1], [], []>} : vector<9x8xf32>, vector<8x9xf32>, vector<9x9xf32> -> vector<9x9xf32>
    %cst_46 = arith.constant dense<0xFF800000> : vector<9xf32>
    %109 = vector.multi_reduction <maximumf>, %108, %cst_46 [1] : vector<9x9xf32> to vector<9xf32>
    %110 = vector.shape_cast %109 : vector<9xf32> to vector<9x1xf32>
    %111 = vector.broadcast %110 : vector<9x1xf32> to vector<9x9xf32>
    %112 = arith.subf %108, %111 : vector<9x9xf32>
    %113 = math.exp %112 : vector<9x9xf32>
    %cst_47 = arith.constant dense<0.000000e+00> : vector<9xf32>
    %114 = vector.multi_reduction <add>, %113, %cst_47 [1] : vector<9x9xf32> to vector<9xf32>
    %115 = vector.shape_cast %114 : vector<9xf32> to vector<9x1xf32>
    %116 = tpu.reciprocal %115 {approx = true} : vector<9x1xf32> -> vector<9x1xf32>
    %117 = vector.broadcast %116 : vector<9x1xf32> to vector<9x9xf32>
    %118 = arith.mulf %113, %117 : vector<9x9xf32>
    %119 = vector.extract_strided_slice %56 {offsets = [0, 24], sizes = [9, 8], strides = [1, 1]} : vector<9x32xf32> to vector<9x8xf32>
    %cst_48 = arith.constant dense<0.000000e+00> : vector<9x8xf32>
    %120 = tpu.matmul %118, %119, %cst_48 {dimension_numbers = #tpu.dot_dimension_numbers<[1], [0], [0], [1], [0, 0, 1, 1], [], []>} : vector<9x9xf32>, vector<9x8xf32>, vector<9x8xf32> -> vector<9x8xf32>
    %121 = tpu.concatenate %72, %88, %104, %120 in 1 : vector<9x8xf32>, vector<9x8xf32>, vector<9x8xf32>, vector<9x8xf32> -> vector<9x32xf32>
    %122 = vector.extract_strided_slice %51 {offsets = [9, 0], sizes = [9, 32], strides = [1, 1]} : vector<18x96xf32> to vector<9x32xf32>
    %123 = vector.broadcast %18 : f32 to vector<9x32xf32>
    %124 = arith.mulf %122, %123 : vector<9x32xf32>
    %125 = vector.extract_strided_slice %51 {offsets = [9, 32], sizes = [9, 32], strides = [1, 1]} : vector<18x96xf32> to vector<9x32xf32>
    %126 = vector.extract_strided_slice %51 {offsets = [9, 64], sizes = [9, 32], strides = [1, 1]} : vector<18x96xf32> to vector<9x32xf32>
    %127 = vector.extract_strided_slice %124 {offsets = [0, 0], sizes = [9, 8], strides = [1, 1]} : vector<9x32xf32> to vector<9x8xf32>
    %128 = vector.extract_strided_slice %125 {offsets = [0, 0], sizes = [9, 8], strides = [1, 1]} : vector<9x32xf32> to vector<9x8xf32>
    %129 = tpu.transpose %128, [1, 0] : vector<9x8xf32> -> vector<8x9xf32>
    %cst_49 = arith.constant dense<0.000000e+00> : vector<9x9xf32>
    %130 = tpu.matmul %127, %129, %cst_49 {dimension_numbers = #tpu.dot_dimension_numbers<[1], [0], [0], [1], [0, 0, 1, 1], [], []>} : vector<9x8xf32>, vector<8x9xf32>, vector<9x9xf32> -> vector<9x9xf32>
    %cst_50 = arith.constant dense<0xFF800000> : vector<9xf32>
    %131 = vector.multi_reduction <maximumf>, %130, %cst_50 [1] : vector<9x9xf32> to vector<9xf32>
    %132 = vector.shape_cast %131 : vector<9xf32> to vector<9x1xf32>
    %133 = vector.broadcast %132 : vector<9x1xf32> to vector<9x9xf32>
    %134 = arith.subf %130, %133 : vector<9x9xf32>
    %135 = math.exp %134 : vector<9x9xf32>
    %cst_51 = arith.constant dense<0.000000e+00> : vector<9xf32>
    %136 = vector.multi_reduction <add>, %135, %cst_51 [1] : vector<9x9xf32> to vector<9xf32>
    %137 = vector.shape_cast %136 : vector<9xf32> to vector<9x1xf32>
    %138 = tpu.reciprocal %137 {approx = true} : vector<9x1xf32> -> vector<9x1xf32>
    %139 = vector.broadcast %138 : vector<9x1xf32> to vector<9x9xf32>
    %140 = arith.mulf %135, %139 : vector<9x9xf32>
    %141 = vector.extract_strided_slice %126 {offsets = [0, 0], sizes = [9, 8], strides = [1, 1]} : vector<9x32xf32> to vector<9x8xf32>
    %cst_52 = arith.constant dense<0.000000e+00> : vector<9x8xf32>
    %142 = tpu.matmul %140, %141, %cst_52 {dimension_numbers = #tpu.dot_dimension_numbers<[1], [0], [0], [1], [0, 0, 1, 1], [], []>} : vector<9x9xf32>, vector<9x8xf32>, vector<9x8xf32> -> vector<9x8xf32>
    %143 = vector.extract_strided_slice %124 {offsets = [0, 8], sizes = [9, 8], strides = [1, 1]} : vector<9x32xf32> to vector<9x8xf32>
    %144 = vector.extract_strided_slice %125 {offsets = [0, 8], sizes = [9, 8], strides = [1, 1]} : vector<9x32xf32> to vector<9x8xf32>
    %145 = tpu.transpose %144, [1, 0] : vector<9x8xf32> -> vector<8x9xf32>
    %cst_53 = arith.constant dense<0.000000e+00> : vector<9x9xf32>
    %146 = tpu.matmul %143, %145, %cst_53 {dimension_numbers = #tpu.dot_dimension_numbers<[1], [0], [0], [1], [0, 0, 1, 1], [], []>} : vector<9x8xf32>, vector<8x9xf32>, vector<9x9xf32> -> vector<9x9xf32>
    %cst_54 = arith.constant dense<0xFF800000> : vector<9xf32>
    %147 = vector.multi_reduction <maximumf>, %146, %cst_54 [1] : vector<9x9xf32> to vector<9xf32>
    %148 = vector.shape_cast %147 : vector<9xf32> to vector<9x1xf32>
    %149 = vector.broadcast %148 : vector<9x1xf32> to vector<9x9xf32>
    %150 = arith.subf %146, %149 : vector<9x9xf32>
    %151 = math.exp %150 : vector<9x9xf32>
    %cst_55 = arith.constant dense<0.000000e+00> : vector<9xf32>
    %152 = vector.multi_reduction <add>, %151, %cst_55 [1] : vector<9x9xf32> to vector<9xf32>
    %153 = vector.shape_cast %152 : vector<9xf32> to vector<9x1xf32>
    %154 = tpu.reciprocal %153 {approx = true} : vector<9x1xf32> -> vector<9x1xf32>
    %155 = vector.broadcast %154 : vector<9x1xf32> to vector<9x9xf32>
    %156 = arith.mulf %151, %155 : vector<9x9xf32>
    %157 = vector.extract_strided_slice %126 {offsets = [0, 8], sizes = [9, 8], strides = [1, 1]} : vector<9x32xf32> to vector<9x8xf32>
    %cst_56 = arith.constant dense<0.000000e+00> : vector<9x8xf32>
    %158 = tpu.matmul %156, %157, %cst_56 {dimension_numbers = #tpu.dot_dimension_numbers<[1], [0], [0], [1], [0, 0, 1, 1], [], []>} : vector<9x9xf32>, vector<9x8xf32>, vector<9x8xf32> -> vector<9x8xf32>
    %159 = vector.extract_strided_slice %124 {offsets = [0, 16], sizes = [9, 8], strides = [1, 1]} : vector<9x32xf32> to vector<9x8xf32>
    %160 = vector.extract_strided_slice %125 {offsets = [0, 16], sizes = [9, 8], strides = [1, 1]} : vector<9x32xf32> to vector<9x8xf32>
    %161 = tpu.transpose %160, [1, 0] : vector<9x8xf32> -> vector<8x9xf32>
    %cst_57 = arith.constant dense<0.000000e+00> : vector<9x9xf32>
    %162 = tpu.matmul %159, %161, %cst_57 {dimension_numbers = #tpu.dot_dimension_numbers<[1], [0], [0], [1], [0, 0, 1, 1], [], []>} : vector<9x8xf32>, vector<8x9xf32>, vector<9x9xf32> -> vector<9x9xf32>
    %cst_58 = arith.constant dense<0xFF800000> : vector<9xf32>
    %163 = vector.multi_reduction <maximumf>, %162, %cst_58 [1] : vector<9x9xf32> to vector<9xf32>
    %164 = vector.shape_cast %163 : vector<9xf32> to vector<9x1xf32>
    %165 = vector.broadcast %164 : vector<9x1xf32> to vector<9x9xf32>
    %166 = arith.subf %162, %165 : vector<9x9xf32>
    %167 = math.exp %166 : vector<9x9xf32>
    %cst_59 = arith.constant dense<0.000000e+00> : vector<9xf32>
    %168 = vector.multi_reduction <add>, %167, %cst_59 [1] : vector<9x9xf32> to vector<9xf32>
    %169 = vector.shape_cast %168 : vector<9xf32> to vector<9x1xf32>
    %170 = tpu.reciprocal %169 {approx = true} : vector<9x1xf32> -> vector<9x1xf32>
    %171 = vector.broadcast %170 : vector<9x1xf32> to vector<9x9xf32>
    %172 = arith.mulf %167, %171 : vector<9x9xf32>
    %173 = vector.extract_strided_slice %126 {offsets = [0, 16], sizes = [9, 8], strides = [1, 1]} : vector<9x32xf32> to vector<9x8xf32>
    %cst_60 = arith.constant dense<0.000000e+00> : vector<9x8xf32>
    %174 = tpu.matmul %172, %173, %cst_60 {dimension_numbers = #tpu.dot_dimension_numbers<[1], [0], [0], [1], [0, 0, 1, 1], [], []>} : vector<9x9xf32>, vector<9x8xf32>, vector<9x8xf32> -> vector<9x8xf32>
    %175 = vector.extract_strided_slice %124 {offsets = [0, 24], sizes = [9, 8], strides = [1, 1]} : vector<9x32xf32> to vector<9x8xf32>
    %176 = vector.extract_strided_slice %125 {offsets = [0, 24], sizes = [9, 8], strides = [1, 1]} : vector<9x32xf32> to vector<9x8xf32>
    %177 = tpu.transpose %176, [1, 0] : vector<9x8xf32> -> vector<8x9xf32>
    %cst_61 = arith.constant dense<0.000000e+00> : vector<9x9xf32>
    %178 = tpu.matmul %175, %177, %cst_61 {dimension_numbers = #tpu.dot_dimension_numbers<[1], [0], [0], [1], [0, 0, 1, 1], [], []>} : vector<9x8xf32>, vector<8x9xf32>, vector<9x9xf32> -> vector<9x9xf32>
    %cst_62 = arith.constant dense<0xFF800000> : vector<9xf32>
    %179 = vector.multi_reduction <maximumf>, %178, %cst_62 [1] : vector<9x9xf32> to vector<9xf32>
    %180 = vector.shape_cast %179 : vector<9xf32> to vector<9x1xf32>
    %181 = vector.broadcast %180 : vector<9x1xf32> to vector<9x9xf32>
    %182 = arith.subf %178, %181 : vector<9x9xf32>
    %183 = math.exp %182 : vector<9x9xf32>
    %cst_63 = arith.constant dense<0.000000e+00> : vector<9xf32>
    %184 = vector.multi_reduction <add>, %183, %cst_63 [1] : vector<9x9xf32> to vector<9xf32>
    %185 = vector.shape_cast %184 : vector<9xf32> to vector<9x1xf32>
    %186 = tpu.reciprocal %185 {approx = true} : vector<9x1xf32> -> vector<9x1xf32>
    %187 = vector.broadcast %186 : vector<9x1xf32> to vector<9x9xf32>
    %188 = arith.mulf %183, %187 : vector<9x9xf32>
    %189 = vector.extract_strided_slice %126 {offsets = [0, 24], sizes = [9, 8], strides = [1, 1]} : vector<9x32xf32> to vector<9x8xf32>
    %cst_64 = arith.constant dense<0.000000e+00> : vector<9x8xf32>
    %190 = tpu.matmul %188, %189, %cst_64 {dimension_numbers = #tpu.dot_dimension_numbers<[1], [0], [0], [1], [0, 0, 1, 1], [], []>} : vector<9x9xf32>, vector<9x8xf32>, vector<9x8xf32> -> vector<9x8xf32>
    %191 = tpu.concatenate %142, %158, %174, %190 in 1 : vector<9x8xf32>, vector<9x8xf32>, vector<9x8xf32>, vector<9x8xf32> -> vector<9x32xf32>
    %192 = tpu.concatenate %121, %191 in 0 : vector<9x32xf32>, vector<9x32xf32> -> vector<18x32xf32>
    %c0_65 = arith.constant 0 : index
    %c0_66 = arith.constant 0 : index
    %c0_67 = arith.constant 0 : index
    %193 = vector.load %arg10[%c0_65, %c0_66, %c0_67] : memref<2x32x32xf32, #tpu.memory_space<vmem>>, vector<1x32x32xf32>
    %194 = vector.shape_cast %193 : vector<1x32x32xf32> to vector<32x32xf32>
    %cst_68 = arith.constant dense<0.000000e+00> : vector<18x32xf32>
    %195 = tpu.matmul %192, %194, %cst_68 {dimension_numbers = #tpu.dot_dimension_numbers<[1], [0], [0], [1], [0, 0, 1, 1], [], []>} : vector<18x32xf32>, vector<32x32xf32>, vector<18x32xf32> -> vector<18x32xf32>
    %196 = arith.addf %16, %195 : vector<18x32xf32>
    %c0_69 = arith.constant 0 : index
    %c0_70 = arith.constant 0 : index
    %c0_71 = arith.constant 0 : index
    %197 = vector.load %arg11[%c0_69, %c0_70, %c0_71] : memref<2x1x32xf32, #tpu.memory_space<vmem>>, vector<1x1x32xf32>
    %198 = vector.shape_cast %197 : vector<1x1x32xf32> to vector<1x32xf32>
    %199 = vector.broadcast %198 : vector<1x32xf32> to vector<18x32xf32>
    %200 = arith.addf %196, %199 : vector<18x32xf32>
    %c0_72 = arith.constant 0 : index
    %c0_73 = arith.constant 0 : index
    %c0_74 = arith.constant 0 : index
    %201 = vector.load %arg12[%c0_72, %c0_73, %c0_74] : memref<2x1x32xf32, #tpu.memory_space<vmem>>, vector<1x1x32xf32>
    %202 = vector.shape_cast %201 : vector<1x1x32xf32> to vector<1x32xf32>
    %c0_75 = arith.constant 0 : index
    %c0_76 = arith.constant 0 : index
    %c0_77 = arith.constant 0 : index
    %203 = vector.load %arg13[%c0_75, %c0_76, %c0_77] : memref<2x1x32xf32, #tpu.memory_space<vmem>>, vector<1x1x32xf32>
    %204 = vector.shape_cast %203 : vector<1x1x32xf32> to vector<1x32xf32>
    %cst_78 = arith.constant dense<0.000000e+00> : vector<18xf32>
    %205 = vector.multi_reduction <add>, %200, %cst_78 [1] : vector<18x32xf32> to vector<18xf32>
    %206 = vector.shape_cast %205 : vector<18xf32> to vector<18x1xf32>
    %cst_79 = arith.constant 3.200000e+01 : f32
    %207 = vector.broadcast %cst_79 : f32 to vector<18x1xf32>
    %208 = arith.divf %206, %207 : vector<18x1xf32>
    %209 = vector.broadcast %208 : vector<18x1xf32> to vector<18x32xf32>
    %210 = arith.subf %200, %209 : vector<18x32xf32>
    %211 = arith.mulf %210, %210 : vector<18x32xf32>
    %cst_80 = arith.constant dense<0.000000e+00> : vector<18xf32>
    %212 = vector.multi_reduction <add>, %211, %cst_80 [1] : vector<18x32xf32> to vector<18xf32>
    %213 = vector.shape_cast %212 : vector<18xf32> to vector<18x1xf32>
    %cst_81 = arith.constant 3.200000e+01 : f32
    %214 = vector.broadcast %cst_81 : f32 to vector<18x1xf32>
    %215 = arith.divf %213, %214 : vector<18x1xf32>
    %216 = vector.broadcast %208 : vector<18x1xf32> to vector<18x32xf32>
    %217 = arith.subf %200, %216 : vector<18x32xf32>
    %cst_82 = arith.constant 9.99999974E-6 : f32
    %218 = vector.broadcast %cst_82 : f32 to vector<18x1xf32>
    %219 = arith.addf %215, %218 : vector<18x1xf32>
    %220 = math.rsqrt %219 : vector<18x1xf32>
    %221 = vector.broadcast %220 : vector<18x1xf32> to vector<18x32xf32>
    %222 = arith.mulf %217, %221 : vector<18x32xf32>
    %223 = vector.broadcast %202 : vector<1x32xf32> to vector<18x32xf32>
    %224 = arith.mulf %222, %223 : vector<18x32xf32>
    %225 = vector.broadcast %204 : vector<1x32xf32> to vector<18x32xf32>
    %226 = arith.addf %224, %225 : vector<18x32xf32>
    %c0_83 = arith.constant 0 : index
    %c0_84 = arith.constant 0 : index
    %c0_85 = arith.constant 0 : index
    %227 = vector.load %arg14[%c0_83, %c0_84, %c0_85] : memref<2x32x128xf32, #tpu.memory_space<vmem>>, vector<1x32x128xf32>
    %228 = vector.shape_cast %227 : vector<1x32x128xf32> to vector<32x128xf32>
    %cst_86 = arith.constant dense<0.000000e+00> : vector<18x128xf32>
    %229 = tpu.matmul %226, %228, %cst_86 {dimension_numbers = #tpu.dot_dimension_numbers<[1], [0], [0], [1], [0, 0, 1, 1], [], []>} : vector<18x32xf32>, vector<32x128xf32>, vector<18x128xf32> -> vector<18x128xf32>
    %c0_87 = arith.constant 0 : index
    %c0_88 = arith.constant 0 : index
    %c0_89 = arith.constant 0 : index
    %230 = vector.load %arg15[%c0_87, %c0_88, %c0_89] : memref<2x1x128xf32, #tpu.memory_space<vmem>>, vector<1x1x128xf32>
    %231 = vector.shape_cast %230 : vector<1x1x128xf32> to vector<1x128xf32>
    %232 = vector.broadcast %231 : vector<1x128xf32> to vector<18x128xf32>
    %233 = arith.addf %229, %232 : vector<18x128xf32>
    %234 = arith.mulf %233, %233 : vector<18x128xf32>
    %235 = arith.mulf %233, %234 : vector<18x128xf32>
    %cst_90 = arith.constant 4.471500e-02 : f32
    %236 = vector.broadcast %cst_90 : f32 to vector<18x128xf32>
    %237 = arith.mulf %236, %235 : vector<18x128xf32>
    %238 = arith.addf %233, %237 : vector<18x128xf32>
    %cst_91 = arith.constant 0.797884583 : f32
    %239 = vector.broadcast %cst_91 : f32 to vector<18x128xf32>
    %240 = arith.mulf %239, %238 : vector<18x128xf32>
    %241 = math.tanh %240 : vector<18x128xf32>
    %cst_92 = arith.constant 1.000000e+00 : f32
    %242 = vector.broadcast %cst_92 : f32 to vector<18x128xf32>
    %243 = arith.addf %242, %241 : vector<18x128xf32>
    %cst_93 = arith.constant 5.000000e-01 : f32
    %244 = vector.broadcast %cst_93 : f32 to vector<18x128xf32>
    %245 = arith.mulf %244, %243 : vector<18x128xf32>
    %246 = arith.mulf %233, %245 : vector<18x128xf32>
    %c0_94 = arith.constant 0 : index
    %c0_95 = arith.constant 0 : index
    %c0_96 = arith.constant 0 : index
    %247 = vector.load %arg16[%c0_94, %c0_95, %c0_96] : memref<2x128x32xf32, #tpu.memory_space<vmem>>, vector<1x128x32xf32>
    %248 = vector.shape_cast %247 : vector<1x128x32xf32> to vector<128x32xf32>
    %cst_97 = arith.constant dense<0.000000e+00> : vector<18x32xf32>
    %249 = tpu.matmul %246, %248, %cst_97 {dimension_numbers = #tpu.dot_dimension_numbers<[1], [0], [0], [1], [0, 0, 1, 1], [], []>} : vector<18x128xf32>, vector<128x32xf32>, vector<18x32xf32> -> vector<18x32xf32>
    %250 = arith.addf %200, %249 : vector<18x32xf32>
    %c0_98 = arith.constant 0 : index
    %c0_99 = arith.constant 0 : index
    %c0_100 = arith.constant 0 : index
    %251 = vector.load %arg17[%c0_98, %c0_99, %c0_100] : memref<2x1x32xf32, #tpu.memory_space<vmem>>, vector<1x1x32xf32>
    %252 = vector.shape_cast %251 : vector<1x1x32xf32> to vector<1x32xf32>
    %253 = vector.broadcast %252 : vector<1x32xf32> to vector<18x32xf32>
    %254 = arith.addf %250, %253 : vector<18x32xf32>
    %c1 = arith.constant 1 : index
    %c0_101 = arith.constant 0 : index
    %c0_102 = arith.constant 0 : index
    %255 = vector.load %arg6[%c1, %c0_101, %c0_102] : memref<2x1x32xf32, #tpu.memory_space<vmem>>, vector<1x1x32xf32>
    %256 = vector.shape_cast %255 : vector<1x1x32xf32> to vector<1x32xf32>
    %c1_103 = arith.constant 1 : index
    %c0_104 = arith.constant 0 : index
    %c0_105 = arith.constant 0 : index
    %257 = vector.load %arg7[%c1_103, %c0_104, %c0_105] : memref<2x1x32xf32, #tpu.memory_space<vmem>>, vector<1x1x32xf32>
    %258 = vector.shape_cast %257 : vector<1x1x32xf32> to vector<1x32xf32>
    %cst_106 = arith.constant dense<0.000000e+00> : vector<18xf32>
    %259 = vector.multi_reduction <add>, %254, %cst_106 [1] : vector<18x32xf32> to vector<18xf32>
    %260 = vector.shape_cast %259 : vector<18xf32> to vector<18x1xf32>
    %cst_107 = arith.constant 3.200000e+01 : f32
    %261 = vector.broadcast %cst_107 : f32 to vector<18x1xf32>
    %262 = arith.divf %260, %261 : vector<18x1xf32>
    %263 = vector.broadcast %262 : vector<18x1xf32> to vector<18x32xf32>
    %264 = arith.subf %254, %263 : vector<18x32xf32>
    %265 = arith.mulf %264, %264 : vector<18x32xf32>
    %cst_108 = arith.constant dense<0.000000e+00> : vector<18xf32>
    %266 = vector.multi_reduction <add>, %265, %cst_108 [1] : vector<18x32xf32> to vector<18xf32>
    %267 = vector.shape_cast %266 : vector<18xf32> to vector<18x1xf32>
    %cst_109 = arith.constant 3.200000e+01 : f32
    %268 = vector.broadcast %cst_109 : f32 to vector<18x1xf32>
    %269 = arith.divf %267, %268 : vector<18x1xf32>
    %270 = vector.broadcast %262 : vector<18x1xf32> to vector<18x32xf32>
    %271 = arith.subf %254, %270 : vector<18x32xf32>
    %cst_110 = arith.constant 9.99999974E-6 : f32
    %272 = vector.broadcast %cst_110 : f32 to vector<18x1xf32>
    %273 = arith.addf %269, %272 : vector<18x1xf32>
    %274 = math.rsqrt %273 : vector<18x1xf32>
    %275 = vector.broadcast %274 : vector<18x1xf32> to vector<18x32xf32>
    %276 = arith.mulf %271, %275 : vector<18x32xf32>
    %277 = vector.broadcast %256 : vector<1x32xf32> to vector<18x32xf32>
    %278 = arith.mulf %276, %277 : vector<18x32xf32>
    %279 = vector.broadcast %258 : vector<1x32xf32> to vector<18x32xf32>
    %280 = arith.addf %278, %279 : vector<18x32xf32>
    %c1_111 = arith.constant 1 : index
    %c0_112 = arith.constant 0 : index
    %c0_113 = arith.constant 0 : index
    %281 = vector.load %arg8[%c1_111, %c0_112, %c0_113] : memref<2x32x96xf32, #tpu.memory_space<vmem>>, vector<1x32x96xf32>
    %282 = vector.shape_cast %281 : vector<1x32x96xf32> to vector<32x96xf32>
    %cst_114 = arith.constant dense<0.000000e+00> : vector<18x96xf32>
    %283 = tpu.matmul %280, %282, %cst_114 {dimension_numbers = #tpu.dot_dimension_numbers<[1], [0], [0], [1], [0, 0, 1, 1], [], []>} : vector<18x32xf32>, vector<32x96xf32>, vector<18x96xf32> -> vector<18x96xf32>
    %c1_115 = arith.constant 1 : index
    %c0_116 = arith.constant 0 : index
    %c0_117 = arith.constant 0 : index
    %284 = vector.load %arg9[%c1_115, %c0_116, %c0_117] : memref<2x1x96xf32, #tpu.memory_space<vmem>>, vector<1x1x96xf32>
    %285 = vector.shape_cast %284 : vector<1x1x96xf32> to vector<1x96xf32>
    %286 = vector.broadcast %285 : vector<1x96xf32> to vector<18x96xf32>
    %287 = arith.addf %283, %286 : vector<18x96xf32>
    %288 = vector.extract_strided_slice %287 {offsets = [0, 0], sizes = [9, 32], strides = [1, 1]} : vector<18x96xf32> to vector<9x32xf32>
    %289 = vector.broadcast %18 : f32 to vector<9x32xf32>
    %290 = arith.mulf %288, %289 : vector<9x32xf32>
    %291 = vector.extract_strided_slice %287 {offsets = [0, 32], sizes = [9, 32], strides = [1, 1]} : vector<18x96xf32> to vector<9x32xf32>
    %292 = vector.extract_strided_slice %287 {offsets = [0, 64], sizes = [9, 32], strides = [1, 1]} : vector<18x96xf32> to vector<9x32xf32>
    %293 = vector.extract_strided_slice %290 {offsets = [0, 0], sizes = [9, 8], strides = [1, 1]} : vector<9x32xf32> to vector<9x8xf32>
    %294 = vector.extract_strided_slice %291 {offsets = [0, 0], sizes = [9, 8], strides = [1, 1]} : vector<9x32xf32> to vector<9x8xf32>
    %295 = tpu.transpose %294, [1, 0] : vector<9x8xf32> -> vector<8x9xf32>
    %cst_118 = arith.constant dense<0.000000e+00> : vector<9x9xf32>
    %296 = tpu.matmul %293, %295, %cst_118 {dimension_numbers = #tpu.dot_dimension_numbers<[1], [0], [0], [1], [0, 0, 1, 1], [], []>} : vector<9x8xf32>, vector<8x9xf32>, vector<9x9xf32> -> vector<9x9xf32>
    %cst_119 = arith.constant dense<0xFF800000> : vector<9xf32>
    %297 = vector.multi_reduction <maximumf>, %296, %cst_119 [1] : vector<9x9xf32> to vector<9xf32>
    %298 = vector.shape_cast %297 : vector<9xf32> to vector<9x1xf32>
    %299 = vector.broadcast %298 : vector<9x1xf32> to vector<9x9xf32>
    %300 = arith.subf %296, %299 : vector<9x9xf32>
    %301 = math.exp %300 : vector<9x9xf32>
    %cst_120 = arith.constant dense<0.000000e+00> : vector<9xf32>
    %302 = vector.multi_reduction <add>, %301, %cst_120 [1] : vector<9x9xf32> to vector<9xf32>
    %303 = vector.shape_cast %302 : vector<9xf32> to vector<9x1xf32>
    %304 = tpu.reciprocal %303 {approx = true} : vector<9x1xf32> -> vector<9x1xf32>
    %305 = vector.broadcast %304 : vector<9x1xf32> to vector<9x9xf32>
    %306 = arith.mulf %301, %305 : vector<9x9xf32>
    %307 = vector.extract_strided_slice %292 {offsets = [0, 0], sizes = [9, 8], strides = [1, 1]} : vector<9x32xf32> to vector<9x8xf32>
    %cst_121 = arith.constant dense<0.000000e+00> : vector<9x8xf32>
    %308 = tpu.matmul %306, %307, %cst_121 {dimension_numbers = #tpu.dot_dimension_numbers<[1], [0], [0], [1], [0, 0, 1, 1], [], []>} : vector<9x9xf32>, vector<9x8xf32>, vector<9x8xf32> -> vector<9x8xf32>
    %309 = vector.extract_strided_slice %290 {offsets = [0, 8], sizes = [9, 8], strides = [1, 1]} : vector<9x32xf32> to vector<9x8xf32>
    %310 = vector.extract_strided_slice %291 {offsets = [0, 8], sizes = [9, 8], strides = [1, 1]} : vector<9x32xf32> to vector<9x8xf32>
    %311 = tpu.transpose %310, [1, 0] : vector<9x8xf32> -> vector<8x9xf32>
    %cst_122 = arith.constant dense<0.000000e+00> : vector<9x9xf32>
    %312 = tpu.matmul %309, %311, %cst_122 {dimension_numbers = #tpu.dot_dimension_numbers<[1], [0], [0], [1], [0, 0, 1, 1], [], []>} : vector<9x8xf32>, vector<8x9xf32>, vector<9x9xf32> -> vector<9x9xf32>
    %cst_123 = arith.constant dense<0xFF800000> : vector<9xf32>
    %313 = vector.multi_reduction <maximumf>, %312, %cst_123 [1] : vector<9x9xf32> to vector<9xf32>
    %314 = vector.shape_cast %313 : vector<9xf32> to vector<9x1xf32>
    %315 = vector.broadcast %314 : vector<9x1xf32> to vector<9x9xf32>
    %316 = arith.subf %312, %315 : vector<9x9xf32>
    %317 = math.exp %316 : vector<9x9xf32>
    %cst_124 = arith.constant dense<0.000000e+00> : vector<9xf32>
    %318 = vector.multi_reduction <add>, %317, %cst_124 [1] : vector<9x9xf32> to vector<9xf32>
    %319 = vector.shape_cast %318 : vector<9xf32> to vector<9x1xf32>
    %320 = tpu.reciprocal %319 {approx = true} : vector<9x1xf32> -> vector<9x1xf32>
    %321 = vector.broadcast %320 : vector<9x1xf32> to vector<9x9xf32>
    %322 = arith.mulf %317, %321 : vector<9x9xf32>
    %323 = vector.extract_strided_slice %292 {offsets = [0, 8], sizes = [9, 8], strides = [1, 1]} : vector<9x32xf32> to vector<9x8xf32>
    %cst_125 = arith.constant dense<0.000000e+00> : vector<9x8xf32>
    %324 = tpu.matmul %322, %323, %cst_125 {dimension_numbers = #tpu.dot_dimension_numbers<[1], [0], [0], [1], [0, 0, 1, 1], [], []>} : vector<9x9xf32>, vector<9x8xf32>, vector<9x8xf32> -> vector<9x8xf32>
    %325 = vector.extract_strided_slice %290 {offsets = [0, 16], sizes = [9, 8], strides = [1, 1]} : vector<9x32xf32> to vector<9x8xf32>
    %326 = vector.extract_strided_slice %291 {offsets = [0, 16], sizes = [9, 8], strides = [1, 1]} : vector<9x32xf32> to vector<9x8xf32>
    %327 = tpu.transpose %326, [1, 0] : vector<9x8xf32> -> vector<8x9xf32>
    %cst_126 = arith.constant dense<0.000000e+00> : vector<9x9xf32>
    %328 = tpu.matmul %325, %327, %cst_126 {dimension_numbers = #tpu.dot_dimension_numbers<[1], [0], [0], [1], [0, 0, 1, 1], [], []>} : vector<9x8xf32>, vector<8x9xf32>, vector<9x9xf32> -> vector<9x9xf32>
    %cst_127 = arith.constant dense<0xFF800000> : vector<9xf32>
    %329 = vector.multi_reduction <maximumf>, %328, %cst_127 [1] : vector<9x9xf32> to vector<9xf32>
    %330 = vector.shape_cast %329 : vector<9xf32> to vector<9x1xf32>
    %331 = vector.broadcast %330 : vector<9x1xf32> to vector<9x9xf32>
    %332 = arith.subf %328, %331 : vector<9x9xf32>
    %333 = math.exp %332 : vector<9x9xf32>
    %cst_128 = arith.constant dense<0.000000e+00> : vector<9xf32>
    %334 = vector.multi_reduction <add>, %333, %cst_128 [1] : vector<9x9xf32> to vector<9xf32>
    %335 = vector.shape_cast %334 : vector<9xf32> to vector<9x1xf32>
    %336 = tpu.reciprocal %335 {approx = true} : vector<9x1xf32> -> vector<9x1xf32>
    %337 = vector.broadcast %336 : vector<9x1xf32> to vector<9x9xf32>
    %338 = arith.mulf %333, %337 : vector<9x9xf32>
    %339 = vector.extract_strided_slice %292 {offsets = [0, 16], sizes = [9, 8], strides = [1, 1]} : vector<9x32xf32> to vector<9x8xf32>
    %cst_129 = arith.constant dense<0.000000e+00> : vector<9x8xf32>
    %340 = tpu.matmul %338, %339, %cst_129 {dimension_numbers = #tpu.dot_dimension_numbers<[1], [0], [0], [1], [0, 0, 1, 1], [], []>} : vector<9x9xf32>, vector<9x8xf32>, vector<9x8xf32> -> vector<9x8xf32>
    %341 = vector.extract_strided_slice %290 {offsets = [0, 24], sizes = [9, 8], strides = [1, 1]} : vector<9x32xf32> to vector<9x8xf32>
    %342 = vector.extract_strided_slice %291 {offsets = [0, 24], sizes = [9, 8], strides = [1, 1]} : vector<9x32xf32> to vector<9x8xf32>
    %343 = tpu.transpose %342, [1, 0] : vector<9x8xf32> -> vector<8x9xf32>
    %cst_130 = arith.constant dense<0.000000e+00> : vector<9x9xf32>
    %344 = tpu.matmul %341, %343, %cst_130 {dimension_numbers = #tpu.dot_dimension_numbers<[1], [0], [0], [1], [0, 0, 1, 1], [], []>} : vector<9x8xf32>, vector<8x9xf32>, vector<9x9xf32> -> vector<9x9xf32>
    %cst_131 = arith.constant dense<0xFF800000> : vector<9xf32>
    %345 = vector.multi_reduction <maximumf>, %344, %cst_131 [1] : vector<9x9xf32> to vector<9xf32>
    %346 = vector.shape_cast %345 : vector<9xf32> to vector<9x1xf32>
    %347 = vector.broadcast %346 : vector<9x1xf32> to vector<9x9xf32>
    %348 = arith.subf %344, %347 : vector<9x9xf32>
    %349 = math.exp %348 : vector<9x9xf32>
    %cst_132 = arith.constant dense<0.000000e+00> : vector<9xf32>
    %350 = vector.multi_reduction <add>, %349, %cst_132 [1] : vector<9x9xf32> to vector<9xf32>
    %351 = vector.shape_cast %350 : vector<9xf32> to vector<9x1xf32>
    %352 = tpu.reciprocal %351 {approx = true} : vector<9x1xf32> -> vector<9x1xf32>
    %353 = vector.broadcast %352 : vector<9x1xf32> to vector<9x9xf32>
    %354 = arith.mulf %349, %353 : vector<9x9xf32>
    %355 = vector.extract_strided_slice %292 {offsets = [0, 24], sizes = [9, 8], strides = [1, 1]} : vector<9x32xf32> to vector<9x8xf32>
    %cst_133 = arith.constant dense<0.000000e+00> : vector<9x8xf32>
    %356 = tpu.matmul %354, %355, %cst_133 {dimension_numbers = #tpu.dot_dimension_numbers<[1], [0], [0], [1], [0, 0, 1, 1], [], []>} : vector<9x9xf32>, vector<9x8xf32>, vector<9x8xf32> -> vector<9x8xf32>
    %357 = tpu.concatenate %308, %324, %340, %356 in 1 : vector<9x8xf32>, vector<9x8xf32>, vector<9x8xf32>, vector<9x8xf32> -> vector<9x32xf32>
    %358 = vector.extract_strided_slice %287 {offsets = [9, 0], sizes = [9, 32], strides = [1, 1]} : vector<18x96xf32> to vector<9x32xf32>
    %359 = vector.broadcast %18 : f32 to vector<9x32xf32>
    %360 = arith.mulf %358, %359 : vector<9x32xf32>
    %361 = vector.extract_strided_slice %287 {offsets = [9, 32], sizes = [9, 32], strides = [1, 1]} : vector<18x96xf32> to vector<9x32xf32>
    %362 = vector.extract_strided_slice %287 {offsets = [9, 64], sizes = [9, 32], strides = [1, 1]} : vector<18x96xf32> to vector<9x32xf32>
    %363 = vector.extract_strided_slice %360 {offsets = [0, 0], sizes = [9, 8], strides = [1, 1]} : vector<9x32xf32> to vector<9x8xf32>
    %364 = vector.extract_strided_slice %361 {offsets = [0, 0], sizes = [9, 8], strides = [1, 1]} : vector<9x32xf32> to vector<9x8xf32>
    %365 = tpu.transpose %364, [1, 0] : vector<9x8xf32> -> vector<8x9xf32>
    %cst_134 = arith.constant dense<0.000000e+00> : vector<9x9xf32>
    %366 = tpu.matmul %363, %365, %cst_134 {dimension_numbers = #tpu.dot_dimension_numbers<[1], [0], [0], [1], [0, 0, 1, 1], [], []>} : vector<9x8xf32>, vector<8x9xf32>, vector<9x9xf32> -> vector<9x9xf32>
    %cst_135 = arith.constant dense<0xFF800000> : vector<9xf32>
    %367 = vector.multi_reduction <maximumf>, %366, %cst_135 [1] : vector<9x9xf32> to vector<9xf32>
    %368 = vector.shape_cast %367 : vector<9xf32> to vector<9x1xf32>
    %369 = vector.broadcast %368 : vector<9x1xf32> to vector<9x9xf32>
    %370 = arith.subf %366, %369 : vector<9x9xf32>
    %371 = math.exp %370 : vector<9x9xf32>
    %cst_136 = arith.constant dense<0.000000e+00> : vector<9xf32>
    %372 = vector.multi_reduction <add>, %371, %cst_136 [1] : vector<9x9xf32> to vector<9xf32>
    %373 = vector.shape_cast %372 : vector<9xf32> to vector<9x1xf32>
    %374 = tpu.reciprocal %373 {approx = true} : vector<9x1xf32> -> vector<9x1xf32>
    %375 = vector.broadcast %374 : vector<9x1xf32> to vector<9x9xf32>
    %376 = arith.mulf %371, %375 : vector<9x9xf32>
    %377 = vector.extract_strided_slice %362 {offsets = [0, 0], sizes = [9, 8], strides = [1, 1]} : vector<9x32xf32> to vector<9x8xf32>
    %cst_137 = arith.constant dense<0.000000e+00> : vector<9x8xf32>
    %378 = tpu.matmul %376, %377, %cst_137 {dimension_numbers = #tpu.dot_dimension_numbers<[1], [0], [0], [1], [0, 0, 1, 1], [], []>} : vector<9x9xf32>, vector<9x8xf32>, vector<9x8xf32> -> vector<9x8xf32>
    %379 = vector.extract_strided_slice %360 {offsets = [0, 8], sizes = [9, 8], strides = [1, 1]} : vector<9x32xf32> to vector<9x8xf32>
    %380 = vector.extract_strided_slice %361 {offsets = [0, 8], sizes = [9, 8], strides = [1, 1]} : vector<9x32xf32> to vector<9x8xf32>
    %381 = tpu.transpose %380, [1, 0] : vector<9x8xf32> -> vector<8x9xf32>
    %cst_138 = arith.constant dense<0.000000e+00> : vector<9x9xf32>
    %382 = tpu.matmul %379, %381, %cst_138 {dimension_numbers = #tpu.dot_dimension_numbers<[1], [0], [0], [1], [0, 0, 1, 1], [], []>} : vector<9x8xf32>, vector<8x9xf32>, vector<9x9xf32> -> vector<9x9xf32>
    %cst_139 = arith.constant dense<0xFF800000> : vector<9xf32>
    %383 = vector.multi_reduction <maximumf>, %382, %cst_139 [1] : vector<9x9xf32> to vector<9xf32>
    %384 = vector.shape_cast %383 : vector<9xf32> to vector<9x1xf32>
    %385 = vector.broadcast %384 : vector<9x1xf32> to vector<9x9xf32>
    %386 = arith.subf %382, %385 : vector<9x9xf32>
    %387 = math.exp %386 : vector<9x9xf32>
    %cst_140 = arith.constant dense<0.000000e+00> : vector<9xf32>
    %388 = vector.multi_reduction <add>, %387, %cst_140 [1] : vector<9x9xf32> to vector<9xf32>
    %389 = vector.shape_cast %388 : vector<9xf32> to vector<9x1xf32>
    %390 = tpu.reciprocal %389 {approx = true} : vector<9x1xf32> -> vector<9x1xf32>
    %391 = vector.broadcast %390 : vector<9x1xf32> to vector<9x9xf32>
    %392 = arith.mulf %387, %391 : vector<9x9xf32>
    %393 = vector.extract_strided_slice %362 {offsets = [0, 8], sizes = [9, 8], strides = [1, 1]} : vector<9x32xf32> to vector<9x8xf32>
    %cst_141 = arith.constant dense<0.000000e+00> : vector<9x8xf32>
    %394 = tpu.matmul %392, %393, %cst_141 {dimension_numbers = #tpu.dot_dimension_numbers<[1], [0], [0], [1], [0, 0, 1, 1], [], []>} : vector<9x9xf32>, vector<9x8xf32>, vector<9x8xf32> -> vector<9x8xf32>
    %395 = vector.extract_strided_slice %360 {offsets = [0, 16], sizes = [9, 8], strides = [1, 1]} : vector<9x32xf32> to vector<9x8xf32>
    %396 = vector.extract_strided_slice %361 {offsets = [0, 16], sizes = [9, 8], strides = [1, 1]} : vector<9x32xf32> to vector<9x8xf32>
    %397 = tpu.transpose %396, [1, 0] : vector<9x8xf32> -> vector<8x9xf32>
    %cst_142 = arith.constant dense<0.000000e+00> : vector<9x9xf32>
    %398 = tpu.matmul %395, %397, %cst_142 {dimension_numbers = #tpu.dot_dimension_numbers<[1], [0], [0], [1], [0, 0, 1, 1], [], []>} : vector<9x8xf32>, vector<8x9xf32>, vector<9x9xf32> -> vector<9x9xf32>
    %cst_143 = arith.constant dense<0xFF800000> : vector<9xf32>
    %399 = vector.multi_reduction <maximumf>, %398, %cst_143 [1] : vector<9x9xf32> to vector<9xf32>
    %400 = vector.shape_cast %399 : vector<9xf32> to vector<9x1xf32>
    %401 = vector.broadcast %400 : vector<9x1xf32> to vector<9x9xf32>
    %402 = arith.subf %398, %401 : vector<9x9xf32>
    %403 = math.exp %402 : vector<9x9xf32>
    %cst_144 = arith.constant dense<0.000000e+00> : vector<9xf32>
    %404 = vector.multi_reduction <add>, %403, %cst_144 [1] : vector<9x9xf32> to vector<9xf32>
    %405 = vector.shape_cast %404 : vector<9xf32> to vector<9x1xf32>
    %406 = tpu.reciprocal %405 {approx = true} : vector<9x1xf32> -> vector<9x1xf32>
    %407 = vector.broadcast %406 : vector<9x1xf32> to vector<9x9xf32>
    %408 = arith.mulf %403, %407 : vector<9x9xf32>
    %409 = vector.extract_strided_slice %362 {offsets = [0, 16], sizes = [9, 8], strides = [1, 1]} : vector<9x32xf32> to vector<9x8xf32>
    %cst_145 = arith.constant dense<0.000000e+00> : vector<9x8xf32>
    %410 = tpu.matmul %408, %409, %cst_145 {dimension_numbers = #tpu.dot_dimension_numbers<[1], [0], [0], [1], [0, 0, 1, 1], [], []>} : vector<9x9xf32>, vector<9x8xf32>, vector<9x8xf32> -> vector<9x8xf32>
    %411 = vector.extract_strided_slice %360 {offsets = [0, 24], sizes = [9, 8], strides = [1, 1]} : vector<9x32xf32> to vector<9x8xf32>
    %412 = vector.extract_strided_slice %361 {offsets = [0, 24], sizes = [9, 8], strides = [1, 1]} : vector<9x32xf32> to vector<9x8xf32>
    %413 = tpu.transpose %412, [1, 0] : vector<9x8xf32> -> vector<8x9xf32>
    %cst_146 = arith.constant dense<0.000000e+00> : vector<9x9xf32>
    %414 = tpu.matmul %411, %413, %cst_146 {dimension_numbers = #tpu.dot_dimension_numbers<[1], [0], [0], [1], [0, 0, 1, 1], [], []>} : vector<9x8xf32>, vector<8x9xf32>, vector<9x9xf32> -> vector<9x9xf32>
    %cst_147 = arith.constant dense<0xFF800000> : vector<9xf32>
    %415 = vector.multi_reduction <maximumf>, %414, %cst_147 [1] : vector<9x9xf32> to vector<9xf32>
    %416 = vector.shape_cast %415 : vector<9xf32> to vector<9x1xf32>
    %417 = vector.broadcast %416 : vector<9x1xf32> to vector<9x9xf32>
    %418 = arith.subf %414, %417 : vector<9x9xf32>
    %419 = math.exp %418 : vector<9x9xf32>
    %cst_148 = arith.constant dense<0.000000e+00> : vector<9xf32>
    %420 = vector.multi_reduction <add>, %419, %cst_148 [1] : vector<9x9xf32> to vector<9xf32>
    %421 = vector.shape_cast %420 : vector<9xf32> to vector<9x1xf32>
    %422 = tpu.reciprocal %421 {approx = true} : vector<9x1xf32> -> vector<9x1xf32>
    %423 = vector.broadcast %422 : vector<9x1xf32> to vector<9x9xf32>
    %424 = arith.mulf %419, %423 : vector<9x9xf32>
    %425 = vector.extract_strided_slice %362 {offsets = [0, 24], sizes = [9, 8], strides = [1, 1]} : vector<9x32xf32> to vector<9x8xf32>
    %cst_149 = arith.constant dense<0.000000e+00> : vector<9x8xf32>
    %426 = tpu.matmul %424, %425, %cst_149 {dimension_numbers = #tpu.dot_dimension_numbers<[1], [0], [0], [1], [0, 0, 1, 1], [], []>} : vector<9x9xf32>, vector<9x8xf32>, vector<9x8xf32> -> vector<9x8xf32>
    %427 = tpu.concatenate %378, %394, %410, %426 in 1 : vector<9x8xf32>, vector<9x8xf32>, vector<9x8xf32>, vector<9x8xf32> -> vector<9x32xf32>
    %428 = tpu.concatenate %357, %427 in 0 : vector<9x32xf32>, vector<9x32xf32> -> vector<18x32xf32>
    %c1_150 = arith.constant 1 : index
    %c0_151 = arith.constant 0 : index
    %c0_152 = arith.constant 0 : index
    %429 = vector.load %arg10[%c1_150, %c0_151, %c0_152] : memref<2x32x32xf32, #tpu.memory_space<vmem>>, vector<1x32x32xf32>
    %430 = vector.shape_cast %429 : vector<1x32x32xf32> to vector<32x32xf32>
    %cst_153 = arith.constant dense<0.000000e+00> : vector<18x32xf32>
    %431 = tpu.matmul %428, %430, %cst_153 {dimension_numbers = #tpu.dot_dimension_numbers<[1], [0], [0], [1], [0, 0, 1, 1], [], []>} : vector<18x32xf32>, vector<32x32xf32>, vector<18x32xf32> -> vector<18x32xf32>
    %432 = arith.addf %254, %431 : vector<18x32xf32>
    %c1_154 = arith.constant 1 : index
    %c0_155 = arith.constant 0 : index
    %c0_156 = arith.constant 0 : index
    %433 = vector.load %arg11[%c1_154, %c0_155, %c0_156] : memref<2x1x32xf32, #tpu.memory_space<vmem>>, vector<1x1x32xf32>
    %434 = vector.shape_cast %433 : vector<1x1x32xf32> to vector<1x32xf32>
    %435 = vector.broadcast %434 : vector<1x32xf32> to vector<18x32xf32>
    %436 = arith.addf %432, %435 : vector<18x32xf32>
    %c1_157 = arith.constant 1 : index
    %c0_158 = arith.constant 0 : index
    %c0_159 = arith.constant 0 : index
    %437 = vector.load %arg12[%c1_157, %c0_158, %c0_159] : memref<2x1x32xf32, #tpu.memory_space<vmem>>, vector<1x1x32xf32>
    %438 = vector.shape_cast %437 : vector<1x1x32xf32> to vector<1x32xf32>
    %c1_160 = arith.constant 1 : index
    %c0_161 = arith.constant 0 : index
    %c0_162 = arith.constant 0 : index
    %439 = vector.load %arg13[%c1_160, %c0_161, %c0_162] : memref<2x1x32xf32, #tpu.memory_space<vmem>>, vector<1x1x32xf32>
    %440 = vector.shape_cast %439 : vector<1x1x32xf32> to vector<1x32xf32>
    %cst_163 = arith.constant dense<0.000000e+00> : vector<18xf32>
    %441 = vector.multi_reduction <add>, %436, %cst_163 [1] : vector<18x32xf32> to vector<18xf32>
    %442 = vector.shape_cast %441 : vector<18xf32> to vector<18x1xf32>
    %cst_164 = arith.constant 3.200000e+01 : f32
    %443 = vector.broadcast %cst_164 : f32 to vector<18x1xf32>
    %444 = arith.divf %442, %443 : vector<18x1xf32>
    %445 = vector.broadcast %444 : vector<18x1xf32> to vector<18x32xf32>
    %446 = arith.subf %436, %445 : vector<18x32xf32>
    %447 = arith.mulf %446, %446 : vector<18x32xf32>
    %cst_165 = arith.constant dense<0.000000e+00> : vector<18xf32>
    %448 = vector.multi_reduction <add>, %447, %cst_165 [1] : vector<18x32xf32> to vector<18xf32>
    %449 = vector.shape_cast %448 : vector<18xf32> to vector<18x1xf32>
    %cst_166 = arith.constant 3.200000e+01 : f32
    %450 = vector.broadcast %cst_166 : f32 to vector<18x1xf32>
    %451 = arith.divf %449, %450 : vector<18x1xf32>
    %452 = vector.broadcast %444 : vector<18x1xf32> to vector<18x32xf32>
    %453 = arith.subf %436, %452 : vector<18x32xf32>
    %cst_167 = arith.constant 9.99999974E-6 : f32
    %454 = vector.broadcast %cst_167 : f32 to vector<18x1xf32>
    %455 = arith.addf %451, %454 : vector<18x1xf32>
    %456 = math.rsqrt %455 : vector<18x1xf32>
    %457 = vector.broadcast %456 : vector<18x1xf32> to vector<18x32xf32>
    %458 = arith.mulf %453, %457 : vector<18x32xf32>
    %459 = vector.broadcast %438 : vector<1x32xf32> to vector<18x32xf32>
    %460 = arith.mulf %458, %459 : vector<18x32xf32>
    %461 = vector.broadcast %440 : vector<1x32xf32> to vector<18x32xf32>
    %462 = arith.addf %460, %461 : vector<18x32xf32>
    %c1_168 = arith.constant 1 : index
    %c0_169 = arith.constant 0 : index
    %c0_170 = arith.constant 0 : index
    %463 = vector.load %arg14[%c1_168, %c0_169, %c0_170] : memref<2x32x128xf32, #tpu.memory_space<vmem>>, vector<1x32x128xf32>
    %464 = vector.shape_cast %463 : vector<1x32x128xf32> to vector<32x128xf32>
    %cst_171 = arith.constant dense<0.000000e+00> : vector<18x128xf32>
    %465 = tpu.matmul %462, %464, %cst_171 {dimension_numbers = #tpu.dot_dimension_numbers<[1], [0], [0], [1], [0, 0, 1, 1], [], []>} : vector<18x32xf32>, vector<32x128xf32>, vector<18x128xf32> -> vector<18x128xf32>
    %c1_172 = arith.constant 1 : index
    %c0_173 = arith.constant 0 : index
    %c0_174 = arith.constant 0 : index
    %466 = vector.load %arg15[%c1_172, %c0_173, %c0_174] : memref<2x1x128xf32, #tpu.memory_space<vmem>>, vector<1x1x128xf32>
    %467 = vector.shape_cast %466 : vector<1x1x128xf32> to vector<1x128xf32>
    %468 = vector.broadcast %467 : vector<1x128xf32> to vector<18x128xf32>
    %469 = arith.addf %465, %468 : vector<18x128xf32>
    %470 = arith.mulf %469, %469 : vector<18x128xf32>
    %471 = arith.mulf %469, %470 : vector<18x128xf32>
    %cst_175 = arith.constant 4.471500e-02 : f32
    %472 = vector.broadcast %cst_175 : f32 to vector<18x128xf32>
    %473 = arith.mulf %472, %471 : vector<18x128xf32>
    %474 = arith.addf %469, %473 : vector<18x128xf32>
    %cst_176 = arith.constant 0.797884583 : f32
    %475 = vector.broadcast %cst_176 : f32 to vector<18x128xf32>
    %476 = arith.mulf %475, %474 : vector<18x128xf32>
    %477 = math.tanh %476 : vector<18x128xf32>
    %cst_177 = arith.constant 1.000000e+00 : f32
    %478 = vector.broadcast %cst_177 : f32 to vector<18x128xf32>
    %479 = arith.addf %478, %477 : vector<18x128xf32>
    %cst_178 = arith.constant 5.000000e-01 : f32
    %480 = vector.broadcast %cst_178 : f32 to vector<18x128xf32>
    %481 = arith.mulf %480, %479 : vector<18x128xf32>
    %482 = arith.mulf %469, %481 : vector<18x128xf32>
    %c1_179 = arith.constant 1 : index
    %c0_180 = arith.constant 0 : index
    %c0_181 = arith.constant 0 : index
    %483 = vector.load %arg16[%c1_179, %c0_180, %c0_181] : memref<2x128x32xf32, #tpu.memory_space<vmem>>, vector<1x128x32xf32>
    %484 = vector.shape_cast %483 : vector<1x128x32xf32> to vector<128x32xf32>
    %cst_182 = arith.constant dense<0.000000e+00> : vector<18x32xf32>
    %485 = tpu.matmul %482, %484, %cst_182 {dimension_numbers = #tpu.dot_dimension_numbers<[1], [0], [0], [1], [0, 0, 1, 1], [], []>} : vector<18x128xf32>, vector<128x32xf32>, vector<18x32xf32> -> vector<18x32xf32>
    %486 = arith.addf %436, %485 : vector<18x32xf32>
    %c1_183 = arith.constant 1 : index
    %c0_184 = arith.constant 0 : index
    %c0_185 = arith.constant 0 : index
    %487 = vector.load %arg17[%c1_183, %c0_184, %c0_185] : memref<2x1x32xf32, #tpu.memory_space<vmem>>, vector<1x1x32xf32>
    %488 = vector.shape_cast %487 : vector<1x1x32xf32> to vector<1x32xf32>
    %489 = vector.broadcast %488 : vector<1x32xf32> to vector<18x32xf32>
    %490 = arith.addf %486, %489 : vector<18x32xf32>
    %491 = vector.extract_strided_slice %490 {offsets = [0, 0], sizes = [1, 32], strides = [1, 1]} : vector<18x32xf32> to vector<1x32xf32>
    %492 = vector.extract_strided_slice %490 {offsets = [9, 0], sizes = [1, 32], strides = [1, 1]} : vector<18x32xf32> to vector<1x32xf32>
    %493 = tpu.concatenate %491, %492 in 0 : vector<1x32xf32>, vector<1x32xf32> -> vector<2x32xf32>
    %c0_186 = arith.constant 0 : index
    %c0_187 = arith.constant 0 : index
    %494 = vector.load %arg18[%c0_186, %c0_187] : memref<1x32xf32, #tpu.memory_space<vmem>>, vector<1x32xf32>
    %c0_188 = arith.constant 0 : index
    %c0_189 = arith.constant 0 : index
    %495 = vector.load %arg19[%c0_188, %c0_189] : memref<1x32xf32, #tpu.memory_space<vmem>>, vector<1x32xf32>
    %cst_190 = arith.constant dense<0.000000e+00> : vector<2xf32>
    %496 = vector.multi_reduction <add>, %493, %cst_190 [1] : vector<2x32xf32> to vector<2xf32>
    %497 = vector.shape_cast %496 : vector<2xf32> to vector<2x1xf32>
    %cst_191 = arith.constant 3.200000e+01 : f32
    %498 = vector.broadcast %cst_191 : f32 to vector<2x1xf32>
    %499 = arith.divf %497, %498 : vector<2x1xf32>
    %500 = vector.broadcast %499 : vector<2x1xf32> to vector<2x32xf32>
    %501 = arith.subf %493, %500 : vector<2x32xf32>
    %502 = arith.mulf %501, %501 : vector<2x32xf32>
    %cst_192 = arith.constant dense<0.000000e+00> : vector<2xf32>
    %503 = vector.multi_reduction <add>, %502, %cst_192 [1] : vector<2x32xf32> to vector<2xf32>
    %504 = vector.shape_cast %503 : vector<2xf32> to vector<2x1xf32>
    %cst_193 = arith.constant 3.200000e+01 : f32
    %505 = vector.broadcast %cst_193 : f32 to vector<2x1xf32>
    %506 = arith.divf %504, %505 : vector<2x1xf32>
    %507 = vector.broadcast %499 : vector<2x1xf32> to vector<2x32xf32>
    %508 = arith.subf %493, %507 : vector<2x32xf32>
    %cst_194 = arith.constant 9.99999974E-6 : f32
    %509 = vector.broadcast %cst_194 : f32 to vector<2x1xf32>
    %510 = arith.addf %506, %509 : vector<2x1xf32>
    %511 = math.rsqrt %510 : vector<2x1xf32>
    %512 = vector.broadcast %511 : vector<2x1xf32> to vector<2x32xf32>
    %513 = arith.mulf %508, %512 : vector<2x32xf32>
    %514 = vector.broadcast %494 : vector<1x32xf32> to vector<2x32xf32>
    %515 = arith.mulf %513, %514 : vector<2x32xf32>
    %516 = vector.broadcast %495 : vector<1x32xf32> to vector<2x32xf32>
    %517 = arith.addf %515, %516 : vector<2x32xf32>
    %c0_195 = arith.constant 0 : index
    %c0_196 = arith.constant 0 : index
    %518 = vector.load %arg20[%c0_195, %c0_196] : memref<32x2xf32, #tpu.memory_space<vmem>>, vector<32x2xf32>
    %cst_197 = arith.constant dense<0.000000e+00> : vector<2x2xf32>
    %519 = tpu.matmul %517, %518, %cst_197 {dimension_numbers = #tpu.dot_dimension_numbers<[1], [0], [0], [1], [0, 0, 1, 1], [], []>} : vector<2x32xf32>, vector<32x2xf32>, vector<2x2xf32> -> vector<2x2xf32>
    %c0_198 = arith.constant 0 : index
    %c0_199 = arith.constant 0 : index
    %520 = vector.load %arg21[%c0_198, %c0_199] : memref<1x2xf32, #tpu.memory_space<vmem>>, vector<1x2xf32>
    %521 = vector.broadcast %520 : vector<1x2xf32> to vector<2x2xf32>
    %522 = arith.addf %519, %521 : vector<2x2xf32>
    %c0_200 = arith.constant 0 : index
    %c0_201 = arith.constant 0 : index
    %523 = vector.load %arg22[%c0_200, %c0_201] : memref<2x2xf32, #tpu.memory_space<vmem>>, vector<2x2xf32>
    tpu.vector_store %arg22[%c0_200, %c0_201], %522 {strides = array<i32>} : memref<2x2xf32, #tpu.memory_space<vmem>>, vector<2x2xf32>,
    return
  }
  func.func @transform_0(%arg0: i32) -> (i32, i32) {
    %c0_i32 = arith.constant 0 : i32
    %c0_i32_0 = arith.constant 0 : i32
    %c0_i32_1 = arith.constant 0 : i32
    return %c0_i32, %c0_i32_0 : i32, i32
  }
  func.func @transform_1(%arg0: i32) -> (i32, i32) {
    %c0_i32 = arith.constant 0 : i32
    %c0_i32_0 = arith.constant 0 : i32
    %c0_i32_1 = arith.constant 0 : i32
    return %c0_i32, %c0_i32_0 : i32, i32
  }
  func.func @transform_2(%arg0: i32) -> (i32, i32) {
    %c0_i32 = arith.constant 0 : i32
    %c0_i32_0 = arith.constant 0 : i32
    %c0_i32_1 = arith.constant 0 : i32
    return %c0_i32, %c0_i32_0 : i32, i32
  }
  func.func @transform_3(%arg0: i32) -> (i32, i32) {
    %c0_i32 = arith.constant 0 : i32
    %c0_i32_0 = arith.constant 0 : i32
    %c0_i32_1 = arith.constant 0 : i32
    return %c0_i32, %c0_i32_0 : i32, i32
  }
  func.func @transform_4(%arg0: i32) -> (i32, i32) {
    %c0_i32 = arith.constant 0 : i32
    %c0_i32_0 = arith.constant 0 : i32
    %c0_i32_1 = arith.constant 0 : i32
    return %c0_i32, %c0_i32_0 : i32, i32
  }
  func.func @transform_5(%arg0: i32) -> (i32, i32, i32) {
    %c0_i32 = arith.constant 0 : i32
    %c0_i32_0 = arith.constant 0 : i32
    %c0_i32_1 = arith.constant 0 : i32
    %c0_i32_2 = arith.constant 0 : i32
    return %c0_i32, %c0_i32_0, %c0_i32_1 : i32, i32, i32
  }
  func.func @transform_6(%arg0: i32) -> (i32, i32, i32) {
    %c0_i32 = arith.constant 0 : i32
    %c0_i32_0 = arith.constant 0 : i32
    %c0_i32_1 = arith.constant 0 : i32
    %c0_i32_2 = arith.constant 0 : i32
    return %c0_i32, %c0_i32_0, %c0_i32_1 : i32, i32, i32
  }
  func.func @transform_7(%arg0: i32) -> (i32, i32, i32) {
    %c0_i32 = arith.constant 0 : i32
    %c0_i32_0 = arith.constant 0 : i32
    %c0_i32_1 = arith.constant 0 : i32
    %c0_i32_2 = arith.constant 0 : i32
    return %c0_i32, %c0_i32_0, %c0_i32_1 : i32, i32, i32
  }
  func.func @transform_8(%arg0: i32) -> (i32, i32, i32) {
    %c0_i32 = arith.constant 0 : i32
    %c0_i32_0 = arith.constant 0 : i32
    %c0_i32_1 = arith.constant 0 : i32
    %c0_i32_2 = arith.constant 0 : i32
    return %c0_i32, %c0_i32_0, %c0_i32_1 : i32, i32, i32
  }
  func.func @transform_9(%arg0: i32) -> (i32, i32, i32) {
    %c0_i32 = arith.constant 0 : i32
    %c0_i32_0 = arith.constant 0 : i32
    %c0_i32_1 = arith.constant 0 : i32
    %c0_i32_2 = arith.constant 0 : i32
    return %c0_i32, %c0_i32_0, %c0_i32_1 : i32, i32, i32
  }
  func.func @transform_10(%arg0: i32) -> (i32, i32, i32) {
    %c0_i32 = arith.constant 0 : i32
    %c0_i32_0 = arith.constant 0 : i32
    %c0_i32_1 = arith.constant 0 : i32
    %c0_i32_2 = arith.constant 0 : i32
    return %c0_i32, %c0_i32_0, %c0_i32_1 : i32, i32, i32
  }
  func.func @transform_11(%arg0: i32) -> (i32, i32, i32) {
    %c0_i32 = arith.constant 0 : i32
    %c0_i32_0 = arith.constant 0 : i32
    %c0_i32_1 = arith.constant 0 : i32
    %c0_i32_2 = arith.constant 0 : i32
    return %c0_i32, %c0_i32_0, %c0_i32_1 : i32, i32, i32
  }
  func.func @transform_12(%arg0: i32) -> (i32, i32, i32) {
    %c0_i32 = arith.constant 0 : i32
    %c0_i32_0 = arith.constant 0 : i32
    %c0_i32_1 = arith.constant 0 : i32
    %c0_i32_2 = arith.constant 0 : i32
    return %c0_i32, %c0_i32_0, %c0_i32_1 : i32, i32, i32
  }
  func.func @transform_13(%arg0: i32) -> (i32, i32, i32) {
    %c0_i32 = arith.constant 0 : i32
    %c0_i32_0 = arith.constant 0 : i32
    %c0_i32_1 = arith.constant 0 : i32
    %c0_i32_2 = arith.constant 0 : i32
    return %c0_i32, %c0_i32_0, %c0_i32_1 : i32, i32, i32
  }
  func.func @transform_14(%arg0: i32) -> (i32, i32, i32) {
    %c0_i32 = arith.constant 0 : i32
    %c0_i32_0 = arith.constant 0 : i32
    %c0_i32_1 = arith.constant 0 : i32
    %c0_i32_2 = arith.constant 0 : i32
    return %c0_i32, %c0_i32_0, %c0_i32_1 : i32, i32, i32
  }
  func.func @transform_15(%arg0: i32) -> (i32, i32, i32) {
    %c0_i32 = arith.constant 0 : i32
    %c0_i32_0 = arith.constant 0 : i32
    %c0_i32_1 = arith.constant 0 : i32
    %c0_i32_2 = arith.constant 0 : i32
    return %c0_i32, %c0_i32_0, %c0_i32_1 : i32, i32, i32
  }
  func.func @transform_16(%arg0: i32) -> (i32, i32, i32) {
    %c0_i32 = arith.constant 0 : i32
    %c0_i32_0 = arith.constant 0 : i32
    %c0_i32_1 = arith.constant 0 : i32
    %c0_i32_2 = arith.constant 0 : i32
    return %c0_i32, %c0_i32_0, %c0_i32_1 : i32, i32, i32
  }
  func.func @transform_17(%arg0: i32) -> (i32, i32) {
    %c0_i32 = arith.constant 0 : i32
    %c0_i32_0 = arith.constant 0 : i32
    %c0_i32_1 = arith.constant 0 : i32
    return %c0_i32, %c0_i32_0 : i32, i32
  }
  func.func @transform_18(%arg0: i32) -> (i32, i32) {
    %c0_i32 = arith.constant 0 : i32
    %c0_i32_0 = arith.constant 0 : i32
    %c0_i32_1 = arith.constant 0 : i32
    return %c0_i32, %c0_i32_0 : i32, i32
  }
  func.func @transform_19(%arg0: i32) -> (i32, i32) {
    %c0_i32 = arith.constant 0 : i32
    %c0_i32_0 = arith.constant 0 : i32
    %c0_i32_1 = arith.constant 0 : i32
    return %c0_i32, %c0_i32_0 : i32, i32
  }
  func.func @transform_20(%arg0: i32) -> (i32, i32) {
    %c0_i32 = arith.constant 0 : i32
    %c0_i32_0 = arith.constant 0 : i32
    %c0_i32_1 = arith.constant 0 : i32
    return %c0_i32, %c0_i32_0 : i32, i32
  }
  func.func @transform_21(%arg0: i32) -> (i32, i32) {
    %c0_i32 = arith.constant 0 : i32
    %c0_i32_0 = arith.constant 0 : i32
    %c0_i32_1 = arith.constant 0 : i32
    return %c0_i32, %c0_i32_0 : i32, i32
  }
}

</mosaic_0001>

<llo_original>
// kernel: vit_forward.1
$region0: #{vit_forward.1}
  #allocation0 [shape = 'u32[]', space=smem, size = 0x4, offset = 0x4, fixed_abs, tag = 'smem constant byte address 0x4 - core index']
  #allocation1 [shape = 'u32[144,128]{1,0:T(1,128)}', space=vmem, size = 0x12000, scoped, tag = 'internal scratch']
  %s0 = inlined_call_operand.vmem [shape: f32[16,80], index: 0, kind: input, shape index: {}]
  %s1 = inlined_call_operand.vmem [shape: f32[80,32], index: 1, kind: input, shape index: {}]
  %s2 = inlined_call_operand.vmem [shape: f32[1,32], index: 2, kind: input, shape index: {}]
  %s3 = inlined_call_operand.vmem [shape: f32[1,32], index: 3, kind: input, shape index: {}]
  %s4 = inlined_call_operand.hbm [shape: f32[9,32], index: 4, kind: input, shape index: {}]
  %s5 = inlined_call_operand.vmem [shape: f32[2,1,32], index: 5, kind: input, shape index: {}, may-alias: {5,11}]
  %s6 = inlined_call_operand.vmem [shape: f32[2,1,32], index: 6, kind: input, shape index: {}, may-alias: {6,10,12,16}]
  %s7 = inlined_call_operand.hbm [shape: f32[2,32,96], index: 7, kind: input, shape index: {}]
  %s8 = inlined_call_operand.vmem [shape: f32[2,1,96], index: 8, kind: input, shape index: {}]
  %s9 = inlined_call_operand.hbm [shape: f32[2,32,32], index: 9, kind: input, shape index: {}]
  %s10 = inlined_call_operand.vmem [shape: f32[2,1,32], index: 10, kind: input, shape index: {}, may-alias: {6,10,12,16}]
  %s11 = inlined_call_operand.vmem [shape: f32[2,1,32], index: 11, kind: input, shape index: {}, may-alias: {5,11}]
  %s12 = inlined_call_operand.vmem [shape: f32[2,1,32], index: 12, kind: input, shape index: {}, may-alias: {6,10,12,16}]
  %s13 = inlined_call_operand.hbm [shape: f32[2,32,128], index: 13, kind: input, shape index: {}]
  %s14 = inlined_call_operand.vmem [shape: f32[2,1,128], index: 14, kind: input, shape index: {}]
  %s15 = inlined_call_operand.vmem [shape: f32[2,128,32], index: 15, kind: input, shape index: {}]
  %s16 = inlined_call_operand.vmem [shape: f32[2,1,32], index: 16, kind: input, shape index: {}, may-alias: {6,10,12,16}]
  %s17 = inlined_call_operand.vmem [shape: f32[1,32], index: 17, kind: input, shape index: {}]
  %s18 = inlined_call_operand.vmem [shape: f32[1,32], index: 18, kind: input, shape index: {}]
  %s19 = inlined_call_operand.hbm [shape: f32[32,2], index: 19, kind: input, shape index: {}]
  %s20 = inlined_call_operand.vmem [shape: f32[1,2], index: 20, kind: input, shape index: {}]
  %s21 = inlined_call_operand.hbm [shape: f32[2,2], index: 21, kind: output, shape index: {}]
  %s22 = sld [smem:[#allocation0]]
  $region114: #{vit_forward.1} parent=0
    _
  %s24 = ssub.s32 1, %s22
  %s25 = scalar_select 0, %s24, %s22
  $region1: #{vit_forward.1} parent=0
    #allocation2 [shape = 'u8[8192]{0}', space=vmem, size = 0x2000, scoped, tag = 'input window, operand 4, single buffered']
    #allocation3 [shape = 's32[1]{0}', space=sflag, size = 0x4, scoped, tag = 'scoped memory for vit_forward.1']
    #allocation4 [shape = 's32[1]{0}', space=sflag, size = 0x4, scoped, tag = 'scoped memory for vit_forward.1']
    #allocation5 [shape = 'u8[32768]{0}', space=vmem, size = 0x8000, scoped, tag = 'input window, operand 7, single buffered']
    #allocation6 [shape = 's32[1]{0}', space=sflag, size = 0x4, scoped, tag = 'scoped memory for vit_forward.1']
    #allocation7 [shape = 'u8[32768]{0}', space=vmem, size = 0x8000, scoped, tag = 'input window, operand 9, single buffered']
    #allocation8 [shape = 'u8[32768]{0}', space=vmem, size = 0x8000, scoped, tag = 'input window, operand 13, single buffered']
    #allocation9 [shape = 's32[1]{0}', space=sflag, size = 0x4, scoped, tag = 'scoped memory for vit_forward.1']
    #allocation10 [shape = 'u8[16384]{0}', space=vmem, size = 0x4000, scoped, tag = 'input window, operand 19, single buffered']
    #allocation11 [shape = 'u8[1024]{0}', space=vmem, size = 0x400, scoped, tag = 'output window, operand 0, single buffered']
    %26 = vsyncpa [#allocation3], 0
    %27 = vsyncpa [#allocation6], 0
    %28 = vsyncpa [#allocation9], 0
    %29 = vsyncpa [#allocation4], 0
    // Predicated region
    $region2: #{vit_forward.1} parent=1 // pred_check
      _
    $region3: #{vit_forward.1} parent=1 // pred_check_branch
      %31 = sbr.rel (0) target = $region5
    $region4: #{vit_forward.1} parent=1 // pred_region
      _
    $region5: #{vit_forward.1} parent=1 // pred_fallthru
      _
    // Predicated region
    $region6: #{vit_forward.1} parent=1 // pred_check
      _
    $region7: #{vit_forward.1} parent=1 // pred_check_branch
      %33 = sbr.rel (0) target = $region9
    $region8: #{vit_forward.1} parent=1 // pred_region
      _
    $region9: #{vit_forward.1} parent=1 // pred_fallthru
      _
    // Predicated region
    $region10: #{vit_forward.1} parent=1 // pred_check
      _
    $region11: #{vit_forward.1} parent=1 // pred_check_branch
      %35 = sbr.rel (0) target = $region13
    $region12: #{vit_forward.1} parent=1 // pred_region
      _
    $region13: #{vit_forward.1} parent=1 // pred_fallthru
      _
    // Predicated region
    $region14: #{vit_forward.1} parent=1 // pred_check
      _
    $region15: #{vit_forward.1} parent=1 // pred_check_branch
      %37 = sbr.rel (0) target = $region17
    $region16: #{vit_forward.1} parent=1 // pred_region
      _
    $region17: #{vit_forward.1} parent=1 // pred_fallthru
      _
    // Predicated region
    $region18: #{vit_forward.1} parent=1 // pred_check
      _
    $region19: #{vit_forward.1} parent=1 // pred_check_branch
      %39 = sbr.rel (0) target = $region21
    $region20: #{vit_forward.1} parent=1 // pred_region
      %s41 = ssub.s32 256, 256
      %42 = vsyncadd [#allocation3], %s41
      %s43 = sshll.u32 [#allocation2], 4
      %s44 = int_to_ptr.vmem [resolvable:$true] %s43
      %49 = dma.hbm_to_vmem [thread:$0]  %s4, 256, %s44, [#allocation3], 128, 128, 8
    $region21: #{vit_forward.1} parent=1 // pred_fallthru
      _
    // Predicated region
    $region22: #{vit_forward.1} parent=1 // pred_check
      _
    $region23: #{vit_forward.1} parent=1 // pred_check_branch
      %51 = sbr.rel (0) target = $region25
    $region24: #{vit_forward.1} parent=1 // pred_region
      _
    $region25: #{vit_forward.1} parent=1 // pred_fallthru
      _
    // Predicated region
    $region26: #{vit_forward.1} parent=1 // pred_check
      _
    $region27: #{vit_forward.1} parent=1 // pred_check_branch
      %53 = sbr.rel (0) target = $region29
    $region28: #{vit_forward.1} parent=1 // pred_region
      _
    $region29: #{vit_forward.1} parent=1 // pred_fallthru
      _
    // Predicated region
    $region30: #{vit_forward.1} parent=1 // pred_check
      _
    $region31: #{vit_forward.1} parent=1 // pred_check_branch
      %55 = sbr.rel (0) target = $region33
    $region32: #{vit_forward.1} parent=1 // pred_region
      %s57 = ssub.s32 1024, 1024
      %58 = vsyncadd [#allocation6], %s57
      %s59 = sshll.u32 [#allocation5], 4
      %s60 = int_to_ptr.vmem [resolvable:$true] %s59
      %65 = dma.hbm_to_vmem [thread:$0]  %s7, 1024, %s60, [#allocation6], 128, 128, 8
    $region33: #{vit_forward.1} parent=1 // pred_fallthru
      _
    // Predicated region
    $region34: #{vit_forward.1} parent=1 // pred_check
      _
    $region35: #{vit_forward.1} parent=1 // pred_check_branch
      %67 = sbr.rel (0) target = $region37
    $region36: #{vit_forward.1} parent=1 // pred_region
      _
    $region37: #{vit_forward.1} parent=1 // pred_fallthru
      _
    // Predicated region
    $region38: #{vit_forward.1} parent=1 // pred_check
      _
    $region39: #{vit_forward.1} parent=1 // pred_check_branch
      %69 = sbr.rel (0) target = $region41
    $region40: #{vit_forward.1} parent=1 // pred_region
      %s71 = ssub.s32 1024, 1024
      %72 = vsyncadd [#allocation6], %s71
      %s73 = sshll.u32 [#allocation7], 4
      %s74 = int_to_ptr.vmem [resolvable:$true] %s73
      %79 = dma.hbm_to_vmem [thread:$0]  %s9, 1024, %s74, [#allocation6], 128, 128, 8
    $region41: #{vit_forward.1} parent=1 // pred_fallthru
      _
    // Predicated region
    $region42: #{vit_forward.1} parent=1 // pred_check
      _
    $region43: #{vit_forward.1} parent=1 // pred_check_branch
      %81 = sbr.rel (0) target = $region45
    $region44: #{vit_forward.1} parent=1 // pred_region
      _
    $region45: #{vit_forward.1} parent=1 // pred_fallthru
      _
    // Predicated region
    $region46: #{vit_forward.1} parent=1 // pred_check
      _
    $region47: #{vit_forward.1} parent=1 // pred_check_branch
      %83 = sbr.rel (0) target = $region49
    $region48: #{vit_forward.1} parent=1 // pred_region
      _
    $region49: #{vit_forward.1} parent=1 // pred_fallthru
      _
    // Predicated region
    $region50: #{vit_forward.1} parent=1 // pred_check
      _
    $region51: #{vit_forward.1} parent=1 // pred_check_branch
      %85 = sbr.rel (0) target = $region53
    $region52: #{vit_forward.1} parent=1 // pred_region
      _
    $region53: #{vit_forward.1} parent=1 // pred_fallthru
      _
    // Predicated region
    $region54: #{vit_forward.1} parent=1 // pred_check
      _
    $region55: #{vit_forward.1} parent=1 // pred_check_branch
      %87 = sbr.rel (0) target = $region57
    $region56: #{vit_forward.1} parent=1 // pred_region
      %s89 = ssub.s32 1024, 1024
      %90 = vsyncadd [#allocation9], %s89
      %s91 = sshll.u32 [#allocation8], 4
      %s92 = int_to_ptr.vmem [resolvable:$true] %s91
      %97 = dma.hbm_to_vmem [thread:$0]  %s13, 1024, %s92, [#allocation9], 128, 128, 8
    $region57: #{vit_forward.1} parent=1 // pred_fallthru
      _
    // Predicated region
    $region58: #{vit_forward.1} parent=1 // pred_check
      _
    $region59: #{vit_forward.1} parent=1 // pred_check_branch
      %99 = sbr.rel (0) target = $region61
    $region60: #{vit_forward.1} parent=1 // pred_region
      _
    $region61: #{vit_forward.1} parent=1 // pred_fallthru
      _
    // Predicated region
    $region62: #{vit_forward.1} parent=1 // pred_check
      _
    $region63: #{vit_forward.1} parent=1 // pred_check_branch
      %101 = sbr.rel (0) target = $region65
    $region64: #{vit_forward.1} parent=1 // pred_region
      _
    $region65: #{vit_forward.1} parent=1 // pred_fallthru
      _
    // Predicated region
    $region66: #{vit_forward.1} parent=1 // pred_check
      _
    $region67: #{vit_forward.1} parent=1 // pred_check_branch
      %103 = sbr.rel (0) target = $region69
    $region68: #{vit_forward.1} parent=1 // pred_region
      _
    $region69: #{vit_forward.1} parent=1 // pred_fallthru
      _
    // Predicated region
    $region70: #{vit_forward.1} parent=1 // pred_check
      _
    $region71: #{vit_forward.1} parent=1 // pred_check_branch
      %105 = sbr.rel (0) target = $region73
    $region72: #{vit_forward.1} parent=1 // pred_region
      _
    $region73: #{vit_forward.1} parent=1 // pred_fallthru
      _
    // Predicated region
    $region74: #{vit_forward.1} parent=1 // pred_check
      _
    $region75: #{vit_forward.1} parent=1 // pred_check_branch
      %107 = sbr.rel (0) target = $region77
    $region76: #{vit_forward.1} parent=1 // pred_region
      _
    $region77: #{vit_forward.1} parent=1 // pred_fallthru
      _
    // Predicated region
    $region78: #{vit_forward.1} parent=1 // pred_check
      _
    $region79: #{vit_forward.1} parent=1 // pred_check_branch
      %109 = sbr.rel (0) target = $region81
    $region80: #{vit_forward.1} parent=1 // pred_region
      %s111 = ssub.s32 512, 512
      %112 = vsyncadd [#allocation9], %s111
      %s113 = sshll.u32 [#allocation10], 4
      %s114 = int_to_ptr.vmem [resolvable:$true] %s113
      %119 = dma.hbm_to_vmem [thread:$0]  %s19, 512, %s114, [#allocation9], 128, 128, 8
    $region81: #{vit_forward.1} parent=1 // pred_fallthru
      _
    // Predicated region
    $region82: #{vit_forward.1} parent=1 // pred_check
      _
    $region83: #{vit_forward.1} parent=1 // pred_check_branch
      %121 = sbr.rel (0) target = $region85
    $region84: #{vit_forward.1} parent=1 // pred_region
      _
    $region85: #{vit_forward.1} parent=1 // pred_fallthru
      _
    // Predicated region
    $region86: #{vit_forward.1} parent=1 // pred_check
      _
    $region87: #{vit_forward.1} parent=1 // pred_check_branch
      %123 = sbr.rel (0) target = $region89
    $region88: #{vit_forward.1} parent=1 // pred_region
      %124 = dma.done [#allocation3], 256
    $region89: #{vit_forward.1} parent=1 // pred_fallthru
      _
    // Predicated region
    $region90: #{vit_forward.1} parent=1 // pred_check
      _
    $region91: #{vit_forward.1} parent=1 // pred_check_branch
      %126 = sbr.rel (0) target = $region93
    $region92: #{vit_forward.1} parent=1 // pred_region
      %127 = dma.done [#allocation6], 1024
    $region93: #{vit_forward.1} parent=1 // pred_fallthru
      _
    // Predicated region
    $region94: #{vit_forward.1} parent=1 // pred_check
      _
    $region95: #{vit_forward.1} parent=1 // pred_check_branch
      %129 = sbr.rel (0) target = $region97
    $region96: #{vit_forward.1} parent=1 // pred_region
      %130 = dma.done [#allocation6], 1024
    $region97: #{vit_forward.1} parent=1 // pred_fallthru
      _
    // Predicated region
    $region98: #{vit_forward.1} parent=1 // pred_check
      _
    $region99: #{vit_forward.1} parent=1 // pred_check_branch
      %132 = sbr.rel (0) target = $region101
    $region100: #{vit_forward.1} parent=1 // pred_region
      %133 = dma.done [#allocation9], 1024
    $region101: #{vit_forward.1} parent=1 // pred_fallthru
      _
    // Predicated region
    $region102: #{vit_forward.1} parent=1 // pred_check
      _
    $region103: #{vit_forward.1} parent=1 // pred_check_branch
      %135 = sbr.rel (0) target = $region105
    $region104: #{vit_forward.1} parent=1 // pred_region
      %136 = dma.done [#allocation9], 512
    $region105: #{vit_forward.1} parent=1 // pred_fallthru
      _
    %v137 = vld [vmem:[%s0] sm:$0xff]
    %v138 = vld [vmem:[%s0 + $0x8] sm:$0xff]
    %v139 = vld [vmem:[%s1] sm:$0xff]
    %v140 = vld [vmem:[%s1 + $0x8] sm:$0xff]
    %v141 = vld [vmem:[%s1 + $0x10] sm:$0xff]
    %v142 = vld [vmem:[%s1 + $0x18] sm:$0xff]
    %v143 = vld [vmem:[%s1 + $0x20] sm:$0xff]
    %v144 = vld [vmem:[%s1 + $0x28] sm:$0xff]
    %v145 = vld [vmem:[%s1 + $0x30] sm:$0xff]
    %v146 = vld [vmem:[%s1 + $0x38] sm:$0xff]
    %v147 = vld [vmem:[%s1 + $0x40] sm:$0xff]
    %v148 = vld [vmem:[%s1 + $0x48] sm:$0xff]
    %v149 = vld [vmem:[%s2] sm:$0x1]
    %v151 = vlaneseq
    %v152 = vshrl.u32 %v151, 7
    %v153 = vsub.s32 0, %v152
    %v154 = vrot.slane %v149, %v153
    %vm156 = vcmask 654336
    %v158 = vsel %vm156, %v137, 0
    %v161 = vsel %vm156, %v138, 0
    %163 = vmatprep.subr.mxu0 0.0
    %164 = vmatpush1.msra.mxu0 %v139
    %165 = vmatprep.subr.mxu0 0.0
    %166 = vmatpush1.msra.mxu0 %v140
    %167 = vmatprep.subr.mxu0 0.0
    %168 = vmatpush1.msra.mxu0 %v141
    %169 = vmatprep.subr.mxu0 0.0
    %170 = vmatpush1.msra.mxu0 %v142
    %171 = vmatprep.subr.mxu0 0.0
    %172 = vmatpush1.msra.mxu0 %v143
    %173 = vmatprep.subr.mxu0 0.0
    %174 = vmatpush1.msra.mxu0 %v144
    %175 = vmatprep.subr.mxu0 0.0
    %176 = vmatpush1.msra.mxu0 %v145
    %177 = vmatprep.subr.mxu0 0.0
    %178 = vmatpush1.msra.mxu0 %v146
    %179 = vmatprep.subr.mxu0 0.0
    %180 = vmatpush1.msra.mxu0 %v147
    %181 = vmatprep.subr.mxu0 0.0
    %182 = vmatpush1.msra.mxu0 %v148
    %183 = vmatprep.subr.mxu0 0.0
    %184 = vmatpush1.msra.mxu0 0.0
    %185 = vmatprep.subr.mxu0 0.0
    %186 = vmatpush1.msra.mxu0 0.0
    %187 = vmatprep.subr.mxu0 0.0
    %188 = vmatpush1.msra.mxu0 0.0
    %189 = vmatprep.subr.mxu0 0.0
    %190 = vmatpush1.msra.mxu0 0.0
    %191 = vmatprep.subr.mxu0 0.0
    %192 = vmatpush1.msra.mxu0 0.0
    %193 = vmatprep.subr.mxu0 0.0
    %194 = vmatpush1.msra.mxu0 0.0
    %195 = vmatprep.subr.mxu0 0.0
    %196 = vmatpush1.msra.mxu0 0.0
    %197 = vmatprep.subr.mxu0 0.0
    %198 = vmatpush1.msra.mxu0 0.0
    %199 = vmatprep.subr.mxu0 0.0
    %200 = vmatpush1.msra.mxu0 0.0
    %201 = vmatprep.subr.mxu0 0.0
    %202 = vmatpush1.msra.mxu0 0.0
    %203 = vmatprep.subr.mxu0 0.0
    %204 = vmatpush1.msra.mxu0 0.0
    %205 = vmatprep.subr.mxu0 0.0
    %206 = vmatpush1.msra.mxu0 0.0
    %207 = vmatprep.subr.mxu0 0.0
    %208 = vmatpush1.msra.mxu0 0.0
    %209 = vmatprep.subr.mxu0 0.0
    %210 = vmatpush1.msra.mxu0 0.0
    %211 = vmatprep.subr.mxu0 0.0
    %212 = vmatpush1.msra.mxu0 0.0
    %213 = vmatprep.subr.mxu0 0.0
    %214 = vmatpush1.msra.mxu0 0.0
    %215 = vmatprep.subr.mxu0 0.0
    %216 = vmatpush1.msra.mxu0 0.0
    %217 = vmatprep.subr.mxu0 0.0
    %218 = vmatpush1.msra.mxu0 0.0
    %219 = vmatprep.subr.mxu0 0.0
    %220 = vmatpush1.msra.mxu0 0.0
    %221 = vmatprep.subr.mxu0 0.0
    %222 = vmatpush1.msra.mxu0 0.0
    %223 = vmatprep.subr.mxu0 0.0
    %224 = vmatpush1.msra.mxu0 0.0
    %225 = vmatprep.subr.mxu0 0.0
    %226 = vmatpush1.msra.mxu0 0.0
    %227 = vmatprep.mubr.f32.mxu0 0.0
    %228 = vmatmul.mubr.f32.gmra.mrb[0].mxu0 %v158
    %v229 = vpop.f32.mrb[0].mxu0
    %v230 = vadd.f32 %v154, %v229
    %v231 = vpop.f32.mrb[0].mxu0
    %232 = vmatprep.mubr.f32.mxu0 0.0
    %233 = vmatmul.mubr.f32.gmra.mrb[0].mxu0 %v161
    %v234 = vpop.f32.mrb[0].mxu0
    %v235 = vadd.f32 %v154, %v234
    %v236 = vpop.f32.mrb[0].mxu0
    %237 = vdwg.mxu0
    %v238 = vld [vmem:[%s3] sm:$0x1]
    %v240 = vrot.slane %v230, 7
    %vm242 = vcmask 1040384
    %v243 = vsel %vm242, %v238, %v240
    %v244 = vld [vmem:[#allocation2] sm:$0xff]
    %v245 = vld [vmem:[#allocation2 + $0x8] sm:$0x1]
    %v246 = vadd.f32 %v243, %v244
    %v247 = vadd.f32 %v240, %v245
    %v249 = vrot.slane %v235, 7
    %v251 = vsel %vm242, %v238, %v249
    %v252 = vadd.f32 %v251, %v244
    %v253 = vadd.f32 %v249, %v245
    %v256 = vrot.slane %v252, 7
    %v257 = vrot.slane %v253, 7
    %v258 = vsel %vm242, %v256, %v257
    %v261 = vsel %vm242, %v247, %v256
    %v262 = vld [vmem:[%s5] sm:$0x1]
    %v263 = vld [vmem:[%s6] sm:$0x1]
    %vm264 = vcmask 261120
    %v265 = vsel %vm264, %v246, 0.0
    %266 = vadd.xlane.f32.xlu0 %v265
    %v267 = vpop.xlane.xlu0 %266
    %v268 = vsel %vm264, %v261, 0.0
    %269 = vadd.xlane.f32.xlu0 %v268
    %v270 = vpop.xlane.xlu0 %269
    %vm271 = vcmask 254976
    %v272 = vsel %vm271, %v258, 0.0
    %273 = vadd.xlane.f32.xlu0 %v272
    %v274 = vpop.xlane.xlu0 %273
    %v275 = vrcp.pop 32.0
    %v276 = vmul.f32 %v267, %v275
    %v277 = vmul.f32 %v270, %v275
    %v278 = vmul.f32 %v274, %v275
    %v279 = vsub.f32 %v246, %v276
    %v280 = vsub.f32 %v261, %v277
    %v281 = vsub.f32 %v258, %v278
    %v282 = vmul.f32 %v279, %v279
    %v283 = vmul.f32 %v280, %v280
    %v284 = vmul.f32 %v281, %v281
    %v285 = vsel %vm264, %v282, 0.0
    %286 = vadd.xlane.f32.xlu0 %v285
    %v287 = vpop.xlane.xlu0 %286
    %v288 = vsel %vm264, %v283, 0.0
    %289 = vadd.xlane.f32.xlu0 %v288
    %v290 = vpop.xlane.xlu0 %289
    %v291 = vsel %vm271, %v284, 0.0
    %292 = vadd.xlane.f32.xlu0 %v291
    %v293 = vpop.xlane.xlu0 %292
    %v294 = vmul.f32 %v287, %v275
    %v295 = vmul.f32 %v290, %v275
    %v296 = vmul.f32 %v293, %v275
    %v297 = vadd.f32 %v294, 1e-05
    %v298 = vadd.f32 %v295, 1e-05
    %v299 = vadd.f32 %v296, 1e-05
    %v300 = vrsqrt.pop %v297
    %v301 = vrsqrt.pop %v298
    %v302 = vrsqrt.pop %v299
    %v303 = vmul.f32 %v279, %v300
    %v304 = vmul.f32 %v280, %v301
    %v305 = vmul.f32 %v281, %v302
    %v307 = vlaneseq
    %v308 = vshrl.u32 %v307, 7
    %v309 = vsub.s32 0, %v308
    %v310 = vrot.slane %v262, %v309
    %v312 = vmul.f32 %v303, %v310
    %v313 = vmul.f32 %v304, %v310
    %v314 = vmul.f32 %v305, %v310
    %v316 = vlaneseq
    %v317 = vshrl.u32 %v316, 7
    %v318 = vsub.s32 0, %v317
    %v319 = vrot.slane %v263, %v318
    %v321 = vadd.f32 %v312, %v319
    %v322 = vadd.f32 %v313, %v319
    %v323 = vadd.f32 %v314, %v319
    %v324 = vld [vmem:[#allocation5] sm:$0xff]
    %v325 = vld [vmem:[#allocation5 + $0x8] sm:$0xff]
    %v326 = vld [vmem:[#allocation5 + $0x10] sm:$0xff]
    %v327 = vld [vmem:[#allocation5 + $0x18] sm:$0xff]
    %v328 = vld [vmem:[%s8] sm:$0x1]
    %v330 = vlaneseq
    %v331 = vshrl.u32 %v330, 7
    %v332 = vsub.s32 0, %v331
    %v333 = vrot.slane %v328, %v332
    %v336 = vsel %vm264, %v321, 0
    %v339 = vsel %vm264, %v322, 0
    %v342 = vsel %vm264, %v323, 0
    %344 = vmatprep.subr.mxu0 0.0
    %345 = vmatpush1.msra.mxu0 %v324
    %346 = vmatprep.subr.mxu0 0.0
    %347 = vmatpush1.msra.mxu0 %v325
    %348 = vmatprep.subr.mxu0 0.0
    %349 = vmatpush1.msra.mxu0 %v326
    %350 = vmatprep.subr.mxu0 0.0
    %351 = vmatpush1.msra.mxu0 %v327
    %352 = vmatprep.subr.mxu0 0.0
    %353 = vmatpush1.msra.mxu0 0.0
    %354 = vmatprep.subr.mxu0 0.0
    %355 = vmatpush1.msra.mxu0 0.0
    %356 = vmatprep.subr.mxu0 0.0
    %357 = vmatpush1.msra.mxu0 0.0
    %358 = vmatprep.subr.mxu0 0.0
    %359 = vmatpush1.msra.mxu0 0.0
    %360 = vmatprep.subr.mxu0 0.0
    %361 = vmatpush1.msra.mxu0 0.0
    %362 = vmatprep.subr.mxu0 0.0
    %363 = vmatpush1.msra.mxu0 0.0
    %364 = vmatprep.subr.mxu0 0.0
    %365 = vmatpush1.msra.mxu0 0.0
    %366 = vmatprep.subr.mxu0 0.0
    %367 = vmatpush1.msra.mxu0 0.0
    %368 = vmatprep.subr.mxu0 0.0
    %369 = vmatpush1.msra.mxu0 0.0
    %370 = vmatprep.subr.mxu0 0.0
    %371 = vmatpush1.msra.mxu0 0.0
    %372 = vmatprep.subr.mxu0 0.0
    %373 = vmatpush1.msra.mxu0 0.0
    %374 = vmatprep.subr.mxu0 0.0
    %375 = vmatpush1.msra.mxu0 0.0
    %376 = vmatprep.subr.mxu0 0.0
    %377 = vmatpush1.msra.mxu0 0.0
    %378 = vmatprep.subr.mxu0 0.0
    %379 = vmatpush1.msra.mxu0 0.0
    %380 = vmatprep.subr.mxu0 0.0
    %381 = vmatpush1.msra.mxu0 0.0
    %382 = vmatprep.subr.mxu0 0.0
    %383 = vmatpush1.msra.mxu0 0.0
    %384 = vmatprep.subr.mxu0 0.0
    %385 = vmatpush1.msra.mxu0 0.0
    %386 = vmatprep.subr.mxu0 0.0
    %387 = vmatpush1.msra.mxu0 0.0
    %388 = vmatprep.subr.mxu0 0.0
    %389 = vmatpush1.msra.mxu0 0.0
    %390 = vmatprep.subr.mxu0 0.0
    %391 = vmatpush1.msra.mxu0 0.0
    %392 = vmatprep.subr.mxu0 0.0
    %393 = vmatpush1.msra.mxu0 0.0
    %394 = vmatprep.subr.mxu0 0.0
    %395 = vmatpush1.msra.mxu0 0.0
    %396 = vmatprep.subr.mxu0 0.0
    %397 = vmatpush1.msra.mxu0 0.0
    %398 = vmatprep.subr.mxu0 0.0
    %399 = vmatpush1.msra.mxu0 0.0
    %400 = vmatprep.subr.mxu0 0.0
    %401 = vmatpush1.msra.mxu0 0.0
    %402 = vmatprep.subr.mxu0 0.0
    %403 = vmatpush1.msra.mxu0 0.0
    %404 = vmatprep.subr.mxu0 0.0
    %405 = vmatpush1.msra.mxu0 0.0
    %406 = vmatprep.subr.mxu0 0.0
    %407 = vmatpush1.msra.mxu0 0.0
    %408 = vmatprep.mubr.f32.mxu0 0.0
    %409 = vmatmul.mubr.f32.gmra.mrb[0].mxu0 %v336
    %v410 = vpop.f32.mrb[0].mxu0
    %v411 = vadd.f32 %v333, %v410
    %v412 = vpop.f32.mrb[0].mxu0
    %413 = vmatprep.mubr.f32.mxu0 0.0
    %414 = vmatmul.mubr.f32.gmra.mrb[0].mxu0 %v339
    %v415 = vpop.f32.mrb[0].mxu0
    %v416 = vadd.f32 %v333, %v415
    %v417 = vpop.f32.mrb[0].mxu0
    %418 = vmatprep.mubr.f32.mxu0 0.0
    %419 = vmatmul.mubr.f32.gmra.mrb[0].mxu0 %v342
    %v420 = vpop.f32.mrb[0].mxu0
    %v421 = vadd.f32 %v333, %v420
    %v422 = vpop.f32.mrb[0].mxu0
    %423 = vdwg.mxu0
    %v424 = vmul.f32 %v411, 0.35355338
    %v425 = vmul.f32 %v416, 0.35355338
    %428 = vrot.lane.b32.xlu0 %v411, 96
    %v429 = vpop.permute.xlu0 %428
    %430 = vrot.lane.b32.xlu0 %v416, 96
    %v431 = vpop.permute.xlu0 %430
    %vm432 = vcmask 64512
    %v434 = vsel %vm432, %v424, 0
    %v437 = vsel %vm432, %v425, 0
    %v439 = vsel %vm432, %v429, 0
    %v441 = vsel %vm432, %v431, 0
    %443 = vmatprep.subr.mxu0 0.0
    %444 = vmatpush1.xpose.msra.mxu0 %v439
    %445 = vmatprep.subr.mxu0 0.0
    %446 = vmatpush1.xpose.msra.mxu0 %v441
    %447 = vmatprep.subr.mxu0 0.0
    %448 = vmatpush1.xpose.msra.mxu0 0.0
    %449 = vmatprep.subr.mxu0 0.0
    %450 = vmatpush1.xpose.msra.mxu0 0.0
    %451 = vmatprep.subr.mxu0 0.0
    %452 = vmatpush1.xpose.msra.mxu0 0.0
    %453 = vmatprep.subr.mxu0 0.0
    %454 = vmatpush1.xpose.msra.mxu0 0.0
    %455 = vmatprep.subr.mxu0 0.0
    %456 = vmatpush1.xpose.msra.mxu0 0.0
    %457 = vmatprep.subr.mxu0 0.0
    %458 = vmatpush1.xpose.msra.mxu0 0.0
    %459 = vmatprep.subr.mxu0 0.0
    %460 = vmatpush1.xpose.msra.mxu0 0.0
    %461 = vmatprep.subr.mxu0 0.0
    %462 = vmatpush1.xpose.msra.mxu0 0.0
    %463 = vmatprep.subr.mxu0 0.0
    %464 = vmatpush1.xpose.msra.mxu0 0.0
    %465 = vmatprep.subr.mxu0 0.0
    %466 = vmatpush1.xpose.msra.mxu0 0.0
    %467 = vmatprep.subr.mxu0 0.0
    %468 = vmatpush1.xpose.msra.mxu0 0.0
    %469 = vmatprep.subr.mxu0 0.0
    %470 = vmatpush1.xpose.msra.mxu0 0.0
    %471 = vmatprep.subr.mxu0 0.0
    %472 = vmatpush1.xpose.msra.mxu0 0.0
    %473 = vmatprep.subr.mxu0 0.0
    %474 = vmatpush1.xpose.msra.mxu0 0.0
    %475 = vmatprep.subr.mxu0 0.0
    %476 = vmatpush1.xpose.msra.mxu0 0.0
    %477 = vmatprep.subr.mxu0 0.0
    %478 = vmatpush1.xpose.msra.mxu0 0.0
    %479 = vmatprep.subr.mxu0 0.0
    %480 = vmatpush1.xpose.msra.mxu0 0.0
    %481 = vmatprep.subr.mxu0 0.0
    %482 = vmatpush1.xpose.msra.mxu0 0.0
    %483 = vmatprep.subr.mxu0 0.0
    %484 = vmatpush1.xpose.msra.mxu0 0.0
    %485 = vmatprep.subr.mxu0 0.0
    %486 = vmatpush1.xpose.msra.mxu0 0.0
    %487 = vmatprep.subr.mxu0 0.0
    %488 = vmatpush1.xpose.msra.mxu0 0.0
    %489 = vmatprep.subr.mxu0 0.0
    %490 = vmatpush1.xpose.msra.mxu0 0.0
    %491 = vmatprep.subr.mxu0 0.0
    %492 = vmatpush1.xpose.msra.mxu0 0.0
    %493 = vmatprep.subr.mxu0 0.0
    %494 = vmatpush1.xpose.msra.mxu0 0.0
    %495 = vmatprep.subr.mxu0 0.0
    %496 = vmatpush1.xpose.msra.mxu0 0.0
    %497 = vmatprep.subr.mxu0 0.0
    %498 = vmatpush1.xpose.msra.mxu0 0.0
    %499 = vmatprep.subr.mxu0 0.0
    %500 = vmatpush1.xpose.msra.mxu0 0.0
    %501 = vmatprep.subr.mxu0 0.0
    %502 = vmatpush1.xpose.msra.mxu0 0.0
    %503 = vmatprep.subr.mxu0 0.0
    %504 = vmatpush1.xpose.msra.mxu0 0.0
    %505 = vmatprep.subr.mxu0 0.0
    %506 = vmatpush1.xpose.msra.mxu0 0.0
    %507 = vmatprep.mubr.f32.mxu0 0.0
    %508 = vmatmul.mubr.f32.gmra.mrb[0].mxu0 %v434
    %v509 = vpop.f32.mrb[0].mxu0
    %v510 = vadd.f32 0.0, %v509
    %v511 = vpop.f32.mrb[0].mxu0
    %512 = vmatprep.mubr.f32.mxu0 0.0
    %513 = vmatmul.mubr.f32.gmra.mrb[0].mxu0 %v437
    %v514 = vpop.f32.mrb[0].mxu0
    %v515 = vadd.f32 0.0, %v514
    %v516 = vpop.f32.mrb[0].mxu0
    %517 = vdwg.mxu0
    %vm518 = vcmask 72704
    %v519 = vsel %vm518, %v510, -inf
    %520 = vmax.xlane.f32.xlu0 %v519
    %v521 = vpop.xlane.xlu0 %520
    %vm522 = vcmask 65536
    %v523 = vsel %vm522, %v515, -inf
    %524 = vmax.xlane.f32.xlu0 %v523
    %v525 = vpop.xlane.xlu0 %524
    %v526 = vsub.f32 %v510, %v521
    %v527 = vsub.f32 %v515, %v525
    %v528 = vmul.f32 %v526, 1.442695
    %v529 = vpow.pop %v528
    %v530 = vmul.f32 %v527, 1.442695
    %v531 = vpow.pop %v530
    %v532 = vsel %vm518, %v529, 0.0
    %533 = vadd.xlane.f32.xlu0 %v532
    %v534 = vpop.xlane.xlu0 %533
    %v535 = vsel %vm522, %v531, 0.0
    %536 = vadd.xlane.f32.xlu0 %v535
    %v537 = vpop.xlane.xlu0 %536
    %v538 = vrcp.pop %v534
    %v539 = vrcp.pop %v537
    %v540 = vmul.f32 %v529, %v538
    %v541 = vmul.f32 %v531, %v539
    %542 = vrot.lane.b32.xlu0 %v411, 64
    %v543 = vpop.permute.xlu0 %542
    %544 = vrot.lane.b32.xlu0 %v416, 64
    %v545 = vpop.permute.xlu0 %544
    %v548 = vsel %vm518, %v540, 0
    %v551 = vsel %vm518, %v541, 0
    %v553 = vsel %vm242, %v545, 0
    %555 = vmatprep.subr.mxu0 0.0
    %556 = vmatpush1.msra.mxu0 %v543
    %557 = vmatprep.subr.mxu0 0.0
    %558 = vmatpush1.msra.mxu0 %v553
    %559 = vmatprep.subr.mxu0 0.0
    %560 = vmatpush1.msra.mxu0 0.0
    %561 = vmatprep.subr.mxu0 0.0
    %562 = vmatpush1.msra.mxu0 0.0
    %563 = vmatprep.subr.mxu0 0.0
    %564 = vmatpush1.msra.mxu0 0.0
    %565 = vmatprep.subr.mxu0 0.0
    %566 = vmatpush1.msra.mxu0 0.0
    %567 = vmatprep.subr.mxu0 0.0
    %568 = vmatpush1.msra.mxu0 0.0
    %569 = vmatprep.subr.mxu0 0.0
    %570 = vmatpush1.msra.mxu0 0.0
    %571 = vmatprep.subr.mxu0 0.0
    %572 = vmatpush1.msra.mxu0 0.0
    %573 = vmatprep.subr.mxu0 0.0
    %574 = vmatpush1.msra.mxu0 0.0
    %575 = vmatprep.subr.mxu0 0.0
    %576 = vmatpush1.msra.mxu0 0.0
    %577 = vmatprep.subr.mxu0 0.0
    %578 = vmatpush1.msra.mxu0 0.0
    %579 = vmatprep.subr.mxu0 0.0
    %580 = vmatpush1.msra.mxu0 0.0
    %581 = vmatprep.subr.mxu0 0.0
    %582 = vmatpush1.msra.mxu0 0.0
    %583 = vmatprep.subr.mxu0 0.0
    %584 = vmatpush1.msra.mxu0 0.0
    %585 = vmatprep.subr.mxu0 0.0
    %586 = vmatpush1.msra.mxu0 0.0
    %587 = vmatprep.subr.mxu0 0.0
    %588 = vmatpush1.msra.mxu0 0.0
    %589 = vmatprep.subr.mxu0 0.0
    %590 = vmatpush1.msra.mxu0 0.0
    %591 = vmatprep.subr.mxu0 0.0
    %592 = vmatpush1.msra.mxu0 0.0
    %593 = vmatprep.subr.mxu0 0.0
    %594 = vmatpush1.msra.mxu0 0.0
    %595 = vmatprep.subr.mxu0 0.0
    %596 = vmatpush1.msra.mxu0 0.0
    %597 = vmatprep.subr.mxu0 0.0
    %598 = vmatpush1.msra.mxu0 0.0
    %599 = vmatprep.subr.mxu0 0.0
    %600 = vmatpush1.msra.mxu0 0.0
    %601 = vmatprep.subr.mxu0 0.0
    %602 = vmatpush1.msra.mxu0 0.0
    %603 = vmatprep.subr.mxu0 0.0
    %604 = vmatpush1.msra.mxu0 0.0
    %605 = vmatprep.subr.mxu0 0.0
    %606 = vmatpush1.msra.mxu0 0.0
    %607 = vmatprep.subr.mxu0 0.0
    %608 = vmatpush1.msra.mxu0 0.0
    %609 = vmatprep.subr.mxu0 0.0
    %610 = vmatpush1.msra.mxu0 0.0
    %611 = vmatprep.subr.mxu0 0.0
    %612 = vmatpush1.msra.mxu0 0.0
    %613 = vmatprep.subr.mxu0 0.0
    %614 = vmatpush1.msra.mxu0 0.0
    %615 = vmatprep.subr.mxu0 0.0
    %616 = vmatpush1.msra.mxu0 0.0
    %617 = vmatprep.subr.mxu0 0.0
    %618 = vmatpush1.msra.mxu0 0.0
    %619 = vmatprep.mubr.f32.mxu0 0.0
    %620 = vmatmul.mubr.f32.gmra.mrb[0].mxu0 %v548
    %v621 = vpop.f32.mrb[0].mxu0
    %v622 = vadd.f32 0.0, %v621
    %v623 = vpop.f32.mrb[0].mxu0
    %624 = vmatprep.mubr.f32.mxu0 0.0
    %625 = vmatmul.mubr.f32.gmra.mrb[0].mxu0 %v551
    %v626 = vpop.f32.mrb[0].mxu0
    %v627 = vadd.f32 0.0, %v626
    %v628 = vpop.f32.mrb[0].mxu0
    %629 = vdwg.mxu0
    %630 = vrot.lane.b32.xlu0 %v424, 120
    %v631 = vpop.permute.xlu0 %630
    %632 = vrot.lane.b32.xlu0 %v425, 120
    %v633 = vpop.permute.xlu0 %632
    %634 = vrot.lane.b32.xlu0 %v411, 88
    %v635 = vpop.permute.xlu0 %634
    %636 = vrot.lane.b32.xlu0 %v416, 88
    %v637 = vpop.permute.xlu0 %636
    %v638 = vsel %vm432, %v631, 0
    %v640 = vsel %vm432, %v633, 0
    %v642 = vsel %vm432, %v635, 0
    %v644 = vsel %vm432, %v637, 0
    %646 = vmatprep.subr.mxu0 0.0
    %647 = vmatpush1.xpose.msra.mxu0 %v642
    %648 = vmatprep.subr.mxu0 0.0
    %649 = vmatpush1.xpose.msra.mxu0 %v644
    %650 = vmatprep.subr.mxu0 0.0
    %651 = vmatpush1.xpose.msra.mxu0 0.0
    %652 = vmatprep.subr.mxu0 0.0
    %653 = vmatpush1.xpose.msra.mxu0 0.0
    %654 = vmatprep.subr.mxu0 0.0
    %655 = vmatpush1.xpose.msra.mxu0 0.0
    %656 = vmatprep.subr.mxu0 0.0
    %657 = vmatpush1.xpose.msra.mxu0 0.0
    %658 = vmatprep.subr.mxu0 0.0
    %659 = vmatpush1.xpose.msra.mxu0 0.0
    %660 = vmatprep.subr.mxu0 0.0
    %661 = vmatpush1.xpose.msra.mxu0 0.0
    %662 = vmatprep.subr.mxu0 0.0
    %663 = vmatpush1.xpose.msra.mxu0 0.0
    %664 = vmatprep.subr.mxu0 0.0
    %665 = vmatpush1.xpose.msra.mxu0 0.0
    %666 = vmatprep.subr.mxu0 0.0
    %667 = vmatpush1.xpose.msra.mxu0 0.0
    %668 = vmatprep.subr.mxu0 0.0
    %669 = vmatpush1.xpose.msra.mxu0 0.0
    %670 = vmatprep.subr.mxu0 0.0
    %671 = vmatpush1.xpose.msra.mxu0 0.0
    %672 = vmatprep.subr.mxu0 0.0
    %673 = vmatpush1.xpose.msra.mxu0 0.0
    %674 = vmatprep.subr.mxu0 0.0
    %675 = vmatpush1.xpose.msra.mxu0 0.0
    %676 = vmatprep.subr.mxu0 0.0
    %677 = vmatpush1.xpose.msra.mxu0 0.0
    %678 = vmatprep.subr.mxu0 0.0
    %679 = vmatpush1.xpose.msra.mxu0 0.0
    %680 = vmatprep.subr.mxu0 0.0
    %681 = vmatpush1.xpose.msra.mxu0 0.0
    %682 = vmatprep.subr.mxu0 0.0
    %683 = vmatpush1.xpose.msra.mxu0 0.0
    %684 = vmatprep.subr.mxu0 0.0
    %685 = vmatpush1.xpose.msra.mxu0 0.0
    %686 = vmatprep.subr.mxu0 0.0
    %687 = vmatpush1.xpose.msra.mxu0 0.0
    %688 = vmatprep.subr.mxu0 0.0
    %689 = vmatpush1.xpose.msra.mxu0 0.0
    %690 = vmatprep.subr.mxu0 0.0
    %691 = vmatpush1.xpose.msra.mxu0 0.0
    %692 = vmatprep.subr.mxu0 0.0
    %693 = vmatpush1.xpose.msra.mxu0 0.0
    %694 = vmatprep.subr.mxu0 0.0
    %695 = vmatpush1.xpose.msra.mxu0 0.0
    %696 = vmatprep.subr.mxu0 0.0
    %697 = vmatpush1.xpose.msra.mxu0 0.0
    %698 = vmatprep.subr.mxu0 0.0
    %699 = vmatpush1.xpose.msra.mxu0 0.0
    %700 = vmatprep.subr.mxu0 0.0
    %701 = vmatpush1.xpose.msra.mxu0 0.0
    %702 = vmatprep.subr.mxu0 0.0
    %703 = vmatpush1.xpose.msra.mxu0 0.0
    %704 = vmatprep.subr.mxu0 0.0
    %705 = vmatpush1.xpose.msra.mxu0 0.0
    %706 = vmatprep.subr.mxu0 0.0
    %707 = vmatpush1.xpose.msra.mxu0 0.0
    %708 = vmatprep.subr.mxu0 0.0
    %709 = vmatpush1.xpose.msra.mxu0 0.0
    %710 = vmatprep.mubr.f32.mxu0 0.0
    %711 = vmatmul.mubr.f32.gmra.mrb[0].mxu0 %v638
    %v712 = vpop.f32.mrb[0].mxu0
    %v713 = vadd.f32 0.0, %v712
    %v714 = vpop.f32.mrb[0].mxu0
    %715 = vmatprep.mubr.f32.mxu0 0.0
    %716 = vmatmul.mubr.f32.gmra.mrb[0].mxu0 %v640
    %v717 = vpop.f32.mrb[0].mxu0
    %v718 = vadd.f32 0.0, %v717
    %v719 = vpop.f32.mrb[0].mxu0
    %720 = vdwg.mxu0
    %v721 = vsel %vm518, %v713, -inf
    %722 = vmax.xlane.f32.xlu0 %v721
    %v723 = vpop.xlane.xlu0 %722
    %v724 = vsel %vm522, %v718, -inf
    %725 = vmax.xlane.f32.xlu0 %v724
    %v726 = vpop.xlane.xlu0 %725
    %v727 = vsub.f32 %v713, %v723
    %v728 = vsub.f32 %v718, %v726
    %v729 = vmul.f32 %v727, 1.442695
    %v730 = vpow.pop %v729
    %v731 = vmul.f32 %v728, 1.442695
    %v732 = vpow.pop %v731
    %v733 = vsel %vm518, %v730, 0.0
    %734 = vadd.xlane.f32.xlu0 %v733
    %v735 = vpop.xlane.xlu0 %734
    %v736 = vsel %vm522, %v732, 0.0
    %737 = vadd.xlane.f32.xlu0 %v736
    %v738 = vpop.xlane.xlu0 %737
    %v739 = vrcp.pop %v735
    %v740 = vrcp.pop %v738
    %v741 = vmul.f32 %v730, %v739
    %v742 = vmul.f32 %v732, %v740
    %743 = vrot.lane.b32.xlu0 %v411, 56
    %v744 = vpop.permute.xlu0 %743
    %745 = vrot.lane.b32.xlu0 %v416, 56
    %v746 = vpop.permute.xlu0 %745
    %v749 = vsel %vm518, %v741, 0
    %v752 = vsel %vm518, %v742, 0
    %v754 = vsel %vm242, %v746, 0
    %756 = vmatprep.subr.mxu0 0.0
    %757 = vmatpush1.msra.mxu0 %v744
    %758 = vmatprep.subr.mxu0 0.0
    %759 = vmatpush1.msra.mxu0 %v754
    %760 = vmatprep.subr.mxu0 0.0
    %761 = vmatpush1.msra.mxu0 0.0
    %762 = vmatprep.subr.mxu0 0.0
    %763 = vmatpush1.msra.mxu0 0.0
    %764 = vmatprep.subr.mxu0 0.0
    %765 = vmatpush1.msra.mxu0 0.0
    %766 = vmatprep.subr.mxu0 0.0
    %767 = vmatpush1.msra.mxu0 0.0
    %768 = vmatprep.subr.mxu0 0.0
    %769 = vmatpush1.msra.mxu0 0.0
    %770 = vmatprep.subr.mxu0 0.0
    %771 = vmatpush1.msra.mxu0 0.0
    %772 = vmatprep.subr.mxu0 0.0
    %773 = vmatpush1.msra.mxu0 0.0
    %774 = vmatprep.subr.mxu0 0.0
    %775 = vmatpush1.msra.mxu0 0.0
    %776 = vmatprep.subr.mxu0 0.0
    %777 = vmatpush1.msra.mxu0 0.0
    %778 = vmatprep.subr.mxu0 0.0
    %779 = vmatpush1.msra.mxu0 0.0
    %780 = vmatprep.subr.mxu0 0.0
    %781 = vmatpush1.msra.mxu0 0.0
    %782 = vmatprep.subr.mxu0 0.0
    %783 = vmatpush1.msra.mxu0 0.0
    %784 = vmatprep.subr.mxu0 0.0
    %785 = vmatpush1.msra.mxu0 0.0
    %786 = vmatprep.subr.mxu0 0.0
    %787 = vmatpush1.msra.mxu0 0.0
    %788 = vmatprep.subr.mxu0 0.0
    %789 = vmatpush1.msra.mxu0 0.0
    %790 = vmatprep.subr.mxu0 0.0
    %791 = vmatpush1.msra.mxu0 0.0
    %792 = vmatprep.subr.mxu0 0.0
    %793 = vmatpush1.msra.mxu0 0.0
    %794 = vmatprep.subr.mxu0 0.0
    %795 = vmatpush1.msra.mxu0 0.0
    %796 = vmatprep.subr.mxu0 0.0
    %797 = vmatpush1.msra.mxu0 0.0
    %798 = vmatprep.subr.mxu0 0.0
    %799 = vmatpush1.msra.mxu0 0.0
    %800 = vmatprep.subr.mxu0 0.0
    %801 = vmatpush1.msra.mxu0 0.0
    %802 = vmatprep.subr.mxu0 0.0
    %803 = vmatpush1.msra.mxu0 0.0
    %804 = vmatprep.subr.mxu0 0.0
    %805 = vmatpush1.msra.mxu0 0.0
    %806 = vmatprep.subr.mxu0 0.0
    %807 = vmatpush1.msra.mxu0 0.0
    %808 = vmatprep.subr.mxu0 0.0
    %809 = vmatpush1.msra.mxu0 0.0
    %810 = vmatprep.subr.mxu0 0.0
    %811 = vmatpush1.msra.mxu0 0.0
    %812 = vmatprep.subr.mxu0 0.0
    %813 = vmatpush1.msra.mxu0 0.0
    %814 = vmatprep.subr.mxu0 0.0
    %815 = vmatpush1.msra.mxu0 0.0
    %816 = vmatprep.subr.mxu0 0.0
    %817 = vmatpush1.msra.mxu0 0.0
    %818 = vmatprep.subr.mxu0 0.0
    %819 = vmatpush1.msra.mxu0 0.0
    %820 = vmatprep.mubr.f32.mxu0 0.0
    %821 = vmatmul.mubr.f32.gmra.mrb[0].mxu0 %v749
    %v822 = vpop.f32.mrb[0].mxu0
    %v823 = vadd.f32 0.0, %v822
    %v824 = vpop.f32.mrb[0].mxu0
    %825 = vmatprep.mubr.f32.mxu0 0.0
    %826 = vmatmul.mubr.f32.gmra.mrb[0].mxu0 %v752
    %v827 = vpop.f32.mrb[0].mxu0
    %v828 = vadd.f32 0.0, %v827
    %v829 = vpop.f32.mrb[0].mxu0
    %830 = vdwg.mxu0
    %831 = vrot.lane.b32.xlu0 %v424, 112
    %v832 = vpop.permute.xlu0 %831
    %833 = vrot.lane.b32.xlu0 %v425, 112
    %v834 = vpop.permute.xlu0 %833
    %835 = vrot.lane.b32.xlu0 %v411, 80
    %v836 = vpop.permute.xlu0 %835
    %837 = vrot.lane.b32.xlu0 %v416, 80
    %v838 = vpop.permute.xlu0 %837
    %v839 = vsel %vm432, %v832, 0
    %v841 = vsel %vm432, %v834, 0
    %v843 = vsel %vm432, %v836, 0
    %v845 = vsel %vm432, %v838, 0
    %847 = vmatprep.subr.mxu0 0.0
    %848 = vmatpush1.xpose.msra.mxu0 %v843
    %849 = vmatprep.subr.mxu0 0.0
    %850 = vmatpush1.xpose.msra.mxu0 %v845
    %851 = vmatprep.subr.mxu0 0.0
    %852 = vmatpush1.xpose.msra.mxu0 0.0
    %853 = vmatprep.subr.mxu0 0.0
    %854 = vmatpush1.xpose.msra.mxu0 0.0
    %855 = vmatprep.subr.mxu0 0.0
    %856 = vmatpush1.xpose.msra.mxu0 0.0
    %857 = vmatprep.subr.mxu0 0.0
    %858 = vmatpush1.xpose.msra.mxu0 0.0
    %859 = vmatprep.subr.mxu0 0.0
    %860 = vmatpush1.xpose.msra.mxu0 0.0
    %861 = vmatprep.subr.mxu0 0.0
    %862 = vmatpush1.xpose.msra.mxu0 0.0
    %863 = vmatprep.subr.mxu0 0.0
    %864 = vmatpush1.xpose.msra.mxu0 0.0
    %865 = vmatprep.subr.mxu0 0.0
    %866 = vmatpush1.xpose.msra.mxu0 0.0
    %867 = vmatprep.subr.mxu0 0.0
    %868 = vmatpush1.xpose.msra.mxu0 0.0
    %869 = vmatprep.subr.mxu0 0.0
    %870 = vmatpush1.xpose.msra.mxu0 0.0
    %871 = vmatprep.subr.mxu0 0.0
    %872 = vmatpush1.xpose.msra.mxu0 0.0
    %873 = vmatprep.subr.mxu0 0.0
    %874 = vmatpush1.xpose.msra.mxu0 0.0
    %875 = vmatprep.subr.mxu0 0.0
    %876 = vmatpush1.xpose.msra.mxu0 0.0
    %877 = vmatprep.subr.mxu0 0.0
    %878 = vmatpush1.xpose.msra.mxu0 0.0
    %879 = vmatprep.subr.mxu0 0.0
    %880 = vmatpush1.xpose.msra.mxu0 0.0
    %881 = vmatprep.subr.mxu0 0.0
    %882 = vmatpush1.xpose.msra.mxu0 0.0
    %883 = vmatprep.subr.mxu0 0.0
    %884 = vmatpush1.xpose.msra.mxu0 0.0
    %885 = vmatprep.subr.mxu0 0.0
    %886 = vmatpush1.xpose.msra.mxu0 0.0
    %887 = vmatprep.subr.mxu0 0.0
    %888 = vmatpush1.xpose.msra.mxu0 0.0
    %889 = vmatprep.subr.mxu0 0.0
    %890 = vmatpush1.xpose.msra.mxu0 0.0
    %891 = vmatprep.subr.mxu0 0.0
    %892 = vmatpush1.xpose.msra.mxu0 0.0
    %893 = vmatprep.subr.mxu0 0.0
    %894 = vmatpush1.xpose.msra.mxu0 0.0
    %895 = vmatprep.subr.mxu0 0.0
    %896 = vmatpush1.xpose.msra.mxu0 0.0
    %897 = vmatprep.subr.mxu0 0.0
    %898 = vmatpush1.xpose.msra.mxu0 0.0
    %899 = vmatprep.subr.mxu0 0.0
    %900 = vmatpush1.xpose.msra.mxu0 0.0
    %901 = vmatprep.subr.mxu0 0.0
    %902 = vmatpush1.xpose.msra.mxu0 0.0
    %903 = vmatprep.subr.mxu0 0.0
    %904 = vmatpush1.xpose.msra.mxu0 0.0
    %905 = vmatprep.subr.mxu0 0.0
    %906 = vmatpush1.xpose.msra.mxu0 0.0
    %907 = vmatprep.subr.mxu0 0.0
    %908 = vmatpush1.xpose.msra.mxu0 0.0
    %909 = vmatprep.subr.mxu0 0.0
    %910 = vmatpush1.xpose.msra.mxu0 0.0
    %911 = vmatprep.mubr.f32.mxu0 0.0
    %912 = vmatmul.mubr.f32.gmra.mrb[0].mxu0 %v839
    %v913 = vpop.f32.mrb[0].mxu0
    %v914 = vadd.f32 0.0, %v913
    %v915 = vpop.f32.mrb[0].mxu0
    %916 = vmatprep.mubr.f32.mxu0 0.0
    %917 = vmatmul.mubr.f32.gmra.mrb[0].mxu0 %v841
    %v918 = vpop.f32.mrb[0].mxu0
    %v919 = vadd.f32 0.0, %v918
    %v920 = vpop.f32.mrb[0].mxu0
    %921 = vdwg.mxu0
    %v922 = vsel %vm518, %v914, -inf
    %923 = vmax.xlane.f32.xlu0 %v922
    %v924 = vpop.xlane.xlu0 %923
    %v925 = vsel %vm522, %v919, -inf
    %926 = vmax.xlane.f32.xlu0 %v925
    %v927 = vpop.xlane.xlu0 %926
    %v928 = vsub.f32 %v914, %v924
    %v929 = vsub.f32 %v919, %v927
    %v930 = vmul.f32 %v928, 1.442695
    %v931 = vpow.pop %v930
    %v932 = vmul.f32 %v929, 1.442695
    %v933 = vpow.pop %v932
    %v934 = vsel %vm518, %v931, 0.0
    %935 = vadd.xlane.f32.xlu0 %v934
    %v936 = vpop.xlane.xlu0 %935
    %v937 = vsel %vm522, %v933, 0.0
    %938 = vadd.xlane.f32.xlu0 %v937
    %v939 = vpop.xlane.xlu0 %938
    %v940 = vrcp.pop %v936
    %v941 = vrcp.pop %v939
    %v942 = vmul.f32 %v931, %v940
    %v943 = vmul.f32 %v933, %v941
    %944 = vrot.lane.b32.xlu0 %v411, 48
    %v945 = vpop.permute.xlu0 %944
    %946 = vrot.lane.b32.xlu0 %v416, 48
    %v947 = vpop.permute.xlu0 %946
    %v950 = vsel %vm518, %v942, 0
    %v953 = vsel %vm518, %v943, 0
    %v955 = vsel %vm242, %v947, 0
    %957 = vmatprep.subr.mxu0 0.0
    %958 = vmatpush1.msra.mxu0 %v945
    %959 = vmatprep.subr.mxu0 0.0
    %960 = vmatpush1.msra.mxu0 %v955
    %961 = vmatprep.subr.mxu0 0.0
    %962 = vmatpush1.msra.mxu0 0.0
    %963 = vmatprep.subr.mxu0 0.0
    %964 = vmatpush1.msra.mxu0 0.0
    %965 = vmatprep.subr.mxu0 0.0
    %966 = vmatpush1.msra.mxu0 0.0
    %967 = vmatprep.subr.mxu0 0.0
    %968 = vmatpush1.msra.mxu0 0.0
    %969 = vmatprep.subr.mxu0 0.0
    %970 = vmatpush1.msra.mxu0 0.0
    %971 = vmatprep.subr.mxu0 0.0
    %972 = vmatpush1.msra.mxu0 0.0
    %973 = vmatprep.subr.mxu0 0.0
    %974 = vmatpush1.msra.mxu0 0.0
    %975 = vmatprep.subr.mxu0 0.0
    %976 = vmatpush1.msra.mxu0 0.0
    %977 = vmatprep.subr.mxu0 0.0
    %978 = vmatpush1.msra.mxu0 0.0
    %979 = vmatprep.subr.mxu0 0.0
    %980 = vmatpush1.msra.mxu0 0.0
    %981 = vmatprep.subr.mxu0 0.0
    %982 = vmatpush1.msra.mxu0 0.0
    %983 = vmatprep.subr.mxu0 0.0
    %984 = vmatpush1.msra.mxu0 0.0
    %985 = vmatprep.subr.mxu0 0.0
    %986 = vmatpush1.msra.mxu0 0.0
    %987 = vmatprep.subr.mxu0 0.0
    %988 = vmatpush1.msra.mxu0 0.0
    %989 = vmatprep.subr.mxu0 0.0
    %990 = vmatpush1.msra.mxu0 0.0
    %991 = vmatprep.subr.mxu0 0.0
    %992 = vmatpush1.msra.mxu0 0.0
    %993 = vmatprep.subr.mxu0 0.0
    %994 = vmatpush1.msra.mxu0 0.0
    %995 = vmatprep.subr.mxu0 0.0
    %996 = vmatpush1.msra.mxu0 0.0
    %997 = vmatprep.subr.mxu0 0.0
    %998 = vmatpush1.msra.mxu0 0.0
    %999 = vmatprep.subr.mxu0 0.0
    %1000 = vmatpush1.msra.mxu0 0.0
    %1001 = vmatprep.subr.mxu0 0.0
    %1002 = vmatpush1.msra.mxu0 0.0
    %1003 = vmatprep.subr.mxu0 0.0
    %1004 = vmatpush1.msra.mxu0 0.0
    %1005 = vmatprep.subr.mxu0 0.0
    %1006 = vmatpush1.msra.mxu0 0.0
    %1007 = vmatprep.subr.mxu0 0.0
    %1008 = vmatpush1.msra.mxu0 0.0
    %1009 = vmatprep.subr.mxu0 0.0
    %1010 = vmatpush1.msra.mxu0 0.0
    %1011 = vmatprep.subr.mxu0 0.0
    %1012 = vmatpush1.msra.mxu0 0.0
    %1013 = vmatprep.subr.mxu0 0.0
    %1014 = vmatpush1.msra.mxu0 0.0
    %1015 = vmatprep.subr.mxu0 0.0
    %1016 = vmatpush1.msra.mxu0 0.0
    %1017 = vmatprep.subr.mxu0 0.0
    %1018 = vmatpush1.msra.mxu0 0.0
    %1019 = vmatprep.subr.mxu0 0.0
    %1020 = vmatpush1.msra.mxu0 0.0
    %1021 = vmatprep.mubr.f32.mxu0 0.0
    %1022 = vmatmul.mubr.f32.gmra.mrb[0].mxu0 %v950
    %v1023 = vpop.f32.mrb[0].mxu0
    %v1024 = vadd.f32 0.0, %v1023
    %v1025 = vpop.f32.mrb[0].mxu0
    %1026 = vmatprep.mubr.f32.mxu0 0.0
    %1027 = vmatmul.mubr.f32.gmra.mrb[0].mxu0 %v953
    %v1028 = vpop.f32.mrb[0].mxu0
    %v1029 = vadd.f32 0.0, %v1028
    %v1030 = vpop.f32.mrb[0].mxu0
    %1031 = vdwg.mxu0
    %1032 = vrot.lane.b32.xlu0 %v424, 104
    %v1033 = vpop.permute.xlu0 %1032
    %1034 = vrot.lane.b32.xlu0 %v425, 104
    %v1035 = vpop.permute.xlu0 %1034
    %1036 = vrot.lane.b32.xlu0 %v411, 72
    %v1037 = vpop.permute.xlu0 %1036
    %1038 = vrot.lane.b32.xlu0 %v416, 72
    %v1039 = vpop.permute.xlu0 %1038
    %v1040 = vsel %vm432, %v1033, 0
    %v1042 = vsel %vm432, %v1035, 0
    %v1044 = vsel %vm432, %v1037, 0
    %v1046 = vsel %vm432, %v1039, 0
    %1048 = vmatprep.subr.mxu0 0.0
    %1049 = vmatpush1.xpose.msra.mxu0 %v1044
    %1050 = vmatprep.subr.mxu0 0.0
    %1051 = vmatpush1.xpose.msra.mxu0 %v1046
    %1052 = vmatprep.subr.mxu0 0.0
    %1053 = vmatpush1.xpose.msra.mxu0 0.0
    %1054 = vmatprep.subr.mxu0 0.0
    %1055 = vmatpush1.xpose.msra.mxu0 0.0
    %1056 = vmatprep.subr.mxu0 0.0
    %1057 = vmatpush1.xpose.msra.mxu0 0.0
    %1058 = vmatprep.subr.mxu0 0.0
    %1059 = vmatpush1.xpose.msra.mxu0 0.0
    %1060 = vmatprep.subr.mxu0 0.0
    %1061 = vmatpush1.xpose.msra.mxu0 0.0
    %1062 = vmatprep.subr.mxu0 0.0
    %1063 = vmatpush1.xpose.msra.mxu0 0.0
    %1064 = vmatprep.subr.mxu0 0.0
    %1065 = vmatpush1.xpose.msra.mxu0 0.0
    %1066 = vmatprep.subr.mxu0 0.0
    %1067 = vmatpush1.xpose.msra.mxu0 0.0
    %1068 = vmatprep.subr.mxu0 0.0
    %1069 = vmatpush1.xpose.msra.mxu0 0.0
    %1070 = vmatprep.subr.mxu0 0.0
    %1071 = vmatpush1.xpose.msra.mxu0 0.0
    %1072 = vmatprep.subr.mxu0 0.0
    %1073 = vmatpush1.xpose.msra.mxu0 0.0
    %1074 = vmatprep.subr.mxu0 0.0
    %1075 = vmatpush1.xpose.msra.mxu0 0.0
    %1076 = vmatprep.subr.mxu0 0.0
    %1077 = vmatpush1.xpose.msra.mxu0 0.0
    %1078 = vmatprep.subr.mxu0 0.0
    %1079 = vmatpush1.xpose.msra.mxu0 0.0
    %1080 = vmatprep.subr.mxu0 0.0
    %1081 = vmatpush1.xpose.msra.mxu0 0.0
    %1082 = vmatprep.subr.mxu0 0.0
    %1083 = vmatpush1.xpose.msra.mxu0 0.0
    %1084 = vmatprep.subr.mxu0 0.0
    %1085 = vmatpush1.xpose.msra.mxu0 0.0
    %1086 = vmatprep.subr.mxu0 0.0
    %1087 = vmatpush1.xpose.msra.mxu0 0.0
    %1088 = vmatprep.subr.mxu0 0.0
    %1089 = vmatpush1.xpose.msra.mxu0 0.0
    %1090 = vmatprep.subr.mxu0 0.0
    %1091 = vmatpush1.xpose.msra.mxu0 0.0
    %1092 = vmatprep.subr.mxu0 0.0
    %1093 = vmatpush1.xpose.msra.mxu0 0.0
    %1094 = vmatprep.subr.mxu0 0.0
    %1095 = vmatpush1.xpose.msra.mxu0 0.0
    %1096 = vmatprep.subr.mxu0 0.0
    %1097 = vmatpush1.xpose.msra.mxu0 0.0
    %1098 = vmatprep.subr.mxu0 0.0
    %1099 = vmatpush1.xpose.msra.mxu0 0.0
    %1100 = vmatprep.subr.mxu0 0.0
    %1101 = vmatpush1.xpose.msra.mxu0 0.0
    %1102 = vmatprep.subr.mxu0 0.0
    %1103 = vmatpush1.xpose.msra.mxu0 0.0
    %1104 = vmatprep.subr.mxu0 0.0
    %1105 = vmatpush1.xpose.msra.mxu0 0.0
    %1106 = vmatprep.subr.mxu0 0.0
    %1107 = vmatpush1.xpose.msra.mxu0 0.0
    %1108 = vmatprep.subr.mxu0 0.0
    %1109 = vmatpush1.xpose.msra.mxu0 0.0
    %1110 = vmatprep.subr.mxu0 0.0
    %1111 = vmatpush1.xpose.msra.mxu0 0.0
    %1112 = vmatprep.mubr.f32.mxu0 0.0
    %1113 = vmatmul.mubr.f32.gmra.mrb[0].mxu0 %v1040
    %v1114 = vpop.f32.mrb[0].mxu0
    %v1115 = vadd.f32 0.0, %v1114
    %v1116 = vpop.f32.mrb[0].mxu0
    %1117 = vmatprep.mubr.f32.mxu0 0.0
    %1118 = vmatmul.mubr.f32.gmra.mrb[0].mxu0 %v1042
    %v1119 = vpop.f32.mrb[0].mxu0
    %v1120 = vadd.f32 0.0, %v1119
    %v1121 = vpop.f32.mrb[0].mxu0
    %1122 = vdwg.mxu0
    %v1123 = vsel %vm518, %v1115, -inf
    %1124 = vmax.xlane.f32.xlu0 %v1123
    %v1125 = vpop.xlane.xlu0 %1124
    %v1126 = vsel %vm522, %v1120, -inf
    %1127 = vmax.xlane.f32.xlu0 %v1126
    %v1128 = vpop.xlane.xlu0 %1127
    %v1129 = vsub.f32 %v1115, %v1125
    %v1130 = vsub.f32 %v1120, %v1128
    %v1131 = vmul.f32 %v1129, 1.442695
    %v1132 = vpow.pop %v1131
    %v1133 = vmul.f32 %v1130, 1.442695
    %v1134 = vpow.pop %v1133
    %v1135 = vsel %vm518, %v1132, 0.0
    %1136 = vadd.xlane.f32.xlu0 %v1135
    %v1137 = vpop.xlane.xlu0 %1136
    %v1138 = vsel %vm522, %v1134, 0.0
    %1139 = vadd.xlane.f32.xlu0 %v1138
    %v1140 = vpop.xlane.xlu0 %1139
    %v1141 = vrcp.pop %v1137
    %v1142 = vrcp.pop %v1140
    %v1143 = vmul.f32 %v1132, %v1141
    %v1144 = vmul.f32 %v1134, %v1142
    %1145 = vrot.lane.b32.xlu0 %v411, 40
    %v1146 = vpop.permute.xlu0 %1145
    %1147 = vrot.lane.b32.xlu0 %v416, 40
    %v1148 = vpop.permute.xlu0 %1147
    %v1151 = vsel %vm518, %v1143, 0
    %v1154 = vsel %vm518, %v1144, 0
    %v1156 = vsel %vm242, %v1148, 0
    %1158 = vmatprep.subr.mxu0 0.0
    %1159 = vmatpush1.msra.mxu0 %v1146
    %1160 = vmatprep.subr.mxu0 0.0
    %1161 = vmatpush1.msra.mxu0 %v1156
    %1162 = vmatprep.subr.mxu0 0.0
    %1163 = vmatpush1.msra.mxu0 0.0
    %1164 = vmatprep.subr.mxu0 0.0
    %1165 = vmatpush1.msra.mxu0 0.0
    %1166 = vmatprep.subr.mxu0 0.0
    %1167 = vmatpush1.msra.mxu0 0.0
    %1168 = vmatprep.subr.mxu0 0.0
    %1169 = vmatpush1.msra.mxu0 0.0
    %1170 = vmatprep.subr.mxu0 0.0
    %1171 = vmatpush1.msra.mxu0 0.0
    %1172 = vmatprep.subr.mxu0 0.0
    %1173 = vmatpush1.msra.mxu0 0.0
    %1174 = vmatprep.subr.mxu0 0.0
    %1175 = vmatpush1.msra.mxu0 0.0
    %1176 = vmatprep.subr.mxu0 0.0
    %1177 = vmatpush1.msra.mxu0 0.0
    %1178 = vmatprep.subr.mxu0 0.0
    %1179 = vmatpush1.msra.mxu0 0.0
    %1180 = vmatprep.subr.mxu0 0.0
    %1181 = vmatpush1.msra.mxu0 0.0
    %1182 = vmatprep.subr.mxu0 0.0
    %1183 = vmatpush1.msra.mxu0 0.0
    %1184 = vmatprep.subr.mxu0 0.0
    %1185 = vmatpush1.msra.mxu0 0.0
    %1186 = vmatprep.subr.mxu0 0.0
    %1187 = vmatpush1.msra.mxu0 0.0
    %1188 = vmatprep.subr.mxu0 0.0
    %1189 = vmatpush1.msra.mxu0 0.0
    %1190 = vmatprep.subr.mxu0 0.0
    %1191 = vmatpush1.msra.mxu0 0.0
    %1192 = vmatprep.subr.mxu0 0.0
    %1193 = vmatpush1.msra.mxu0 0.0
    %1194 = vmatprep.subr.mxu0 0.0
    %1195 = vmatpush1.msra.mxu0 0.0
    %1196 = vmatprep.subr.mxu0 0.0
    %1197 = vmatpush1.msra.mxu0 0.0
    %1198 = vmatprep.subr.mxu0 0.0
    %1199 = vmatpush1.msra.mxu0 0.0
    %1200 = vmatprep.subr.mxu0 0.0
    %1201 = vmatpush1.msra.mxu0 0.0
    %1202 = vmatprep.subr.mxu0 0.0
    %1203 = vmatpush1.msra.mxu0 0.0
    %1204 = vmatprep.subr.mxu0 0.0
    %1205 = vmatpush1.msra.mxu0 0.0
    %1206 = vmatprep.subr.mxu0 0.0
    %1207 = vmatpush1.msra.mxu0 0.0
    %1208 = vmatprep.subr.mxu0 0.0
    %1209 = vmatpush1.msra.mxu0 0.0
    %1210 = vmatprep.subr.mxu0 0.0
    %1211 = vmatpush1.msra.mxu0 0.0
    %1212 = vmatprep.subr.mxu0 0.0
    %1213 = vmatpush1.msra.mxu0 0.0
    %1214 = vmatprep.subr.mxu0 0.0
    %1215 = vmatpush1.msra.mxu0 0.0
    %1216 = vmatprep.subr.mxu0 0.0
    %1217 = vmatpush1.msra.mxu0 0.0
    %1218 = vmatprep.subr.mxu0 0.0
    %1219 = vmatpush1.msra.mxu0 0.0
    %1220 = vmatprep.subr.mxu0 0.0
    %1221 = vmatpush1.msra.mxu0 0.0
    %1222 = vmatprep.mubr.f32.mxu0 0.0
    %1223 = vmatmul.mubr.f32.gmra.mrb[0].mxu0 %v1151
    %v1224 = vpop.f32.mrb[0].mxu0
    %v1225 = vadd.f32 0.0, %v1224
    %v1226 = vpop.f32.mrb[0].mxu0
    %1227 = vmatprep.mubr.f32.mxu0 0.0
    %1228 = vmatmul.mubr.f32.gmra.mrb[0].mxu0 %v1154
    %v1229 = vpop.f32.mrb[0].mxu0
    %v1230 = vadd.f32 0.0, %v1229
    %v1231 = vpop.f32.mrb[0].mxu0
    %1232 = vdwg.mxu0
    %1235 = vrot.lane.b32.xlu0 %v823, 8
    %v1236 = vpop.permute.xlu0 %1235
    %1237 = vrot.lane.b32.xlu0 %v828, 8
    %v1238 = vpop.permute.xlu0 %1237
    %1243 = vrot.lane.b32.xlu0 %v1024, 16
    %v1244 = vpop.permute.xlu0 %1243
    %1245 = vrot.lane.b32.xlu0 %v1029, 16
    %v1246 = vpop.permute.xlu0 %1245
    %1251 = vrot.lane.b32.xlu0 %v1225, 24
    %v1252 = vpop.permute.xlu0 %1251
    %1253 = vrot.lane.b32.xlu0 %v1230, 24
    %v1254 = vpop.permute.xlu0 %1253
    %v1257 = vsel %vm432, %v622, %v1236
    %v1258 = vsel %vm432, %v627, %v1238
    %vm1259 = vcmask 130048
    %v1260 = vsel %vm1259, %v1257, %v1244
    %v1261 = vsel %vm1259, %v1258, %v1246
    %vm1262 = vcmask 195584
    %v1263 = vsel %vm1262, %v1260, %v1252
    %v1264 = vsel %vm1262, %v1261, %v1254
    %v1265 = vmul.f32 %v421, 0.35355338
    %vm1267 = vcmask 1046528
    %v1268 = vrot.slane %v425, 1
    %v1269 = vrot.slane %v1265, 1
    %v1270 = vsel %vm1267, %v1268, %v1269
    %v1272 = vrot.slane %v416, 1
    %v1273 = vrot.slane %v421, 1
    %v1274 = vsel %vm1267, %v1272, %v1273
    %1275 = vrot.lane.b32.xlu0 %v1274, 96
    %v1276 = vpop.permute.xlu0 %1275
    %1277 = vrot.lane.b32.xlu0 %v1273, 96
    %v1278 = vpop.permute.xlu0 %1277
    %v1279 = vsel %vm432, %v1270, 0
    %v1281 = vsel %vm432, %v1269, 0
    %v1283 = vsel %vm432, %v1276, 0
    %v1285 = vsel %vm432, %v1278, 0
    %1287 = vmatprep.subr.mxu0 0.0
    %1288 = vmatpush1.xpose.msra.mxu0 %v1283
    %1289 = vmatprep.subr.mxu0 0.0
    %1290 = vmatpush1.xpose.msra.mxu0 %v1285
    %1291 = vmatprep.subr.mxu0 0.0
    %1292 = vmatpush1.xpose.msra.mxu0 0.0
    %1293 = vmatprep.subr.mxu0 0.0
    %1294 = vmatpush1.xpose.msra.mxu0 0.0
    %1295 = vmatprep.subr.mxu0 0.0
    %1296 = vmatpush1.xpose.msra.mxu0 0.0
    %1297 = vmatprep.subr.mxu0 0.0
    %1298 = vmatpush1.xpose.msra.mxu0 0.0
    %1299 = vmatprep.subr.mxu0 0.0
    %1300 = vmatpush1.xpose.msra.mxu0 0.0
    %1301 = vmatprep.subr.mxu0 0.0
    %1302 = vmatpush1.xpose.msra.mxu0 0.0
    %1303 = vmatprep.subr.mxu0 0.0
    %1304 = vmatpush1.xpose.msra.mxu0 0.0
    %1305 = vmatprep.subr.mxu0 0.0
    %1306 = vmatpush1.xpose.msra.mxu0 0.0
    %1307 = vmatprep.subr.mxu0 0.0
    %1308 = vmatpush1.xpose.msra.mxu0 0.0
    %1309 = vmatprep.subr.mxu0 0.0
    %1310 = vmatpush1.xpose.msra.mxu0 0.0
    %1311 = vmatprep.subr.mxu0 0.0
    %1312 = vmatpush1.xpose.msra.mxu0 0.0
    %1313 = vmatprep.subr.mxu0 0.0
    %1314 = vmatpush1.xpose.msra.mxu0 0.0
    %1315 = vmatprep.subr.mxu0 0.0
    %1316 = vmatpush1.xpose.msra.mxu0 0.0
    %1317 = vmatprep.subr.mxu0 0.0
    %1318 = vmatpush1.xpose.msra.mxu0 0.0
    %1319 = vmatprep.subr.mxu0 0.0
    %1320 = vmatpush1.xpose.msra.mxu0 0.0
    %1321 = vmatprep.subr.mxu0 0.0
    %1322 = vmatpush1.xpose.msra.mxu0 0.0
    %1323 = vmatprep.subr.mxu0 0.0
    %1324 = vmatpush1.xpose.msra.mxu0 0.0
    %1325 = vmatprep.subr.mxu0 0.0
    %1326 = vmatpush1.xpose.msra.mxu0 0.0
    %1327 = vmatprep.subr.mxu0 0.0
    %1328 = vmatpush1.xpose.msra.mxu0 0.0
    %1329 = vmatprep.subr.mxu0 0.0
    %1330 = vmatpush1.xpose.msra.mxu0 0.0
    %1331 = vmatprep.subr.mxu0 0.0
    %1332 = vmatpush1.xpose.msra.mxu0 0.0
    %1333 = vmatprep.subr.mxu0 0.0
    %1334 = vmatpush1.xpose.msra.mxu0 0.0
    %1335 = vmatprep.subr.mxu0 0.0
    %1336 = vmatpush1.xpose.msra.mxu0 0.0
    %1337 = vmatprep.subr.mxu0 0.0
    %1338 = vmatpush1.xpose.msra.mxu0 0.0
    %1339 = vmatprep.subr.mxu0 0.0
    %1340 = vmatpush1.xpose.msra.mxu0 0.0
    %1341 = vmatprep.subr.mxu0 0.0
    %1342 = vmatpush1.xpose.msra.mxu0 0.0
    %1343 = vmatprep.subr.mxu0 0.0
    %1344 = vmatpush1.xpose.msra.mxu0 0.0
    %1345 = vmatprep.subr.mxu0 0.0
    %1346 = vmatpush1.xpose.msra.mxu0 0.0
    %1347 = vmatprep.subr.mxu0 0.0
    %1348 = vmatpush1.xpose.msra.mxu0 0.0
    %1349 = vmatprep.subr.mxu0 0.0
    %1350 = vmatpush1.xpose.msra.mxu0 0.0
    %1351 = vmatprep.mubr.f32.mxu0 0.0
    %1352 = vmatmul.mubr.f32.gmra.mrb[0].mxu0 %v1279
    %v1353 = vpop.f32.mrb[0].mxu0
    %v1354 = vadd.f32 0.0, %v1353
    %v1355 = vpop.f32.mrb[0].mxu0
    %1356 = vmatprep.mubr.f32.mxu0 0.0
    %1357 = vmatmul.mubr.f32.gmra.mrb[0].mxu0 %v1281
    %v1358 = vpop.f32.mrb[0].mxu0
    %v1359 = vadd.f32 0.0, %v1358
    %v1360 = vpop.f32.mrb[0].mxu0
    %1361 = vdwg.mxu0
    %v1362 = vsel %vm518, %v1354, -inf
    %1363 = vmax.xlane.f32.xlu0 %v1362
    %v1364 = vpop.xlane.xlu0 %1363
    %v1365 = vsel %vm522, %v1359, -inf
    %1366 = vmax.xlane.f32.xlu0 %v1365
    %v1367 = vpop.xlane.xlu0 %1366
    %v1368 = vsub.f32 %v1354, %v1364
    %v1369 = vsub.f32 %v1359, %v1367
    %v1370 = vmul.f32 %v1368, 1.442695
    %v1371 = vpow.pop %v1370
    %v1372 = vmul.f32 %v1369, 1.442695
    %v1373 = vpow.pop %v1372
    %v1374 = vsel %vm518, %v1371, 0.0
    %1375 = vadd.xlane.f32.xlu0 %v1374
    %v1376 = vpop.xlane.xlu0 %1375
    %v1377 = vsel %vm522, %v1373, 0.0
    %1378 = vadd.xlane.f32.xlu0 %v1377
    %v1379 = vpop.xlane.xlu0 %1378
    %v1380 = vrcp.pop %v1376
    %v1381 = vrcp.pop %v1379
    %v1382 = vmul.f32 %v1371, %v1380
    %v1383 = vmul.f32 %v1373, %v1381
    %1384 = vrot.lane.b32.xlu0 %v1274, 64
    %v1385 = vpop.permute.xlu0 %1384
    %1386 = vrot.lane.b32.xlu0 %v1273, 64
    %v1387 = vpop.permute.xlu0 %1386
    %v1390 = vsel %vm518, %v1382, 0
    %v1393 = vsel %vm518, %v1383, 0
    %v1395 = vsel %vm242, %v1387, 0
    %1397 = vmatprep.subr.mxu0 0.0
    %1398 = vmatpush1.msra.mxu0 %v1385
    %1399 = vmatprep.subr.mxu0 0.0
    %1400 = vmatpush1.msra.mxu0 %v1395
    %1401 = vmatprep.subr.mxu0 0.0
    %1402 = vmatpush1.msra.mxu0 0.0
    %1403 = vmatprep.subr.mxu0 0.0
    %1404 = vmatpush1.msra.mxu0 0.0
    %1405 = vmatprep.subr.mxu0 0.0
    %1406 = vmatpush1.msra.mxu0 0.0
    %1407 = vmatprep.subr.mxu0 0.0
    %1408 = vmatpush1.msra.mxu0 0.0
    %1409 = vmatprep.subr.mxu0 0.0
    %1410 = vmatpush1.msra.mxu0 0.0
    %1411 = vmatprep.subr.mxu0 0.0
    %1412 = vmatpush1.msra.mxu0 0.0
    %1413 = vmatprep.subr.mxu0 0.0
    %1414 = vmatpush1.msra.mxu0 0.0
    %1415 = vmatprep.subr.mxu0 0.0
    %1416 = vmatpush1.msra.mxu0 0.0
    %1417 = vmatprep.subr.mxu0 0.0
    %1418 = vmatpush1.msra.mxu0 0.0
    %1419 = vmatprep.subr.mxu0 0.0
    %1420 = vmatpush1.msra.mxu0 0.0
    %1421 = vmatprep.subr.mxu0 0.0
    %1422 = vmatpush1.msra.mxu0 0.0
    %1423 = vmatprep.subr.mxu0 0.0
    %1424 = vmatpush1.msra.mxu0 0.0
    %1425 = vmatprep.subr.mxu0 0.0
    %1426 = vmatpush1.msra.mxu0 0.0
    %1427 = vmatprep.subr.mxu0 0.0
    %1428 = vmatpush1.msra.mxu0 0.0
    %1429 = vmatprep.subr.mxu0 0.0
    %1430 = vmatpush1.msra.mxu0 0.0
    %1431 = vmatprep.subr.mxu0 0.0
    %1432 = vmatpush1.msra.mxu0 0.0
    %1433 = vmatprep.subr.mxu0 0.0
    %1434 = vmatpush1.msra.mxu0 0.0
    %1435 = vmatprep.subr.mxu0 0.0
    %1436 = vmatpush1.msra.mxu0 0.0
    %1437 = vmatprep.subr.mxu0 0.0
    %1438 = vmatpush1.msra.mxu0 0.0
    %1439 = vmatprep.subr.mxu0 0.0
    %1440 = vmatpush1.msra.mxu0 0.0
    %1441 = vmatprep.subr.mxu0 0.0
    %1442 = vmatpush1.msra.mxu0 0.0
    %1443 = vmatprep.subr.mxu0 0.0
    %1444 = vmatpush1.msra.mxu0 0.0
    %1445 = vmatprep.subr.mxu0 0.0
    %1446 = vmatpush1.msra.mxu0 0.0
    %1447 = vmatprep.subr.mxu0 0.0
    %1448 = vmatpush1.msra.mxu0 0.0
    %1449 = vmatprep.subr.mxu0 0.0
    %1450 = vmatpush1.msra.mxu0 0.0
    %1451 = vmatprep.subr.mxu0 0.0
    %1452 = vmatpush1.msra.mxu0 0.0
    %1453 = vmatprep.subr.mxu0 0.0
    %1454 = vmatpush1.msra.mxu0 0.0
    %1455 = vmatprep.subr.mxu0 0.0
    %1456 = vmatpush1.msra.mxu0 0.0
    %1457 = vmatprep.subr.mxu0 0.0
    %1458 = vmatpush1.msra.mxu0 0.0
    %1459 = vmatprep.subr.mxu0 0.0
    %1460 = vmatpush1.msra.mxu0 0.0
    %1461 = vmatprep.mubr.f32.mxu0 0.0
    %1462 = vmatmul.mubr.f32.gmra.mrb[0].mxu0 %v1390
    %v1463 = vpop.f32.mrb[0].mxu0
    %v1464 = vadd.f32 0.0, %v1463
    %v1465 = vpop.f32.mrb[0].mxu0
    %1466 = vmatprep.mubr.f32.mxu0 0.0
    %1467 = vmatmul.mubr.f32.gmra.mrb[0].mxu0 %v1393
    %v1468 = vpop.f32.mrb[0].mxu0
    %v1469 = vadd.f32 0.0, %v1468
    %v1470 = vpop.f32.mrb[0].mxu0
    %1471 = vdwg.mxu0
    %1472 = vrot.lane.b32.xlu0 %v1270, 120
    %v1473 = vpop.permute.xlu0 %1472
    %1474 = vrot.lane.b32.xlu0 %v1269, 120
    %v1475 = vpop.permute.xlu0 %1474
    %1476 = vrot.lane.b32.xlu0 %v1274, 88
    %v1477 = vpop.permute.xlu0 %1476
    %1478 = vrot.lane.b32.xlu0 %v1273, 88
    %v1479 = vpop.permute.xlu0 %1478
    %v1480 = vsel %vm432, %v1473, 0
    %v1482 = vsel %vm432, %v1475, 0
    %v1484 = vsel %vm432, %v1477, 0
    %v1486 = vsel %vm432, %v1479, 0
    %1488 = vmatprep.subr.mxu0 0.0
    %1489 = vmatpush1.xpose.msra.mxu0 %v1484
    %1490 = vmatprep.subr.mxu0 0.0
    %1491 = vmatpush1.xpose.msra.mxu0 %v1486
    %1492 = vmatprep.subr.mxu0 0.0
    %1493 = vmatpush1.xpose.msra.mxu0 0.0
    %1494 = vmatprep.subr.mxu0 0.0
    %1495 = vmatpush1.xpose.msra.mxu0 0.0
    %1496 = vmatprep.subr.mxu0 0.0
    %1497 = vmatpush1.xpose.msra.mxu0 0.0
    %1498 = vmatprep.subr.mxu0 0.0
    %1499 = vmatpush1.xpose.msra.mxu0 0.0
    %1500 = vmatprep.subr.mxu0 0.0
    %1501 = vmatpush1.xpose.msra.mxu0 0.0
    %1502 = vmatprep.subr.mxu0 0.0
    %1503 = vmatpush1.xpose.msra.mxu0 0.0
    %1504 = vmatprep.subr.mxu0 0.0
    %1505 = vmatpush1.xpose.msra.mxu0 0.0
    %1506 = vmatprep.subr.mxu0 0.0
    %1507 = vmatpush1.xpose.msra.mxu0 0.0
    %1508 = vmatprep.subr.mxu0 0.0
    %1509 = vmatpush1.xpose.msra.mxu0 0.0
    %1510 = vmatprep.subr.mxu0 0.0
    %1511 = vmatpush1.xpose.msra.mxu0 0.0
    %1512 = vmatprep.subr.mxu0 0.0
    %1513 = vmatpush1.xpose.msra.mxu0 0.0
    %1514 = vmatprep.subr.mxu0 0.0
    %1515 = vmatpush1.xpose.msra.mxu0 0.0
    %1516 = vmatprep.subr.mxu0 0.0
    %1517 = vmatpush1.xpose.msra.mxu0 0.0
    %1518 = vmatprep.subr.mxu0 0.0
    %1519 = vmatpush1.xpose.msra.mxu0 0.0
    %1520 = vmatprep.subr.mxu0 0.0
    %1521 = vmatpush1.xpose.msra.mxu0 0.0
    %1522 = vmatprep.subr.mxu0 0.0
    %1523 = vmatpush1.xpose.msra.mxu0 0.0
    %1524 = vmatprep.subr.mxu0 0.0
    %1525 = vmatpush1.xpose.msra.mxu0 0.0
    %1526 = vmatprep.subr.mxu0 0.0
    %1527 = vmatpush1.xpose.msra.mxu0 0.0
    %1528 = vmatprep.subr.mxu0 0.0
    %1529 = vmatpush1.xpose.msra.mxu0 0.0
    %1530 = vmatprep.subr.mxu0 0.0
    %1531 = vmatpush1.xpose.msra.mxu0 0.0
    %1532 = vmatprep.subr.mxu0 0.0
    %1533 = vmatpush1.xpose.msra.mxu0 0.0
    %1534 = vmatprep.subr.mxu0 0.0
    %1535 = vmatpush1.xpose.msra.mxu0 0.0
    %1536 = vmatprep.subr.mxu0 0.0
    %1537 = vmatpush1.xpose.msra.mxu0 0.0
    %1538 = vmatprep.subr.mxu0 0.0
    %1539 = vmatpush1.xpose.msra.mxu0 0.0
    %1540 = vmatprep.subr.mxu0 0.0
    %1541 = vmatpush1.xpose.msra.mxu0 0.0
    %1542 = vmatprep.subr.mxu0 0.0
    %1543 = vmatpush1.xpose.msra.mxu0 0.0
    %1544 = vmatprep.subr.mxu0 0.0
    %1545 = vmatpush1.xpose.msra.mxu0 0.0
    %1546 = vmatprep.subr.mxu0 0.0
    %1547 = vmatpush1.xpose.msra.mxu0 0.0
    %1548 = vmatprep.subr.mxu0 0.0
    %1549 = vmatpush1.xpose.msra.mxu0 0.0
    %1550 = vmatprep.subr.mxu0 0.0
    %1551 = vmatpush1.xpose.msra.mxu0 0.0
    %1552 = vmatprep.mubr.f32.mxu0 0.0
    %1553 = vmatmul.mubr.f32.gmra.mrb[0].mxu0 %v1480
    %v1554 = vpop.f32.mrb[0].mxu0
    %v1555 = vadd.f32 0.0, %v1554
    %v1556 = vpop.f32.mrb[0].mxu0
    %1557 = vmatprep.mubr.f32.mxu0 0.0
    %1558 = vmatmul.mubr.f32.gmra.mrb[0].mxu0 %v1482
    %v1559 = vpop.f32.mrb[0].mxu0
    %v1560 = vadd.f32 0.0, %v1559
    %v1561 = vpop.f32.mrb[0].mxu0
    %1562 = vdwg.mxu0
    %v1563 = vsel %vm518, %v1555, -inf
    %1564 = vmax.xlane.f32.xlu0 %v1563
    %v1565 = vpop.xlane.xlu0 %1564
    %v1566 = vsel %vm522, %v1560, -inf
    %1567 = vmax.xlane.f32.xlu0 %v1566
    %v1568 = vpop.xlane.xlu0 %1567
    %v1569 = vsub.f32 %v1555, %v1565
    %v1570 = vsub.f32 %v1560, %v1568
    %v1571 = vmul.f32 %v1569, 1.442695
    %v1572 = vpow.pop %v1571
    %v1573 = vmul.f32 %v1570, 1.442695
    %v1574 = vpow.pop %v1573
    %v1575 = vsel %vm518, %v1572, 0.0
    %1576 = vadd.xlane.f32.xlu0 %v1575
    %v1577 = vpop.xlane.xlu0 %1576
    %v1578 = vsel %vm522, %v1574, 0.0
    %1579 = vadd.xlane.f32.xlu0 %v1578
    %v1580 = vpop.xlane.xlu0 %1579
    %v1581 = vrcp.pop %v1577
    %v1582 = vrcp.pop %v1580
    %v1583 = vmul.f32 %v1572, %v1581
    %v1584 = vmul.f32 %v1574, %v1582
    %1585 = vrot.lane.b32.xlu0 %v1274, 56
    %v1586 = vpop.permute.xlu0 %1585
    %1587 = vrot.lane.b32.xlu0 %v1273, 56
    %v1588 = vpop.permute.xlu0 %1587
    %v1591 = vsel %vm518, %v1583, 0
    %v1594 = vsel %vm518, %v1584, 0
    %v1596 = vsel %vm242, %v1588, 0
    %1598 = vmatprep.subr.mxu0 0.0
    %1599 = vmatpush1.msra.mxu0 %v1586
    %1600 = vmatprep.subr.mxu0 0.0
    %1601 = vmatpush1.msra.mxu0 %v1596
    %1602 = vmatprep.subr.mxu0 0.0
    %1603 = vmatpush1.msra.mxu0 0.0
    %1604 = vmatprep.subr.mxu0 0.0
    %1605 = vmatpush1.msra.mxu0 0.0
    %1606 = vmatprep.subr.mxu0 0.0
    %1607 = vmatpush1.msra.mxu0 0.0
    %1608 = vmatprep.subr.mxu0 0.0
    %1609 = vmatpush1.msra.mxu0 0.0
    %1610 = vmatprep.subr.mxu0 0.0
    %1611 = vmatpush1.msra.mxu0 0.0
    %1612 = vmatprep.subr.mxu0 0.0
    %1613 = vmatpush1.msra.mxu0 0.0
    %1614 = vmatprep.subr.mxu0 0.0
    %1615 = vmatpush1.msra.mxu0 0.0
    %1616 = vmatprep.subr.mxu0 0.0
    %1617 = vmatpush1.msra.mxu0 0.0
    %1618 = vmatprep.subr.mxu0 0.0
    %1619 = vmatpush1.msra.mxu0 0.0
    %1620 = vmatprep.subr.mxu0 0.0
    %1621 = vmatpush1.msra.mxu0 0.0
    %1622 = vmatprep.subr.mxu0 0.0
    %1623 = vmatpush1.msra.mxu0 0.0
    %1624 = vmatprep.subr.mxu0 0.0
    %1625 = vmatpush1.msra.mxu0 0.0
    %1626 = vmatprep.subr.mxu0 0.0
    %1627 = vmatpush1.msra.mxu0 0.0
    %1628 = vmatprep.subr.mxu0 0.0
    %1629 = vmatpush1.msra.mxu0 0.0
    %1630 = vmatprep.subr.mxu0 0.0
    %1631 = vmatpush1.msra.mxu0 0.0
    %1632 = vmatprep.subr.mxu0 0.0
    %1633 = vmatpush1.msra.mxu0 0.0
    %1634 = vmatprep.subr.mxu0 0.0
    %1635 = vmatpush1.msra.mxu0 0.0
    %1636 = vmatprep.subr.mxu0 0.0
    %1637 = vmatpush1.msra.mxu0 0.0
    %1638 = vmatprep.subr.mxu0 0.0
    %1639 = vmatpush1.msra.mxu0 0.0
    %1640 = vmatprep.subr.mxu0 0.0
    %1641 = vmatpush1.msra.mxu0 0.0
    %1642 = vmatprep.subr.mxu0 0.0
    %1643 = vmatpush1.msra.mxu0 0.0
    %1644 = vmatprep.subr.mxu0 0.0
    %1645 = vmatpush1.msra.mxu0 0.0
    %1646 = vmatprep.subr.mxu0 0.0
    %1647 = vmatpush1.msra.mxu0 0.0
    %1648 = vmatprep.subr.mxu0 0.0
    %1649 = vmatpush1.msra.mxu0 0.0
    %1650 = vmatprep.subr.mxu0 0.0
    %1651 = vmatpush1.msra.mxu0 0.0
    %1652 = vmatprep.subr.mxu0 0.0
    %1653 = vmatpush1.msra.mxu0 0.0
    %1654 = vmatprep.subr.mxu0 0.0
    %1655 = vmatpush1.msra.mxu0 0.0
    %1656 = vmatprep.subr.mxu0 0.0
    %1657 = vmatpush1.msra.mxu0 0.0
    %1658 = vmatprep.subr.mxu0 0.0
    %1659 = vmatpush1.msra.mxu0 0.0
    %1660 = vmatprep.subr.mxu0 0.0
    %1661 = vmatpush1.msra.mxu0 0.0
    %1662 = vmatprep.mubr.f32.mxu0 0.0
    %1663 = vmatmul.mubr.f32.gmra.mrb[0].mxu0 %v1591
    %v1664 = vpop.f32.mrb[0].mxu0
    %v1665 = vadd.f32 0.0, %v1664
    %v1666 = vpop.f32.mrb[0].mxu0
    %1667 = vmatprep.mubr.f32.mxu0 0.0
    %1668 = vmatmul.mubr.f32.gmra.mrb[0].mxu0 %v1594
    %v1669 = vpop.f32.mrb[0].mxu0
    %v1670 = vadd.f32 0.0, %v1669
    %v1671 = vpop.f32.mrb[0].mxu0
    %1672 = vdwg.mxu0
    %1673 = vrot.lane.b32.xlu0 %v1270, 112
    %v1674 = vpop.permute.xlu0 %1673
    %1675 = vrot.lane.b32.xlu0 %v1269, 112
    %v1676 = vpop.permute.xlu0 %1675
    %1677 = vrot.lane.b32.xlu0 %v1274, 80
    %v1678 = vpop.permute.xlu0 %1677
    %1679 = vrot.lane.b32.xlu0 %v1273, 80
    %v1680 = vpop.permute.xlu0 %1679
    %v1681 = vsel %vm432, %v1674, 0
    %v1683 = vsel %vm432, %v1676, 0
    %v1685 = vsel %vm432, %v1678, 0
    %v1687 = vsel %vm432, %v1680, 0
    %1689 = vmatprep.subr.mxu0 0.0
    %1690 = vmatpush1.xpose.msra.mxu0 %v1685
    %1691 = vmatprep.subr.mxu0 0.0
    %1692 = vmatpush1.xpose.msra.mxu0 %v1687
    %1693 = vmatprep.subr.mxu0 0.0
    %1694 = vmatpush1.xpose.msra.mxu0 0.0
    %1695 = vmatprep.subr.mxu0 0.0
    %1696 = vmatpush1.xpose.msra.mxu0 0.0
    %1697 = vmatprep.subr.mxu0 0.0
    %1698 = vmatpush1.xpose.msra.mxu0 0.0
    %1699 = vmatprep.subr.mxu0 0.0
    %1700 = vmatpush1.xpose.msra.mxu0 0.0
    %1701 = vmatprep.subr.mxu0 0.0
    %1702 = vmatpush1.xpose.msra.mxu0 0.0
    %1703 = vmatprep.subr.mxu0 0.0
    %1704 = vmatpush1.xpose.msra.mxu0 0.0
    %1705 = vmatprep.subr.mxu0 0.0
    %1706 = vmatpush1.xpose.msra.mxu0 0.0
    %1707 = vmatprep.subr.mxu0 0.0
    %1708 = vmatpush1.xpose.msra.mxu0 0.0
    %1709 = vmatprep.subr.mxu0 0.0
    %1710 = vmatpush1.xpose.msra.mxu0 0.0
    %1711 = vmatprep.subr.mxu0 0.0
    %1712 = vmatpush1.xpose.msra.mxu0 0.0
    %1713 = vmatprep.subr.mxu0 0.0
    %1714 = vmatpush1.xpose.msra.mxu0 0.0
    %1715 = vmatprep.subr.mxu0 0.0
    %1716 = vmatpush1.xpose.msra.mxu0 0.0
    %1717 = vmatprep.subr.mxu0 0.0
    %1718 = vmatpush1.xpose.msra.mxu0 0.0
    %1719 = vmatprep.subr.mxu0 0.0
    %1720 = vmatpush1.xpose.msra.mxu0 0.0
    %1721 = vmatprep.subr.mxu0 0.0
    %1722 = vmatpush1.xpose.msra.mxu0 0.0
    %1723 = vmatprep.subr.mxu0 0.0
    %1724 = vmatpush1.xpose.msra.mxu0 0.0
    %1725 = vmatprep.subr.mxu0 0.0
    %1726 = vmatpush1.xpose.msra.mxu0 0.0
    %1727 = vmatprep.subr.mxu0 0.0
    %1728 = vmatpush1.xpose.msra.mxu0 0.0
    %1729 = vmatprep.subr.mxu0 0.0
    %1730 = vmatpush1.xpose.msra.mxu0 0.0
    %1731 = vmatprep.subr.mxu0 0.0
    %1732 = vmatpush1.xpose.msra.mxu0 0.0
    %1733 = vmatprep.subr.mxu0 0.0
    %1734 = vmatpush1.xpose.msra.mxu0 0.0
    %1735 = vmatprep.subr.mxu0 0.0
    %1736 = vmatpush1.xpose.msra.mxu0 0.0
    %1737 = vmatprep.subr.mxu0 0.0
    %1738 = vmatpush1.xpose.msra.mxu0 0.0
    %1739 = vmatprep.subr.mxu0 0.0
    %1740 = vmatpush1.xpose.msra.mxu0 0.0
    %1741 = vmatprep.subr.mxu0 0.0
    %1742 = vmatpush1.xpose.msra.mxu0 0.0
    %1743 = vmatprep.subr.mxu0 0.0
    %1744 = vmatpush1.xpose.msra.mxu0 0.0
    %1745 = vmatprep.subr.mxu0 0.0
    %1746 = vmatpush1.xpose.msra.mxu0 0.0
    %1747 = vmatprep.subr.mxu0 0.0
    %1748 = vmatpush1.xpose.msra.mxu0 0.0
    %1749 = vmatprep.subr.mxu0 0.0
    %1750 = vmatpush1.xpose.msra.mxu0 0.0
    %1751 = vmatprep.subr.mxu0 0.0
    %1752 = vmatpush1.xpose.msra.mxu0 0.0
    %1753 = vmatprep.mubr.f32.mxu0 0.0
    %1754 = vmatmul.mubr.f32.gmra.mrb[0].mxu0 %v1681
    %v1755 = vpop.f32.mrb[0].mxu0
    %v1756 = vadd.f32 0.0, %v1755
    %v1757 = vpop.f32.mrb[0].mxu0
    %1758 = vmatprep.mubr.f32.mxu0 0.0
    %1759 = vmatmul.mubr.f32.gmra.mrb[0].mxu0 %v1683
    %v1760 = vpop.f32.mrb[0].mxu0
    %v1761 = vadd.f32 0.0, %v1760
    %v1762 = vpop.f32.mrb[0].mxu0
    %1763 = vdwg.mxu0
    %v1764 = vsel %vm518, %v1756, -inf
    %1765 = vmax.xlane.f32.xlu0 %v1764
    %v1766 = vpop.xlane.xlu0 %1765
    %v1767 = vsel %vm522, %v1761, -inf
    %1768 = vmax.xlane.f32.xlu0 %v1767
    %v1769 = vpop.xlane.xlu0 %1768
    %v1770 = vsub.f32 %v1756, %v1766
    %v1771 = vsub.f32 %v1761, %v1769
    %v1772 = vmul.f32 %v1770, 1.442695
    %v1773 = vpow.pop %v1772
    %v1774 = vmul.f32 %v1771, 1.442695
    %v1775 = vpow.pop %v1774
    %v1776 = vsel %vm518, %v1773, 0.0
    %1777 = vadd.xlane.f32.xlu0 %v1776
    %v1778 = vpop.xlane.xlu0 %1777
    %v1779 = vsel %vm522, %v1775, 0.0
    %1780 = vadd.xlane.f32.xlu0 %v1779
    %v1781 = vpop.xlane.xlu0 %1780
    %v1782 = vrcp.pop %v1778
    %v1783 = vrcp.pop %v1781
    %v1784 = vmul.f32 %v1773, %v1782
    %v1785 = vmul.f32 %v1775, %v1783
    %1786 = vrot.lane.b32.xlu0 %v1274, 48
    %v1787 = vpop.permute.xlu0 %1786
    %1788 = vrot.lane.b32.xlu0 %v1273, 48
    %v1789 = vpop.permute.xlu0 %1788
    %v1792 = vsel %vm518, %v1784, 0
    %v1795 = vsel %vm518, %v1785, 0
    %v1797 = vsel %vm242, %v1789, 0
    %1799 = vmatprep.subr.mxu0 0.0
    %1800 = vmatpush1.msra.mxu0 %v1787
    %1801 = vmatprep.subr.mxu0 0.0
    %1802 = vmatpush1.msra.mxu0 %v1797
    %1803 = vmatprep.subr.mxu0 0.0
    %1804 = vmatpush1.msra.mxu0 0.0
    %1805 = vmatprep.subr.mxu0 0.0
    %1806 = vmatpush1.msra.mxu0 0.0
    %1807 = vmatprep.subr.mxu0 0.0
    %1808 = vmatpush1.msra.mxu0 0.0
    %1809 = vmatprep.subr.mxu0 0.0
    %1810 = vmatpush1.msra.mxu0 0.0
    %1811 = vmatprep.subr.mxu0 0.0
    %1812 = vmatpush1.msra.mxu0 0.0
    %1813 = vmatprep.subr.mxu0 0.0
    %1814 = vmatpush1.msra.mxu0 0.0
    %1815 = vmatprep.subr.mxu0 0.0
    %1816 = vmatpush1.msra.mxu0 0.0
    %1817 = vmatprep.subr.mxu0 0.0
    %1818 = vmatpush1.msra.mxu0 0.0
    %1819 = vmatprep.subr.mxu0 0.0
    %1820 = vmatpush1.msra.mxu0 0.0
    %1821 = vmatprep.subr.mxu0 0.0
    %1822 = vmatpush1.msra.mxu0 0.0
    %1823 = vmatprep.subr.mxu0 0.0
    %1824 = vmatpush1.msra.mxu0 0.0
    %1825 = vmatprep.subr.mxu0 0.0
    %1826 = vmatpush1.msra.mxu0 0.0
    %1827 = vmatprep.subr.mxu0 0.0
    %1828 = vmatpush1.msra.mxu0 0.0
    %1829 = vmatprep.subr.mxu0 0.0
    %1830 = vmatpush1.msra.mxu0 0.0
    %1831 = vmatprep.subr.mxu0 0.0
    %1832 = vmatpush1.msra.mxu0 0.0
    %1833 = vmatprep.subr.mxu0 0.0
    %1834 = vmatpush1.msra.mxu0 0.0
    %1835 = vmatprep.subr.mxu0 0.0
    %1836 = vmatpush1.msra.mxu0 0.0
    %1837 = vmatprep.subr.mxu0 0.0
    %1838 = vmatpush1.msra.mxu0 0.0
    %1839 = vmatprep.subr.mxu0 0.0
    %1840 = vmatpush1.msra.mxu0 0.0
    %1841 = vmatprep.subr.mxu0 0.0
    %1842 = vmatpush1.msra.mxu0 0.0
    %1843 = vmatprep.subr.mxu0 0.0
    %1844 = vmatpush1.msra.mxu0 0.0
    %1845 = vmatprep.subr.mxu0 0.0
    %1846 = vmatpush1.msra.mxu0 0.0
    %1847 = vmatprep.subr.mxu0 0.0
    %1848 = vmatpush1.msra.mxu0 0.0
    %1849 = vmatprep.subr.mxu0 0.0
    %1850 = vmatpush1.msra.mxu0 0.0
    %1851 = vmatprep.subr.mxu0 0.0
    %1852 = vmatpush1.msra.mxu0 0.0
    %1853 = vmatprep.subr.mxu0 0.0
    %1854 = vmatpush1.msra.mxu0 0.0
    %1855 = vmatprep.subr.mxu0 0.0
    %1856 = vmatpush1.msra.mxu0 0.0
    %1857 = vmatprep.subr.mxu0 0.0
    %1858 = vmatpush1.msra.mxu0 0.0
    %1859 = vmatprep.subr.mxu0 0.0
    %1860 = vmatpush1.msra.mxu0 0.0
    %1861 = vmatprep.subr.mxu0 0.0
    %1862 = vmatpush1.msra.mxu0 0.0
    %1863 = vmatprep.mubr.f32.mxu0 0.0
    %1864 = vmatmul.mubr.f32.gmra.mrb[0].mxu0 %v1792
    %v1865 = vpop.f32.mrb[0].mxu0
    %v1866 = vadd.f32 0.0, %v1865
    %v1867 = vpop.f32.mrb[0].mxu0
    %1868 = vmatprep.mubr.f32.mxu0 0.0
    %1869 = vmatmul.mubr.f32.gmra.mrb[0].mxu0 %v1795
    %v1870 = vpop.f32.mrb[0].mxu0
    %v1871 = vadd.f32 0.0, %v1870
    %v1872 = vpop.f32.mrb[0].mxu0
    %1873 = vdwg.mxu0
    %1874 = vrot.lane.b32.xlu0 %v1270, 104
    %v1875 = vpop.permute.xlu0 %1874
    %1876 = vrot.lane.b32.xlu0 %v1269, 104
    %v1877 = vpop.permute.xlu0 %1876
    %1878 = vrot.lane.b32.xlu0 %v1274, 72
    %v1879 = vpop.permute.xlu0 %1878
    %1880 = vrot.lane.b32.xlu0 %v1273, 72
    %v1881 = vpop.permute.xlu0 %1880
    %v1882 = vsel %vm432, %v1875, 0
    %v1884 = vsel %vm432, %v1877, 0
    %v1886 = vsel %vm432, %v1879, 0
    %v1888 = vsel %vm432, %v1881, 0
    %1890 = vmatprep.subr.mxu0 0.0
    %1891 = vmatpush1.xpose.msra.mxu0 %v1886
    %1892 = vmatprep.subr.mxu0 0.0
    %1893 = vmatpush1.xpose.msra.mxu0 %v1888
    %1894 = vmatprep.subr.mxu0 0.0
    %1895 = vmatpush1.xpose.msra.mxu0 0.0
    %1896 = vmatprep.subr.mxu0 0.0
    %1897 = vmatpush1.xpose.msra.mxu0 0.0
    %1898 = vmatprep.subr.mxu0 0.0
    %1899 = vmatpush1.xpose.msra.mxu0 0.0
    %1900 = vmatprep.subr.mxu0 0.0
    %1901 = vmatpush1.xpose.msra.mxu0 0.0
    %1902 = vmatprep.subr.mxu0 0.0
    %1903 = vmatpush1.xpose.msra.mxu0 0.0
    %1904 = vmatprep.subr.mxu0 0.0
    %1905 = vmatpush1.xpose.msra.mxu0 0.0
    %1906 = vmatprep.subr.mxu0 0.0
    %1907 = vmatpush1.xpose.msra.mxu0 0.0
    %1908 = vmatprep.subr.mxu0 0.0
    %1909 = vmatpush1.xpose.msra.mxu0 0.0
    %1910 = vmatprep.subr.mxu0 0.0
    %1911 = vmatpush1.xpose.msra.mxu0 0.0
    %1912 = vmatprep.subr.mxu0 0.0
    %1913 = vmatpush1.xpose.msra.mxu0 0.0
    %1914 = vmatprep.subr.mxu0 0.0
    %1915 = vmatpush1.xpose.msra.mxu0 0.0
    %1916 = vmatprep.subr.mxu0 0.0
    %1917 = vmatpush1.xpose.msra.mxu0 0.0
    %1918 = vmatprep.subr.mxu0 0.0
    %1919 = vmatpush1.xpose.msra.mxu0 0.0
    %1920 = vmatprep.subr.mxu0 0.0
    %1921 = vmatpush1.xpose.msra.mxu0 0.0
    %1922 = vmatprep.subr.mxu0 0.0
    %1923 = vmatpush1.xpose.msra.mxu0 0.0
    %1924 = vmatprep.subr.mxu0 0.0
    %1925 = vmatpush1.xpose.msra.mxu0 0.0
    %1926 = vmatprep.subr.mxu0 0.0
    %1927 = vmatpush1.xpose.msra.mxu0 0.0
    %1928 = vmatprep.subr.mxu0 0.0
    %1929 = vmatpush1.xpose.msra.mxu0 0.0
    %1930 = vmatprep.subr.mxu0 0.0
    %1931 = vmatpush1.xpose.msra.mxu0 0.0
    %1932 = vmatprep.subr.mxu0 0.0
    %1933 = vmatpush1.xpose.msra.mxu0 0.0
    %1934 = vmatprep.subr.mxu0 0.0
    %1935 = vmatpush1.xpose.msra.mxu0 0.0
    %1936 = vmatprep.subr.mxu0 0.0
    %1937 = vmatpush1.xpose.msra.mxu0 0.0
    %1938 = vmatprep.subr.mxu0 0.0
    %1939 = vmatpush1.xpose.msra.mxu0 0.0
    %1940 = vmatprep.subr.mxu0 0.0
    %1941 = vmatpush1.xpose.msra.mxu0 0.0
    %1942 = vmatprep.subr.mxu0 0.0
    %1943 = vmatpush1.xpose.msra.mxu0 0.0
    %1944 = vmatprep.subr.mxu0 0.0
    %1945 = vmatpush1.xpose.msra.mxu0 0.0
    %1946 = vmatprep.subr.mxu0 0.0
    %1947 = vmatpush1.xpose.msra.mxu0 0.0
    %1948 = vmatprep.subr.mxu0 0.0
    %1949 = vmatpush1.xpose.msra.mxu0 0.0
    %1950 = vmatprep.subr.mxu0 0.0
    %1951 = vmatpush1.xpose.msra.mxu0 0.0
    %1952 = vmatprep.subr.mxu0 0.0
    %1953 = vmatpush1.xpose.msra.mxu0 0.0
    %1954 = vmatprep.mubr.f32.mxu0 0.0
    %1955 = vmatmul.mubr.f32.gmra.mrb[0].mxu0 %v1882
    %v1956 = vpop.f32.mrb[0].mxu0
    %v1957 = vadd.f32 0.0, %v1956
    %v1958 = vpop.f32.mrb[0].mxu0
    %1959 = vmatprep.mubr.f32.mxu0 0.0
    %1960 = vmatmul.mubr.f32.gmra.mrb[0].mxu0 %v1884
    %v1961 = vpop.f32.mrb[0].mxu0
    %v1962 = vadd.f32 0.0, %v1961
    %v1963 = vpop.f32.mrb[0].mxu0
    %1964 = vdwg.mxu0
    %v1965 = vsel %vm518, %v1957, -inf
    %1966 = vmax.xlane.f32.xlu0 %v1965
    %v1967 = vpop.xlane.xlu0 %1966
    %v1968 = vsel %vm522, %v1962, -inf
    %1969 = vmax.xlane.f32.xlu0 %v1968
    %v1970 = vpop.xlane.xlu0 %1969
    %v1971 = vsub.f32 %v1957, %v1967
    %v1972 = vsub.f32 %v1962, %v1970
    %v1973 = vmul.f32 %v1971, 1.442695
    %v1974 = vpow.pop %v1973
    %v1975 = vmul.f32 %v1972, 1.442695
    %v1976 = vpow.pop %v1975
    %v1977 = vsel %vm518, %v1974, 0.0
    %1978 = vadd.xlane.f32.xlu0 %v1977
    %v1979 = vpop.xlane.xlu0 %1978
    %v1980 = vsel %vm522, %v1976, 0.0
    %1981 = vadd.xlane.f32.xlu0 %v1980
    %v1982 = vpop.xlane.xlu0 %1981
    %v1983 = vrcp.pop %v1979
    %v1984 = vrcp.pop %v1982
    %v1985 = vmul.f32 %v1974, %v1983
    %v1986 = vmul.f32 %v1976, %v1984
    %1987 = vrot.lane.b32.xlu0 %v1274, 40
    %v1988 = vpop.permute.xlu0 %1987
    %1989 = vrot.lane.b32.xlu0 %v1273, 40
    %v1990 = vpop.permute.xlu0 %1989
    %v1993 = vsel %vm518, %v1985, 0
    %v1996 = vsel %vm518, %v1986, 0
    %v1998 = vsel %vm242, %v1990, 0
    %2000 = vmatprep.subr.mxu0 0.0
    %2001 = vmatpush1.msra.mxu0 %v1988
    %2002 = vmatprep.subr.mxu0 0.0
    %2003 = vmatpush1.msra.mxu0 %v1998
    %2004 = vmatprep.subr.mxu0 0.0
    %2005 = vmatpush1.msra.mxu0 0.0
    %2006 = vmatprep.subr.mxu0 0.0
    %2007 = vmatpush1.msra.mxu0 0.0
    %2008 = vmatprep.subr.mxu0 0.0
    %2009 = vmatpush1.msra.mxu0 0.0
    %2010 = vmatprep.subr.mxu0 0.0
    %2011 = vmatpush1.msra.mxu0 0.0
    %2012 = vmatprep.subr.mxu0 0.0
    %2013 = vmatpush1.msra.mxu0 0.0
    %2014 = vmatprep.subr.mxu0 0.0
    %2015 = vmatpush1.msra.mxu0 0.0
    %2016 = vmatprep.subr.mxu0 0.0
    %2017 = vmatpush1.msra.mxu0 0.0
    %2018 = vmatprep.subr.mxu0 0.0
    %2019 = vmatpush1.msra.mxu0 0.0
    %2020 = vmatprep.subr.mxu0 0.0
    %2021 = vmatpush1.msra.mxu0 0.0
    %2022 = vmatprep.subr.mxu0 0.0
    %2023 = vmatpush1.msra.mxu0 0.0
    %2024 = vmatprep.subr.mxu0 0.0
    %2025 = vmatpush1.msra.mxu0 0.0
    %2026 = vmatprep.subr.mxu0 0.0
    %2027 = vmatpush1.msra.mxu0 0.0
    %2028 = vmatprep.subr.mxu0 0.0
    %2029 = vmatpush1.msra.mxu0 0.0
    %2030 = vmatprep.subr.mxu0 0.0
    %2031 = vmatpush1.msra.mxu0 0.0
    %2032 = vmatprep.subr.mxu0 0.0
    %2033 = vmatpush1.msra.mxu0 0.0
    %2034 = vmatprep.subr.mxu0 0.0
    %2035 = vmatpush1.msra.mxu0 0.0
    %2036 = vmatprep.subr.mxu0 0.0
    %2037 = vmatpush1.msra.mxu0 0.0
    %2038 = vmatprep.subr.mxu0 0.0
    %2039 = vmatpush1.msra.mxu0 0.0
    %2040 = vmatprep.subr.mxu0 0.0
    %2041 = vmatpush1.msra.mxu0 0.0
    %2042 = vmatprep.subr.mxu0 0.0
    %2043 = vmatpush1.msra.mxu0 0.0
    %2044 = vmatprep.subr.mxu0 0.0
    %2045 = vmatpush1.msra.mxu0 0.0
    %2046 = vmatprep.subr.mxu0 0.0
    %2047 = vmatpush1.msra.mxu0 0.0
    %2048 = vmatprep.subr.mxu0 0.0
    %2049 = vmatpush1.msra.mxu0 0.0
    %2050 = vmatprep.subr.mxu0 0.0
    %2051 = vmatpush1.msra.mxu0 0.0
    %2052 = vmatprep.subr.mxu0 0.0
    %2053 = vmatpush1.msra.mxu0 0.0
    %2054 = vmatprep.subr.mxu0 0.0
    %2055 = vmatpush1.msra.mxu0 0.0
    %2056 = vmatprep.subr.mxu0 0.0
    %2057 = vmatpush1.msra.mxu0 0.0
    %2058 = vmatprep.subr.mxu0 0.0
    %2059 = vmatpush1.msra.mxu0 0.0
    %2060 = vmatprep.subr.mxu0 0.0
    %2061 = vmatpush1.msra.mxu0 0.0
    %2062 = vmatprep.subr.mxu0 0.0
    %2063 = vmatpush1.msra.mxu0 0.0
    %2064 = vmatprep.mubr.f32.mxu0 0.0
    %2065 = vmatmul.mubr.f32.gmra.mrb[0].mxu0 %v1993
    %v2066 = vpop.f32.mrb[0].mxu0
    %v2067 = vadd.f32 0.0, %v2066
    %v2068 = vpop.f32.mrb[0].mxu0
    %2069 = vmatprep.mubr.f32.mxu0 0.0
    %2070 = vmatmul.mubr.f32.gmra.mrb[0].mxu0 %v1996
    %v2071 = vpop.f32.mrb[0].mxu0
    %v2072 = vadd.f32 0.0, %v2071
    %v2073 = vpop.f32.mrb[0].mxu0
    %2074 = vdwg.mxu0
    %2077 = vrot.lane.b32.xlu0 %v1665, 8
    %v2078 = vpop.permute.xlu0 %2077
    %2079 = vrot.lane.b32.xlu0 %v1670, 8
    %v2080 = vpop.permute.xlu0 %2079
    %2085 = vrot.lane.b32.xlu0 %v1866, 16
    %v2086 = vpop.permute.xlu0 %2085
    %2087 = vrot.lane.b32.xlu0 %v1871, 16
    %v2088 = vpop.permute.xlu0 %2087
    %2093 = vrot.lane.b32.xlu0 %v2067, 24
    %v2094 = vpop.permute.xlu0 %2093
    %2095 = vrot.lane.b32.xlu0 %v2072, 24
    %v2096 = vpop.permute.xlu0 %2095
    %v2099 = vsel %vm432, %v1464, %v2078
    %v2100 = vsel %vm432, %v1469, %v2080
    %v2101 = vsel %vm1259, %v2099, %v2086
    %v2102 = vsel %vm1259, %v2100, %v2088
    %v2103 = vsel %vm1262, %v2101, %v2094
    %v2104 = vsel %vm1262, %v2102, %v2096
    %v2107 = vrot.slane %v2103, 7
    %v2108 = vrot.slane %v2104, 7
    %v2109 = vsel %vm242, %v2107, %v2108
    %v2111 = vsel %vm242, %v1264, %v2107
    %v2112 = vld [vmem:[#allocation7] sm:$0xff]
    %v2113 = vld [vmem:[#allocation7 + $0x8] sm:$0xff]
    %v2114 = vld [vmem:[#allocation7 + $0x10] sm:$0xff]
    %v2115 = vld [vmem:[#allocation7 + $0x18] sm:$0xff]
    %v2117 = vsel %vm264, %v1263, 0
    %v2120 = vsel %vm264, %v2111, 0
    %v2122 = vsel %vm264, %v2109, 0
    %2124 = vmatprep.subr.mxu0 0.0
    %2125 = vmatpush1.msra.mxu0 %v2112
    %2126 = vmatprep.subr.mxu0 0.0
    %2127 = vmatpush1.msra.mxu0 %v2113
    %2128 = vmatprep.subr.mxu0 0.0
    %2129 = vmatpush1.msra.mxu0 %v2114
    %2130 = vmatprep.subr.mxu0 0.0
    %2131 = vmatpush1.msra.mxu0 %v2115
    %2132 = vmatprep.subr.mxu0 0.0
    %2133 = vmatpush1.msra.mxu0 0.0
    %2134 = vmatprep.subr.mxu0 0.0
    %2135 = vmatpush1.msra.mxu0 0.0
    %2136 = vmatprep.subr.mxu0 0.0
    %2137 = vmatpush1.msra.mxu0 0.0
    %2138 = vmatprep.subr.mxu0 0.0
    %2139 = vmatpush1.msra.mxu0 0.0
    %2140 = vmatprep.subr.mxu0 0.0
    %2141 = vmatpush1.msra.mxu0 0.0
    %2142 = vmatprep.subr.mxu0 0.0
    %2143 = vmatpush1.msra.mxu0 0.0
    %2144 = vmatprep.subr.mxu0 0.0
    %2145 = vmatpush1.msra.mxu0 0.0
    %2146 = vmatprep.subr.mxu0 0.0
    %2147 = vmatpush1.msra.mxu0 0.0
    %2148 = vmatprep.subr.mxu0 0.0
    %2149 = vmatpush1.msra.mxu0 0.0
    %2150 = vmatprep.subr.mxu0 0.0
    %2151 = vmatpush1.msra.mxu0 0.0
    %2152 = vmatprep.subr.mxu0 0.0
    %2153 = vmatpush1.msra.mxu0 0.0
    %2154 = vmatprep.subr.mxu0 0.0
    %2155 = vmatpush1.msra.mxu0 0.0
    %2156 = vmatprep.subr.mxu0 0.0
    %2157 = vmatpush1.msra.mxu0 0.0
    %2158 = vmatprep.subr.mxu0 0.0
    %2159 = vmatpush1.msra.mxu0 0.0
    %2160 = vmatprep.subr.mxu0 0.0
    %2161 = vmatpush1.msra.mxu0 0.0
    %2162 = vmatprep.subr.mxu0 0.0
    %2163 = vmatpush1.msra.mxu0 0.0
    %2164 = vmatprep.subr.mxu0 0.0
    %2165 = vmatpush1.msra.mxu0 0.0
    %2166 = vmatprep.subr.mxu0 0.0
    %2167 = vmatpush1.msra.mxu0 0.0
    %2168 = vmatprep.subr.mxu0 0.0
    %2169 = vmatpush1.msra.mxu0 0.0
    %2170 = vmatprep.subr.mxu0 0.0
    %2171 = vmatpush1.msra.mxu0 0.0
    %2172 = vmatprep.subr.mxu0 0.0
    %2173 = vmatpush1.msra.mxu0 0.0
    %2174 = vmatprep.subr.mxu0 0.0
    %2175 = vmatpush1.msra.mxu0 0.0
    %2176 = vmatprep.subr.mxu0 0.0
    %2177 = vmatpush1.msra.mxu0 0.0
    %2178 = vmatprep.subr.mxu0 0.0
    %2179 = vmatpush1.msra.mxu0 0.0
    %2180 = vmatprep.subr.mxu0 0.0
    %2181 = vmatpush1.msra.mxu0 0.0
    %2182 = vmatprep.subr.mxu0 0.0
    %2183 = vmatpush1.msra.mxu0 0.0
    %2184 = vmatprep.subr.mxu0 0.0
    %2185 = vmatpush1.msra.mxu0 0.0
    %2186 = vmatprep.subr.mxu0 0.0
    %2187 = vmatpush1.msra.mxu0 0.0
    %2188 = vmatprep.mubr.f32.mxu0 0.0
    %2189 = vmatmul.mubr.f32.gmra.mrb[0].mxu0 %v2117
    %v2190 = vpop.f32.mrb[0].mxu0
    %v2191 = vadd.f32 0.0, %v2190
    %v2192 = vpop.f32.mrb[0].mxu0
    %2193 = vmatprep.mubr.f32.mxu0 0.0
    %2194 = vmatmul.mubr.f32.gmra.mrb[0].mxu0 %v2120
    %v2195 = vpop.f32.mrb[0].mxu0
    %v2196 = vadd.f32 0.0, %v2195
    %v2197 = vpop.f32.mrb[0].mxu0
    %2198 = vmatprep.mubr.f32.mxu0 0.0
    %2199 = vmatmul.mubr.f32.gmra.mrb[0].mxu0 %v2122
    %v2200 = vpop.f32.mrb[0].mxu0
    %v2201 = vadd.f32 0.0, %v2200
    %v2202 = vpop.f32.mrb[0].mxu0
    %2203 = vdwg.mxu0
    %v2204 = vadd.f32 %v246, %v2191
    %v2205 = vadd.f32 %v261, %v2196
    %v2206 = vadd.f32 %v258, %v2201
    %v2207 = vld [vmem:[%s10] sm:$0x1]
    %v2209 = vlaneseq
    %v2210 = vshrl.u32 %v2209, 7
    %v2211 = vsub.s32 0, %v2210
    %v2212 = vrot.slane %v2207, %v2211
    %v2214 = vadd.f32 %v2204, %v2212
    %v2215 = vadd.f32 %v2205, %v2212
    %v2216 = vadd.f32 %v2206, %v2212
    %v2217 = vld [vmem:[%s11] sm:$0x1]
    %v2218 = vld [vmem:[%s12] sm:$0x1]
    %v2219 = vsel %vm264, %v2214, 0.0
    %2220 = vadd.xlane.f32.xlu0 %v2219
    %v2221 = vpop.xlane.xlu0 %2220
    %v2222 = vsel %vm264, %v2215, 0.0
    %2223 = vadd.xlane.f32.xlu0 %v2222
    %v2224 = vpop.xlane.xlu0 %2223
    %v2225 = vsel %vm271, %v2216, 0.0
    %2226 = vadd.xlane.f32.xlu0 %v2225
    %v2227 = vpop.xlane.xlu0 %2226
    %v2228 = vmul.f32 %v2221, %v275
    %v2229 = vmul.f32 %v2224, %v275
    %v2230 = vmul.f32 %v2227, %v275
    %v2231 = vsub.f32 %v2214, %v2228
    %v2232 = vsub.f32 %v2215, %v2229
    %v2233 = vsub.f32 %v2216, %v2230
    %v2234 = vmul.f32 %v2231, %v2231
    %v2235 = vmul.f32 %v2232, %v2232
    %v2236 = vmul.f32 %v2233, %v2233
    %v2237 = vsel %vm264, %v2234, 0.0
    %2238 = vadd.xlane.f32.xlu0 %v2237
    %v2239 = vpop.xlane.xlu0 %2238
    %v2240 = vsel %vm264, %v2235, 0.0
    %2241 = vadd.xlane.f32.xlu0 %v2240
    %v2242 = vpop.xlane.xlu0 %2241
    %v2243 = vsel %vm271, %v2236, 0.0
    %2244 = vadd.xlane.f32.xlu0 %v2243
    %v2245 = vpop.xlane.xlu0 %2244
    %v2246 = vmul.f32 %v2239, %v275
    %v2247 = vmul.f32 %v2242, %v275
    %v2248 = vmul.f32 %v2245, %v275
    %v2249 = vadd.f32 %v2246, 1e-05
    %v2250 = vadd.f32 %v2247, 1e-05
    %v2251 = vadd.f32 %v2248, 1e-05
    %v2252 = vrsqrt.pop %v2249
    %v2253 = vrsqrt.pop %v2250
    %v2254 = vrsqrt.pop %v2251
    %v2255 = vmul.f32 %v2231, %v2252
    %v2256 = vmul.f32 %v2232, %v2253
    %v2257 = vmul.f32 %v2233, %v2254
    %v2259 = vlaneseq
    %v2260 = vshrl.u32 %v2259, 7
    %v2261 = vsub.s32 0, %v2260
    %v2262 = vrot.slane %v2217, %v2261
    %v2264 = vmul.f32 %v2255, %v2262
    %v2265 = vmul.f32 %v2256, %v2262
    %v2266 = vmul.f32 %v2257, %v2262
    %v2268 = vlaneseq
    %v2269 = vshrl.u32 %v2268, 7
    %v2270 = vsub.s32 0, %v2269
    %v2271 = vrot.slane %v2218, %v2270
    %v2273 = vadd.f32 %v2264, %v2271
    %v2274 = vadd.f32 %v2265, %v2271
    %v2275 = vadd.f32 %v2266, %v2271
    %v2276 = vld [vmem:[#allocation8] sm:$0xff]
    %v2277 = vld [vmem:[#allocation8 + $0x8] sm:$0xff]
    %v2278 = vld [vmem:[#allocation8 + $0x10] sm:$0xff]
    %v2279 = vld [vmem:[#allocation8 + $0x18] sm:$0xff]
    %v2280 = vld [vmem:[%s14] sm:$0x1]
    %v2282 = vlaneseq
    %v2283 = vshrl.u32 %v2282, 7
    %v2284 = vsub.s32 0, %v2283
    %v2285 = vrot.slane %v2280, %v2284
    %v2288 = vsel %vm264, %v2273, 0
    %v2291 = vsel %vm264, %v2274, 0
    %v2294 = vsel %vm264, %v2275, 0
    %2296 = vmatprep.subr.mxu0 0.0
    %2297 = vmatpush1.msra.mxu0 %v2276
    %2298 = vmatprep.subr.mxu0 0.0
    %2299 = vmatpush1.msra.mxu0 %v2277
    %2300 = vmatprep.subr.mxu0 0.0
    %2301 = vmatpush1.msra.mxu0 %v2278
    %2302 = vmatprep.subr.mxu0 0.0
    %2303 = vmatpush1.msra.mxu0 %v2279
    %2304 = vmatprep.subr.mxu0 0.0
    %2305 = vmatpush1.msra.mxu0 0.0
    %2306 = vmatprep.subr.mxu0 0.0
    %2307 = vmatpush1.msra.mxu0 0.0
    %2308 = vmatprep.subr.mxu0 0.0
    %2309 = vmatpush1.msra.mxu0 0.0
    %2310 = vmatprep.subr.mxu0 0.0
    %2311 = vmatpush1.msra.mxu0 0.0
    %2312 = vmatprep.subr.mxu0 0.0
    %2313 = vmatpush1.msra.mxu0 0.0
    %2314 = vmatprep.subr.mxu0 0.0
    %2315 = vmatpush1.msra.mxu0 0.0
    %2316 = vmatprep.subr.mxu0 0.0
    %2317 = vmatpush1.msra.mxu0 0.0
    %2318 = vmatprep.subr.mxu0 0.0
    %2319 = vmatpush1.msra.mxu0 0.0
    %2320 = vmatprep.subr.mxu0 0.0
    %2321 = vmatpush1.msra.mxu0 0.0
    %2322 = vmatprep.subr.mxu0 0.0
    %2323 = vmatpush1.msra.mxu0 0.0
    %2324 = vmatprep.subr.mxu0 0.0
    %2325 = vmatpush1.msra.mxu0 0.0
    %2326 = vmatprep.subr.mxu0 0.0
    %2327 = vmatpush1.msra.mxu0 0.0
    %2328 = vmatprep.subr.mxu0 0.0
    %2329 = vmatpush1.msra.mxu0 0.0
    %2330 = vmatprep.subr.mxu0 0.0
    %2331 = vmatpush1.msra.mxu0 0.0
    %2332 = vmatprep.subr.mxu0 0.0
    %2333 = vmatpush1.msra.mxu0 0.0
    %2334 = vmatprep.subr.mxu0 0.0
    %2335 = vmatpush1.msra.mxu0 0.0
    %2336 = vmatprep.subr.mxu0 0.0
    %2337 = vmatpush1.msra.mxu0 0.0
    %2338 = vmatprep.subr.mxu0 0.0
    %2339 = vmatpush1.msra.mxu0 0.0
    %2340 = vmatprep.subr.mxu0 0.0
    %2341 = vmatpush1.msra.mxu0 0.0
    %2342 = vmatprep.subr.mxu0 0.0
    %2343 = vmatpush1.msra.mxu0 0.0
    %2344 = vmatprep.subr.mxu0 0.0
    %2345 = vmatpush1.msra.mxu0 0.0
    %2346 = vmatprep.subr.mxu0 0.0
    %2347 = vmatpush1.msra.mxu0 0.0
    %2348 = vmatprep.subr.mxu0 0.0
    %2349 = vmatpush1.msra.mxu0 0.0
    %2350 = vmatprep.subr.mxu0 0.0
    %2351 = vmatpush1.msra.mxu0 0.0
    %2352 = vmatprep.subr.mxu0 0.0
    %2353 = vmatpush1.msra.mxu0 0.0
    %2354 = vmatprep.subr.mxu0 0.0
    %2355 = vmatpush1.msra.mxu0 0.0
    %2356 = vmatprep.subr.mxu0 0.0
    %2357 = vmatpush1.msra.mxu0 0.0
    %2358 = vmatprep.subr.mxu0 0.0
    %2359 = vmatpush1.msra.mxu0 0.0
    %2360 = vmatprep.mubr.f32.mxu0 0.0
    %2361 = vmatmul.mubr.f32.gmra.mrb[0].mxu0 %v2288
    %v2362 = vpop.f32.mrb[0].mxu0
    %v2363 = vadd.f32 %v2285, %v2362
    %v2364 = vpop.f32.mrb[0].mxu0
    %2365 = vmatprep.mubr.f32.mxu0 0.0
    %2366 = vmatmul.mubr.f32.gmra.mrb[0].mxu0 %v2291
    %v2367 = vpop.f32.mrb[0].mxu0
    %v2368 = vadd.f32 %v2285, %v2367
    %v2369 = vpop.f32.mrb[0].mxu0
    %2370 = vmatprep.mubr.f32.mxu0 0.0
    %2371 = vmatmul.mubr.f32.gmra.mrb[0].mxu0 %v2294
    %v2372 = vpop.f32.mrb[0].mxu0
    %v2373 = vadd.f32 %v2285, %v2372
    %v2374 = vpop.f32.mrb[0].mxu0
    %2375 = vdwg.mxu0
    %v2376 = vmul.f32 %v2363, %v2363
    %v2377 = vmul.f32 %v2368, %v2368
    %v2378 = vmul.f32 %v2373, %v2373
    %v2379 = vmul.f32 %v2363, %v2376
    %v2380 = vmul.f32 %v2368, %v2377
    %v2381 = vmul.f32 %v2373, %v2378
    %v2382 = vmul.f32 %v2379, 0.044715
    %v2383 = vmul.f32 %v2380, 0.044715
    %v2384 = vmul.f32 %v2381, 0.044715
    %v2385 = vadd.f32 %v2363, %v2382
    %v2386 = vadd.f32 %v2368, %v2383
    %v2387 = vadd.f32 %v2373, %v2384
    %v2388 = vmul.f32 %v2385, 0.7978846
    %v2389 = vmul.f32 %v2386, 0.7978846
    %v2390 = vmul.f32 %v2387, 0.7978846
    %v2391 = vtanh.pop %v2388
    %v2392 = vtanh.pop %v2389
    %v2393 = vtanh.pop %v2390
    %v2394 = vadd.f32 %v2391, 1.0
    %v2395 = vadd.f32 %v2392, 1.0
    %v2396 = vadd.f32 %v2393, 1.0
    %v2397 = vmul.f32 %v2394, 0.5
    %v2398 = vmul.f32 %v2395, 0.5
    %v2399 = vmul.f32 %v2396, 0.5
    %v2400 = vmul.f32 %v2363, %v2397
    %v2401 = vmul.f32 %v2368, %v2398
    %v2402 = vmul.f32 %v2373, %v2399
    %v2403 = vld [vmem:[%s15] sm:$0xff]
    %v2404 = vld [vmem:[%s15 + $0x8] sm:$0xff]
    %v2405 = vld [vmem:[%s15 + $0x10] sm:$0xff]
    %v2406 = vld [vmem:[%s15 + $0x18] sm:$0xff]
    %v2407 = vld [vmem:[%s15 + $0x20] sm:$0xff]
    %v2408 = vld [vmem:[%s15 + $0x28] sm:$0xff]
    %v2409 = vld [vmem:[%s15 + $0x30] sm:$0xff]
    %v2410 = vld [vmem:[%s15 + $0x38] sm:$0xff]
    %v2411 = vld [vmem:[%s15 + $0x40] sm:$0xff]
    %v2412 = vld [vmem:[%s15 + $0x48] sm:$0xff]
    %v2413 = vld [vmem:[%s15 + $0x50] sm:$0xff]
    %v2414 = vld [vmem:[%s15 + $0x58] sm:$0xff]
    %v2415 = vld [vmem:[%s15 + $0x60] sm:$0xff]
    %v2416 = vld [vmem:[%s15 + $0x68] sm:$0xff]
    %v2417 = vld [vmem:[%s15 + $0x70] sm:$0xff]
    %v2418 = vld [vmem:[%s15 + $0x78] sm:$0xff]
    %2419 = vmatprep.subr.mxu0 0.0
    %2420 = vmatpush1.msra.mxu0 %v2403
    %2421 = vmatprep.subr.mxu0 0.0
    %2422 = vmatpush1.msra.mxu0 %v2404
    %2423 = vmatprep.subr.mxu0 0.0
    %2424 = vmatpush1.msra.mxu0 %v2405
    %2425 = vmatprep.subr.mxu0 0.0
    %2426 = vmatpush1.msra.mxu0 %v2406
    %2427 = vmatprep.subr.mxu0 0.0
    %2428 = vmatpush1.msra.mxu0 %v2407
    %2429 = vmatprep.subr.mxu0 0.0
    %2430 = vmatpush1.msra.mxu0 %v2408
    %2431 = vmatprep.subr.mxu0 0.0
    %2432 = vmatpush1.msra.mxu0 %v2409
    %2433 = vmatprep.subr.mxu0 0.0
    %2434 = vmatpush1.msra.mxu0 %v2410
    %2435 = vmatprep.subr.mxu0 0.0
    %2436 = vmatpush1.msra.mxu0 %v2411
    %2437 = vmatprep.subr.mxu0 0.0
    %2438 = vmatpush1.msra.mxu0 %v2412
    %2439 = vmatprep.subr.mxu0 0.0
    %2440 = vmatpush1.msra.mxu0 %v2413
    %2441 = vmatprep.subr.mxu0 0.0
    %2442 = vmatpush1.msra.mxu0 %v2414
    %2443 = vmatprep.subr.mxu0 0.0
    %2444 = vmatpush1.msra.mxu0 %v2415
    %2445 = vmatprep.subr.mxu0 0.0
    %2446 = vmatpush1.msra.mxu0 %v2416
    %2447 = vmatprep.subr.mxu0 0.0
    %2448 = vmatpush1.msra.mxu0 %v2417
    %2449 = vmatprep.subr.mxu0 0.0
    %2450 = vmatpush1.msra.mxu0 %v2418
    %2451 = vmatprep.subr.mxu0 0.0
    %2452 = vmatpush1.msra.mxu0 0.0
    %2453 = vmatprep.subr.mxu0 0.0
    %2454 = vmatpush1.msra.mxu0 0.0
    %2455 = vmatprep.subr.mxu0 0.0
    %2456 = vmatpush1.msra.mxu0 0.0
    %2457 = vmatprep.subr.mxu0 0.0
    %2458 = vmatpush1.msra.mxu0 0.0
    %2459 = vmatprep.subr.mxu0 0.0
    %2460 = vmatpush1.msra.mxu0 0.0
    %2461 = vmatprep.subr.mxu0 0.0
    %2462 = vmatpush1.msra.mxu0 0.0
    %2463 = vmatprep.subr.mxu0 0.0
    %2464 = vmatpush1.msra.mxu0 0.0
    %2465 = vmatprep.subr.mxu0 0.0
    %2466 = vmatpush1.msra.mxu0 0.0
    %2467 = vmatprep.subr.mxu0 0.0
    %2468 = vmatpush1.msra.mxu0 0.0
    %2469 = vmatprep.subr.mxu0 0.0
    %2470 = vmatpush1.msra.mxu0 0.0
    %2471 = vmatprep.subr.mxu0 0.0
    %2472 = vmatpush1.msra.mxu0 0.0
    %2473 = vmatprep.subr.mxu0 0.0
    %2474 = vmatpush1.msra.mxu0 0.0
    %2475 = vmatprep.subr.mxu0 0.0
    %2476 = vmatpush1.msra.mxu0 0.0
    %2477 = vmatprep.subr.mxu0 0.0
    %2478 = vmatpush1.msra.mxu0 0.0
    %2479 = vmatprep.subr.mxu0 0.0
    %2480 = vmatpush1.msra.mxu0 0.0
    %2481 = vmatprep.subr.mxu0 0.0
    %2482 = vmatpush1.msra.mxu0 0.0
    %2483 = vmatprep.mubr.f32.mxu0 0.0
    %2484 = vmatmul.mubr.f32.gmra.mrb[0].mxu0 %v2400
    %v2485 = vpop.f32.mrb[0].mxu0
    %v2486 = vadd.f32 0.0, %v2485
    %v2487 = vpop.f32.mrb[0].mxu0
    %2488 = vmatprep.mubr.f32.mxu0 0.0
    %2489 = vmatmul.mubr.f32.gmra.mrb[0].mxu0 %v2401
    %v2490 = vpop.f32.mrb[0].mxu0
    %v2491 = vadd.f32 0.0, %v2490
    %v2492 = vpop.f32.mrb[0].mxu0
    %2493 = vmatprep.mubr.f32.mxu0 0.0
    %2494 = vmatmul.mubr.f32.gmra.mrb[0].mxu0 %v2402
    %v2495 = vpop.f32.mrb[0].mxu0
    %v2496 = vadd.f32 0.0, %v2495
    %v2497 = vpop.f32.mrb[0].mxu0
    %2498 = vdwg.mxu0
    %v2499 = vadd.f32 %v2214, %v2486
    %v2500 = vadd.f32 %v2215, %v2491
    %v2501 = vadd.f32 %v2216, %v2496
    %v2502 = vld [vmem:[%s16] sm:$0x1]
    %v2504 = vlaneseq
    %v2505 = vshrl.u32 %v2504, 7
    %v2506 = vsub.s32 0, %v2505
    %v2507 = vrot.slane %v2502, %v2506
    %v2509 = vadd.f32 %v2499, %v2507
    %v2510 = vadd.f32 %v2500, %v2507
    %v2511 = vadd.f32 %v2501, %v2507
    %s2512 = scalar_lea.vmem %s5, 1
    %v2513 = vld [vmem:[%s2512] sm:$0x1]
    %s2514 = scalar_lea.vmem %s6, 1
    %v2515 = vld [vmem:[%s2514] sm:$0x1]
    %v2516 = vsel %vm264, %v2509, 0.0
    %2517 = vadd.xlane.f32.xlu0 %v2516
    %v2518 = vpop.xlane.xlu0 %2517
    %v2519 = vsel %vm264, %v2510, 0.0
    %2520 = vadd.xlane.f32.xlu0 %v2519
    %v2521 = vpop.xlane.xlu0 %2520
    %v2522 = vsel %vm271, %v2511, 0.0
    %2523 = vadd.xlane.f32.xlu0 %v2522
    %v2524 = vpop.xlane.xlu0 %2523
    %v2525 = vmul.f32 %v2518, %v275
    %v2526 = vmul.f32 %v2521, %v275
    %v2527 = vmul.f32 %v2524, %v275
    %v2528 = vsub.f32 %v2509, %v2525
    %v2529 = vsub.f32 %v2510, %v2526
    %v2530 = vsub.f32 %v2511, %v2527
    %v2531 = vmul.f32 %v2528, %v2528
    %v2532 = vmul.f32 %v2529, %v2529
    %v2533 = vmul.f32 %v2530, %v2530
    %v2534 = vsel %vm264, %v2531, 0.0
    %2535 = vadd.xlane.f32.xlu0 %v2534
    %v2536 = vpop.xlane.xlu0 %2535
    %v2537 = vsel %vm264, %v2532, 0.0
    %2538 = vadd.xlane.f32.xlu0 %v2537
    %v2539 = vpop.xlane.xlu0 %2538
    %v2540 = vsel %vm271, %v2533, 0.0
    %2541 = vadd.xlane.f32.xlu0 %v2540
    %v2542 = vpop.xlane.xlu0 %2541
    %v2543 = vmul.f32 %v2536, %v275
    %v2544 = vmul.f32 %v2539, %v275
    %v2545 = vmul.f32 %v2542, %v275
    %v2546 = vadd.f32 %v2543, 1e-05
    %v2547 = vadd.f32 %v2544, 1e-05
    %v2548 = vadd.f32 %v2545, 1e-05
    %v2549 = vrsqrt.pop %v2546
    %v2550 = vrsqrt.pop %v2547
    %v2551 = vrsqrt.pop %v2548
    %v2552 = vmul.f32 %v2528, %v2549
    %v2553 = vmul.f32 %v2529, %v2550
    %v2554 = vmul.f32 %v2530, %v2551
    %v2556 = vlaneseq
    %v2557 = vshrl.u32 %v2556, 7
    %v2558 = vsub.s32 0, %v2557
    %v2559 = vrot.slane %v2513, %v2558
    %v2561 = vmul.f32 %v2552, %v2559
    %v2562 = vmul.f32 %v2553, %v2559
    %v2563 = vmul.f32 %v2554, %v2559
    %v2565 = vlaneseq
    %v2566 = vshrl.u32 %v2565, 7
    %v2567 = vsub.s32 0, %v2566
    %v2568 = vrot.slane %v2515, %v2567
    %v2570 = vadd.f32 %v2561, %v2568
    %v2571 = vadd.f32 %v2562, %v2568
    %v2572 = vadd.f32 %v2563, %v2568
    %s2573 = scalar_lea.vmem [#allocation5], 32
    %v2574 = vld [vmem:[%s2573] sm:$0xff]
    %v2575 = vld [vmem:[%s2573 + $0x8] sm:$0xff]
    %v2576 = vld [vmem:[%s2573 + $0x10] sm:$0xff]
    %v2577 = vld [vmem:[%s2573 + $0x18] sm:$0xff]
    %s2578 = scalar_lea.vmem %s8, 1
    %v2579 = vld [vmem:[%s2578] sm:$0x1]
    %v2581 = vlaneseq
    %v2582 = vshrl.u32 %v2581, 7
    %v2583 = vsub.s32 0, %v2582
    %v2584 = vrot.slane %v2579, %v2583
    %v2587 = vsel %vm264, %v2570, 0
    %v2590 = vsel %vm264, %v2571, 0
    %v2593 = vsel %vm264, %v2572, 0
    %2595 = vmatprep.subr.mxu0 0.0
    %2596 = vmatpush1.msra.mxu0 %v2574
    %2597 = vmatprep.subr.mxu0 0.0
    %2598 = vmatpush1.msra.mxu0 %v2575
    %2599 = vmatprep.subr.mxu0 0.0
    %2600 = vmatpush1.msra.mxu0 %v2576
    %2601 = vmatprep.subr.mxu0 0.0
    %2602 = vmatpush1.msra.mxu0 %v2577
    %2603 = vmatprep.subr.mxu0 0.0
    %2604 = vmatpush1.msra.mxu0 0.0
    %2605 = vmatprep.subr.mxu0 0.0
    %2606 = vmatpush1.msra.mxu0 0.0
    %2607 = vmatprep.subr.mxu0 0.0
    %2608 = vmatpush1.msra.mxu0 0.0
    %2609 = vmatprep.subr.mxu0 0.0
    %2610 = vmatpush1.msra.mxu0 0.0
    %2611 = vmatprep.subr.mxu0 0.0
    %2612 = vmatpush1.msra.mxu0 0.0
    %2613 = vmatprep.subr.mxu0 0.0
    %2614 = vmatpush1.msra.mxu0 0.0
    %2615 = vmatprep.subr.mxu0 0.0
    %2616 = vmatpush1.msra.mxu0 0.0
    %2617 = vmatprep.subr.mxu0 0.0
    %2618 = vmatpush1.msra.mxu0 0.0
    %2619 = vmatprep.subr.mxu0 0.0
    %2620 = vmatpush1.msra.mxu0 0.0
    %2621 = vmatprep.subr.mxu0 0.0
    %2622 = vmatpush1.msra.mxu0 0.0
    %2623 = vmatprep.subr.mxu0 0.0
    %2624 = vmatpush1.msra.mxu0 0.0
    %2625 = vmatprep.subr.mxu0 0.0
    %2626 = vmatpush1.msra.mxu0 0.0
    %2627 = vmatprep.subr.mxu0 0.0
    %2628 = vmatpush1.msra.mxu0 0.0
    %2629 = vmatprep.subr.mxu0 0.0
    %2630 = vmatpush1.msra.mxu0 0.0
    %2631 = vmatprep.subr.mxu0 0.0
    %2632 = vmatpush1.msra.mxu0 0.0
    %2633 = vmatprep.subr.mxu0 0.0
    %2634 = vmatpush1.msra.mxu0 0.0
    %2635 = vmatprep.subr.mxu0 0.0
    %2636 = vmatpush1.msra.mxu0 0.0
    %2637 = vmatprep.subr.mxu0 0.0
    %2638 = vmatpush1.msra.mxu0 0.0
    %2639 = vmatprep.subr.mxu0 0.0
    %2640 = vmatpush1.msra.mxu0 0.0
    %2641 = vmatprep.subr.mxu0 0.0
    %2642 = vmatpush1.msra.mxu0 0.0
    %2643 = vmatprep.subr.mxu0 0.0
    %2644 = vmatpush1.msra.mxu0 0.0
    %2645 = vmatprep.subr.mxu0 0.0
    %2646 = vmatpush1.msra.mxu0 0.0
    %2647 = vmatprep.subr.mxu0 0.0
    %2648 = vmatpush1.msra.mxu0 0.0
    %2649 = vmatprep.subr.mxu0 0.0
    %2650 = vmatpush1.msra.mxu0 0.0
    %2651 = vmatprep.subr.mxu0 0.0
    %2652 = vmatpush1.msra.mxu0 0.0
    %2653 = vmatprep.subr.mxu0 0.0
    %2654 = vmatpush1.msra.mxu0 0.0
    %2655 = vmatprep.subr.mxu0 0.0
    %2656 = vmatpush1.msra.mxu0 0.0
    %2657 = vmatprep.subr.mxu0 0.0
    %2658 = vmatpush1.msra.mxu0 0.0
    %2659 = vmatprep.mubr.f32.mxu0 0.0
    %2660 = vmatmul.mubr.f32.gmra.mrb[0].mxu0 %v2587
    %v2661 = vpop.f32.mrb[0].mxu0
    %v2662 = vadd.f32 %v2584, %v2661
    %v2663 = vpop.f32.mrb[0].mxu0
    %2664 = vmatprep.mubr.f32.mxu0 0.0
    %2665 = vmatmul.mubr.f32.gmra.mrb[0].mxu0 %v2590
    %v2666 = vpop.f32.mrb[0].mxu0
    %v2667 = vadd.f32 %v2584, %v2666
    %v2668 = vpop.f32.mrb[0].mxu0
    %2669 = vmatprep.mubr.f32.mxu0 0.0
    %2670 = vmatmul.mubr.f32.gmra.mrb[0].mxu0 %v2593
    %v2671 = vpop.f32.mrb[0].mxu0
    %v2672 = vadd.f32 %v2584, %v2671
    %v2673 = vpop.f32.mrb[0].mxu0
    %2674 = vdwg.mxu0
    %v2675 = vmul.f32 %v2662, 0.35355338
    %v2676 = vmul.f32 %v2667, 0.35355338
    %2679 = vrot.lane.b32.xlu0 %v2662, 96
    %v2680 = vpop.permute.xlu0 %2679
    %2681 = vrot.lane.b32.xlu0 %v2667, 96
    %v2682 = vpop.permute.xlu0 %2681
    %v2684 = vsel %vm432, %v2675, 0
    %v2687 = vsel %vm432, %v2676, 0
    %v2689 = vsel %vm432, %v2680, 0
    %v2691 = vsel %vm432, %v2682, 0
    %2693 = vmatprep.subr.mxu0 0.0
    %2694 = vmatpush1.xpose.msra.mxu0 %v2689
    %2695 = vmatprep.subr.mxu0 0.0
    %2696 = vmatpush1.xpose.msra.mxu0 %v2691
    %2697 = vmatprep.subr.mxu0 0.0
    %2698 = vmatpush1.xpose.msra.mxu0 0.0
    %2699 = vmatprep.subr.mxu0 0.0
    %2700 = vmatpush1.xpose.msra.mxu0 0.0
    %2701 = vmatprep.subr.mxu0 0.0
    %2702 = vmatpush1.xpose.msra.mxu0 0.0
    %2703 = vmatprep.subr.mxu0 0.0
    %2704 = vmatpush1.xpose.msra.mxu0 0.0
    %2705 = vmatprep.subr.mxu0 0.0
    %2706 = vmatpush1.xpose.msra.mxu0 0.0
    %2707 = vmatprep.subr.mxu0 0.0
    %2708 = vmatpush1.xpose.msra.mxu0 0.0
    %2709 = vmatprep.subr.mxu0 0.0
    %2710 = vmatpush1.xpose.msra.mxu0 0.0
    %2711 = vmatprep.subr.mxu0 0.0
    %2712 = vmatpush1.xpose.msra.mxu0 0.0
    %2713 = vmatprep.subr.mxu0 0.0
    %2714 = vmatpush1.xpose.msra.mxu0 0.0
    %2715 = vmatprep.subr.mxu0 0.0
    %2716 = vmatpush1.xpose.msra.mxu0 0.0
    %2717 = vmatprep.subr.mxu0 0.0
    %2718 = vmatpush1.xpose.msra.mxu0 0.0
    %2719 = vmatprep.subr.mxu0 0.0
    %2720 = vmatpush1.xpose.msra.mxu0 0.0
    %2721 = vmatprep.subr.mxu0 0.0
    %2722 = vmatpush1.xpose.msra.mxu0 0.0
    %2723 = vmatprep.subr.mxu0 0.0
    %2724 = vmatpush1.xpose.msra.mxu0 0.0
    %2725 = vmatprep.subr.mxu0 0.0
    %2726 = vmatpush1.xpose.msra.mxu0 0.0
    %2727 = vmatprep.subr.mxu0 0.0
    %2728 = vmatpush1.xpose.msra.mxu0 0.0
    %2729 = vmatprep.subr.mxu0 0.0
    %2730 = vmatpush1.xpose.msra.mxu0 0.0
    %2731 = vmatprep.subr.mxu0 0.0
    %2732 = vmatpush1.xpose.msra.mxu0 0.0
    %2733 = vmatprep.subr.mxu0 0.0
    %2734 = vmatpush1.xpose.msra.mxu0 0.0
    %2735 = vmatprep.subr.mxu0 0.0
    %2736 = vmatpush1.xpose.msra.mxu0 0.0
    %2737 = vmatprep.subr.mxu0 0.0
    %2738 = vmatpush1.xpose.msra.mxu0 0.0
    %2739 = vmatprep.subr.mxu0 0.0
    %2740 = vmatpush1.xpose.msra.mxu0 0.0
    %2741 = vmatprep.subr.mxu0 0.0
    %2742 = vmatpush1.xpose.msra.mxu0 0.0
    %2743 = vmatprep.subr.mxu0 0.0
    %2744 = vmatpush1.xpose.msra.mxu0 0.0
    %2745 = vmatprep.subr.mxu0 0.0
    %2746 = vmatpush1.xpose.msra.mxu0 0.0
    %2747 = vmatprep.subr.mxu0 0.0
    %2748 = vmatpush1.xpose.msra.mxu0 0.0
    %2749 = vmatprep.subr.mxu0 0.0
    %2750 = vmatpush1.xpose.msra.mxu0 0.0
    %2751 = vmatprep.subr.mxu0 0.0
    %2752 = vmatpush1.xpose.msra.mxu0 0.0
    %2753 = vmatprep.subr.mxu0 0.0
    %2754 = vmatpush1.xpose.msra.mxu0 0.0
    %2755 = vmatprep.subr.mxu0 0.0
    %2756 = vmatpush1.xpose.msra.mxu0 0.0
    %2757 = vmatprep.mubr.f32.mxu0 0.0
    %2758 = vmatmul.mubr.f32.gmra.mrb[0].mxu0 %v2684
    %v2759 = vpop.f32.mrb[0].mxu0
    %v2760 = vadd.f32 0.0, %v2759
    %v2761 = vpop.f32.mrb[0].mxu0
    %2762 = vmatprep.mubr.f32.mxu0 0.0
    %2763 = vmatmul.mubr.f32.gmra.mrb[0].mxu0 %v2687
    %v2764 = vpop.f32.mrb[0].mxu0
    %v2765 = vadd.f32 0.0, %v2764
    %v2766 = vpop.f32.mrb[0].mxu0
    %2767 = vdwg.mxu0
    %v2768 = vsel %vm518, %v2760, -inf
    %2769 = vmax.xlane.f32.xlu0 %v2768
    %v2770 = vpop.xlane.xlu0 %2769
    %v2771 = vsel %vm522, %v2765, -inf
    %2772 = vmax.xlane.f32.xlu0 %v2771
    %v2773 = vpop.xlane.xlu0 %2772
    %v2774 = vsub.f32 %v2760, %v2770
    %v2775 = vsub.f32 %v2765, %v2773
    %v2776 = vmul.f32 %v2774, 1.442695
    %v2777 = vpow.pop %v2776
    %v2778 = vmul.f32 %v2775, 1.442695
    %v2779 = vpow.pop %v2778
    %v2780 = vsel %vm518, %v2777, 0.0
    %2781 = vadd.xlane.f32.xlu0 %v2780
    %v2782 = vpop.xlane.xlu0 %2781
    %v2783 = vsel %vm522, %v2779, 0.0
    %2784 = vadd.xlane.f32.xlu0 %v2783
    %v2785 = vpop.xlane.xlu0 %2784
    %v2786 = vrcp.pop %v2782
    %v2787 = vrcp.pop %v2785
    %v2788 = vmul.f32 %v2777, %v2786
    %v2789 = vmul.f32 %v2779, %v2787
    %2790 = vrot.lane.b32.xlu0 %v2662, 64
    %v2791 = vpop.permute.xlu0 %2790
    %2792 = vrot.lane.b32.xlu0 %v2667, 64
    %v2793 = vpop.permute.xlu0 %2792
    %v2796 = vsel %vm518, %v2788, 0
    %v2799 = vsel %vm518, %v2789, 0
    %v2801 = vsel %vm242, %v2793, 0
    %2803 = vmatprep.subr.mxu0 0.0
    %2804 = vmatpush1.msra.mxu0 %v2791
    %2805 = vmatprep.subr.mxu0 0.0
    %2806 = vmatpush1.msra.mxu0 %v2801
    %2807 = vmatprep.subr.mxu0 0.0
    %2808 = vmatpush1.msra.mxu0 0.0
    %2809 = vmatprep.subr.mxu0 0.0
    %2810 = vmatpush1.msra.mxu0 0.0
    %2811 = vmatprep.subr.mxu0 0.0
    %2812 = vmatpush1.msra.mxu0 0.0
    %2813 = vmatprep.subr.mxu0 0.0
    %2814 = vmatpush1.msra.mxu0 0.0
    %2815 = vmatprep.subr.mxu0 0.0
    %2816 = vmatpush1.msra.mxu0 0.0
    %2817 = vmatprep.subr.mxu0 0.0
    %2818 = vmatpush1.msra.mxu0 0.0
    %2819 = vmatprep.subr.mxu0 0.0
    %2820 = vmatpush1.msra.mxu0 0.0
    %2821 = vmatprep.subr.mxu0 0.0
    %2822 = vmatpush1.msra.mxu0 0.0
    %2823 = vmatprep.subr.mxu0 0.0
    %2824 = vmatpush1.msra.mxu0 0.0
    %2825 = vmatprep.subr.mxu0 0.0
    %2826 = vmatpush1.msra.mxu0 0.0
    %2827 = vmatprep.subr.mxu0 0.0
    %2828 = vmatpush1.msra.mxu0 0.0
    %2829 = vmatprep.subr.mxu0 0.0
    %2830 = vmatpush1.msra.mxu0 0.0
    %2831 = vmatprep.subr.mxu0 0.0
    %2832 = vmatpush1.msra.mxu0 0.0
    %2833 = vmatprep.subr.mxu0 0.0
    %2834 = vmatpush1.msra.mxu0 0.0
    %2835 = vmatprep.subr.mxu0 0.0
    %2836 = vmatpush1.msra.mxu0 0.0
    %2837 = vmatprep.subr.mxu0 0.0
    %2838 = vmatpush1.msra.mxu0 0.0
    %2839 = vmatprep.subr.mxu0 0.0
    %2840 = vmatpush1.msra.mxu0 0.0
    %2841 = vmatprep.subr.mxu0 0.0
    %2842 = vmatpush1.msra.mxu0 0.0
    %2843 = vmatprep.subr.mxu0 0.0
    %2844 = vmatpush1.msra.mxu0 0.0
    %2845 = vmatprep.subr.mxu0 0.0
    %2846 = vmatpush1.msra.mxu0 0.0
    %2847 = vmatprep.subr.mxu0 0.0
    %2848 = vmatpush1.msra.mxu0 0.0
    %2849 = vmatprep.subr.mxu0 0.0
    %2850 = vmatpush1.msra.mxu0 0.0
    %2851 = vmatprep.subr.mxu0 0.0
    %2852 = vmatpush1.msra.mxu0 0.0
    %2853 = vmatprep.subr.mxu0 0.0
    %2854 = vmatpush1.msra.mxu0 0.0
    %2855 = vmatprep.subr.mxu0 0.0
    %2856 = vmatpush1.msra.mxu0 0.0
    %2857 = vmatprep.subr.mxu0 0.0
    %2858 = vmatpush1.msra.mxu0 0.0
    %2859 = vmatprep.subr.mxu0 0.0
    %2860 = vmatpush1.msra.mxu0 0.0
    %2861 = vmatprep.subr.mxu0 0.0
    %2862 = vmatpush1.msra.mxu0 0.0
    %2863 = vmatprep.subr.mxu0 0.0
    %2864 = vmatpush1.msra.mxu0 0.0
    %2865 = vmatprep.subr.mxu0 0.0
    %2866 = vmatpush1.msra.mxu0 0.0
    %2867 = vmatprep.mubr.f32.mxu0 0.0
    %2868 = vmatmul.mubr.f32.gmra.mrb[0].mxu0 %v2796
    %v2869 = vpop.f32.mrb[0].mxu0
    %v2870 = vadd.f32 0.0, %v2869
    %v2871 = vpop.f32.mrb[0].mxu0
    %2872 = vmatprep.mubr.f32.mxu0 0.0
    %2873 = vmatmul.mubr.f32.gmra.mrb[0].mxu0 %v2799
    %v2874 = vpop.f32.mrb[0].mxu0
    %v2875 = vadd.f32 0.0, %v2874
    %v2876 = vpop.f32.mrb[0].mxu0
    %2877 = vdwg.mxu0
    %2878 = vrot.lane.b32.xlu0 %v2675, 120
    %v2879 = vpop.permute.xlu0 %2878
    %2880 = vrot.lane.b32.xlu0 %v2676, 120
    %v2881 = vpop.permute.xlu0 %2880
    %2882 = vrot.lane.b32.xlu0 %v2662, 88
    %v2883 = vpop.permute.xlu0 %2882
    %2884 = vrot.lane.b32.xlu0 %v2667, 88
    %v2885 = vpop.permute.xlu0 %2884
    %v2886 = vsel %vm432, %v2879, 0
    %v2888 = vsel %vm432, %v2881, 0
    %v2890 = vsel %vm432, %v2883, 0
    %v2892 = vsel %vm432, %v2885, 0
    %2894 = vmatprep.subr.mxu0 0.0
    %2895 = vmatpush1.xpose.msra.mxu0 %v2890
    %2896 = vmatprep.subr.mxu0 0.0
    %2897 = vmatpush1.xpose.msra.mxu0 %v2892
    %2898 = vmatprep.subr.mxu0 0.0
    %2899 = vmatpush1.xpose.msra.mxu0 0.0
    %2900 = vmatprep.subr.mxu0 0.0
    %2901 = vmatpush1.xpose.msra.mxu0 0.0
    %2902 = vmatprep.subr.mxu0 0.0
    %2903 = vmatpush1.xpose.msra.mxu0 0.0
    %2904 = vmatprep.subr.mxu0 0.0
    %2905 = vmatpush1.xpose.msra.mxu0 0.0
    %2906 = vmatprep.subr.mxu0 0.0
    %2907 = vmatpush1.xpose.msra.mxu0 0.0
    %2908 = vmatprep.subr.mxu0 0.0
    %2909 = vmatpush1.xpose.msra.mxu0 0.0
    %2910 = vmatprep.subr.mxu0 0.0
    %2911 = vmatpush1.xpose.msra.mxu0 0.0
    %2912 = vmatprep.subr.mxu0 0.0
    %2913 = vmatpush1.xpose.msra.mxu0 0.0
    %2914 = vmatprep.subr.mxu0 0.0
    %2915 = vmatpush1.xpose.msra.mxu0 0.0
    %2916 = vmatprep.subr.mxu0 0.0
    %2917 = vmatpush1.xpose.msra.mxu0 0.0
    %2918 = vmatprep.subr.mxu0 0.0
    %2919 = vmatpush1.xpose.msra.mxu0 0.0
    %2920 = vmatprep.subr.mxu0 0.0
    %2921 = vmatpush1.xpose.msra.mxu0 0.0
    %2922 = vmatprep.subr.mxu0 0.0
    %2923 = vmatpush1.xpose.msra.mxu0 0.0
    %2924 = vmatprep.subr.mxu0 0.0
    %2925 = vmatpush1.xpose.msra.mxu0 0.0
    %2926 = vmatprep.subr.mxu0 0.0
    %2927 = vmatpush1.xpose.msra.mxu0 0.0
    %2928 = vmatprep.subr.mxu0 0.0
    %2929 = vmatpush1.xpose.msra.mxu0 0.0
    %2930 = vmatprep.subr.mxu0 0.0
    %2931 = vmatpush1.xpose.msra.mxu0 0.0
    %2932 = vmatprep.subr.mxu0 0.0
    %2933 = vmatpush1.xpose.msra.mxu0 0.0
    %2934 = vmatprep.subr.mxu0 0.0
    %2935 = vmatpush1.xpose.msra.mxu0 0.0
    %2936 = vmatprep.subr.mxu0 0.0
    %2937 = vmatpush1.xpose.msra.mxu0 0.0
    %2938 = vmatprep.subr.mxu0 0.0
    %2939 = vmatpush1.xpose.msra.mxu0 0.0
    %2940 = vmatprep.subr.mxu0 0.0
    %2941 = vmatpush1.xpose.msra.mxu0 0.0
    %2942 = vmatprep.subr.mxu0 0.0
    %2943 = vmatpush1.xpose.msra.mxu0 0.0
    %2944 = vmatprep.subr.mxu0 0.0
    %2945 = vmatpush1.xpose.msra.mxu0 0.0
    %2946 = vmatprep.subr.mxu0 0.0
    %2947 = vmatpush1.xpose.msra.mxu0 0.0
    %2948 = vmatprep.subr.mxu0 0.0
    %2949 = vmatpush1.xpose.msra.mxu0 0.0
    %2950 = vmatprep.subr.mxu0 0.0
    %2951 = vmatpush1.xpose.msra.mxu0 0.0
    %2952 = vmatprep.subr.mxu0 0.0
    %2953 = vmatpush1.xpose.msra.mxu0 0.0
    %2954 = vmatprep.subr.mxu0 0.0
    %2955 = vmatpush1.xpose.msra.mxu0 0.0
    %2956 = vmatprep.subr.mxu0 0.0
    %2957 = vmatpush1.xpose.msra.mxu0 0.0
    %2958 = vmatprep.mubr.f32.mxu0 0.0
    %2959 = vmatmul.mubr.f32.gmra.mrb[0].mxu0 %v2886
    %v2960 = vpop.f32.mrb[0].mxu0
    %v2961 = vadd.f32 0.0, %v2960
    %v2962 = vpop.f32.mrb[0].mxu0
    %2963 = vmatprep.mubr.f32.mxu0 0.0
    %2964 = vmatmul.mubr.f32.gmra.mrb[0].mxu0 %v2888
    %v2965 = vpop.f32.mrb[0].mxu0
    %v2966 = vadd.f32 0.0, %v2965
    %v2967 = vpop.f32.mrb[0].mxu0
    %2968 = vdwg.mxu0
    %v2969 = vsel %vm518, %v2961, -inf
    %2970 = vmax.xlane.f32.xlu0 %v2969
    %v2971 = vpop.xlane.xlu0 %2970
    %v2972 = vsel %vm522, %v2966, -inf
    %2973 = vmax.xlane.f32.xlu0 %v2972
    %v2974 = vpop.xlane.xlu0 %2973
    %v2975 = vsub.f32 %v2961, %v2971
    %v2976 = vsub.f32 %v2966, %v2974
    %v2977 = vmul.f32 %v2975, 1.442695
    %v2978 = vpow.pop %v2977
    %v2979 = vmul.f32 %v2976, 1.442695
    %v2980 = vpow.pop %v2979
    %v2981 = vsel %vm518, %v2978, 0.0
    %2982 = vadd.xlane.f32.xlu0 %v2981
    %v2983 = vpop.xlane.xlu0 %2982
    %v2984 = vsel %vm522, %v2980, 0.0
    %2985 = vadd.xlane.f32.xlu0 %v2984
    %v2986 = vpop.xlane.xlu0 %2985
    %v2987 = vrcp.pop %v2983
    %v2988 = vrcp.pop %v2986
    %v2989 = vmul.f32 %v2978, %v2987
    %v2990 = vmul.f32 %v2980, %v2988
    %2991 = vrot.lane.b32.xlu0 %v2662, 56
    %v2992 = vpop.permute.xlu0 %2991
    %2993 = vrot.lane.b32.xlu0 %v2667, 56
    %v2994 = vpop.permute.xlu0 %2993
    %v2997 = vsel %vm518, %v2989, 0
    %v3000 = vsel %vm518, %v2990, 0
    %v3002 = vsel %vm242, %v2994, 0
    %3004 = vmatprep.subr.mxu0 0.0
    %3005 = vmatpush1.msra.mxu0 %v2992
    %3006 = vmatprep.subr.mxu0 0.0
    %3007 = vmatpush1.msra.mxu0 %v3002
    %3008 = vmatprep.subr.mxu0 0.0
    %3009 = vmatpush1.msra.mxu0 0.0
    %3010 = vmatprep.subr.mxu0 0.0
    %3011 = vmatpush1.msra.mxu0 0.0
    %3012 = vmatprep.subr.mxu0 0.0
    %3013 = vmatpush1.msra.mxu0 0.0
    %3014 = vmatprep.subr.mxu0 0.0
    %3015 = vmatpush1.msra.mxu0 0.0
    %3016 = vmatprep.subr.mxu0 0.0
    %3017 = vmatpush1.msra.mxu0 0.0
    %3018 = vmatprep.subr.mxu0 0.0
    %3019 = vmatpush1.msra.mxu0 0.0
    %3020 = vmatprep.subr.mxu0 0.0
    %3021 = vmatpush1.msra.mxu0 0.0
    %3022 = vmatprep.subr.mxu0 0.0
    %3023 = vmatpush1.msra.mxu0 0.0
    %3024 = vmatprep.subr.mxu0 0.0
    %3025 = vmatpush1.msra.mxu0 0.0
    %3026 = vmatprep.subr.mxu0 0.0
    %3027 = vmatpush1.msra.mxu0 0.0
    %3028 = vmatprep.subr.mxu0 0.0
    %3029 = vmatpush1.msra.mxu0 0.0
    %3030 = vmatprep.subr.mxu0 0.0
    %3031 = vmatpush1.msra.mxu0 0.0
    %3032 = vmatprep.subr.mxu0 0.0
    %3033 = vmatpush1.msra.mxu0 0.0
    %3034 = vmatprep.subr.mxu0 0.0
    %3035 = vmatpush1.msra.mxu0 0.0
    %3036 = vmatprep.subr.mxu0 0.0
    %3037 = vmatpush1.msra.mxu0 0.0
    %3038 = vmatprep.subr.mxu0 0.0
    %3039 = vmatpush1.msra.mxu0 0.0
    %3040 = vmatprep.subr.mxu0 0.0
    %3041 = vmatpush1.msra.mxu0 0.0
    %3042 = vmatprep.subr.mxu0 0.0
    %3043 = vmatpush1.msra.mxu0 0.0
    %3044 = vmatprep.subr.mxu0 0.0
    %3045 = vmatpush1.msra.mxu0 0.0
    %3046 = vmatprep.subr.mxu0 0.0
    %3047 = vmatpush1.msra.mxu0 0.0
    %3048 = vmatprep.subr.mxu0 0.0
    %3049 = vmatpush1.msra.mxu0 0.0
    %3050 = vmatprep.subr.mxu0 0.0
    %3051 = vmatpush1.msra.mxu0 0.0
    %3052 = vmatprep.subr.mxu0 0.0
    %3053 = vmatpush1.msra.mxu0 0.0
    %3054 = vmatprep.subr.mxu0 0.0
    %3055 = vmatpush1.msra.mxu0 0.0
    %3056 = vmatprep.subr.mxu0 0.0
    %3057 = vmatpush1.msra.mxu0 0.0
    %3058 = vmatprep.subr.mxu0 0.0
    %3059 = vmatpush1.msra.mxu0 0.0
    %3060 = vmatprep.subr.mxu0 0.0
    %3061 = vmatpush1.msra.mxu0 0.0
    %3062 = vmatprep.subr.mxu0 0.0
    %3063 = vmatpush1.msra.mxu0 0.0
    %3064 = vmatprep.subr.mxu0 0.0
    %3065 = vmatpush1.msra.mxu0 0.0
    %3066 = vmatprep.subr.mxu0 0.0
    %3067 = vmatpush1.msra.mxu0 0.0
    %3068 = vmatprep.mubr.f32.mxu0 0.0
    %3069 = vmatmul.mubr.f32.gmra.mrb[0].mxu0 %v2997
    %v3070 = vpop.f32.mrb[0].mxu0
    %v3071 = vadd.f32 0.0, %v3070
    %v3072 = vpop.f32.mrb[0].mxu0
    %3073 = vmatprep.mubr.f32.mxu0 0.0
    %3074 = vmatmul.mubr.f32.gmra.mrb[0].mxu0 %v3000
    %v3075 = vpop.f32.mrb[0].mxu0
    %v3076 = vadd.f32 0.0, %v3075
    %v3077 = vpop.f32.mrb[0].mxu0
    %3078 = vdwg.mxu0
    %3079 = vrot.lane.b32.xlu0 %v2675, 112
    %v3080 = vpop.permute.xlu0 %3079
    %3081 = vrot.lane.b32.xlu0 %v2676, 112
    %v3082 = vpop.permute.xlu0 %3081
    %3083 = vrot.lane.b32.xlu0 %v2662, 80
    %v3084 = vpop.permute.xlu0 %3083
    %3085 = vrot.lane.b32.xlu0 %v2667, 80
    %v3086 = vpop.permute.xlu0 %3085
    %v3087 = vsel %vm432, %v3080, 0
    %v3089 = vsel %vm432, %v3082, 0
    %v3091 = vsel %vm432, %v3084, 0
    %v3093 = vsel %vm432, %v3086, 0
    %3095 = vmatprep.subr.mxu0 0.0
    %3096 = vmatpush1.xpose.msra.mxu0 %v3091
    %3097 = vmatprep.subr.mxu0 0.0
    %3098 = vmatpush1.xpose.msra.mxu0 %v3093
    %3099 = vmatprep.subr.mxu0 0.0
    %3100 = vmatpush1.xpose.msra.mxu0 0.0
    %3101 = vmatprep.subr.mxu0 0.0
    %3102 = vmatpush1.xpose.msra.mxu0 0.0
    %3103 = vmatprep.subr.mxu0 0.0
    %3104 = vmatpush1.xpose.msra.mxu0 0.0
    %3105 = vmatprep.subr.mxu0 0.0
    %3106 = vmatpush1.xpose.msra.mxu0 0.0
    %3107 = vmatprep.subr.mxu0 0.0
    %3108 = vmatpush1.xpose.msra.mxu0 0.0
    %3109 = vmatprep.subr.mxu0 0.0
    %3110 = vmatpush1.xpose.msra.mxu0 0.0
    %3111 = vmatprep.subr.mxu0 0.0
    %3112 = vmatpush1.xpose.msra.mxu0 0.0
    %3113 = vmatprep.subr.mxu0 0.0
    %3114 = vmatpush1.xpose.msra.mxu0 0.0
    %3115 = vmatprep.subr.mxu0 0.0
    %3116 = vmatpush1.xpose.msra.mxu0 0.0
    %3117 = vmatprep.subr.mxu0 0.0
    %3118 = vmatpush1.xpose.msra.mxu0 0.0
    %3119 = vmatprep.subr.mxu0 0.0
    %3120 = vmatpush1.xpose.msra.mxu0 0.0
    %3121 = vmatprep.subr.mxu0 0.0
    %3122 = vmatpush1.xpose.msra.mxu0 0.0
    %3123 = vmatprep.subr.mxu0 0.0
    %3124 = vmatpush1.xpose.msra.mxu0 0.0
    %3125 = vmatprep.subr.mxu0 0.0
    %3126 = vmatpush1.xpose.msra.mxu0 0.0
    %3127 = vmatprep.subr.mxu0 0.0
    %3128 = vmatpush1.xpose.msra.mxu0 0.0
    %3129 = vmatprep.subr.mxu0 0.0
    %3130 = vmatpush1.xpose.msra.mxu0 0.0
    %3131 = vmatprep.subr.mxu0 0.0
    %3132 = vmatpush1.xpose.msra.mxu0 0.0
    %3133 = vmatprep.subr.mxu0 0.0
    %3134 = vmatpush1.xpose.msra.mxu0 0.0
    %3135 = vmatprep.subr.mxu0 0.0
    %3136 = vmatpush1.xpose.msra.mxu0 0.0
    %3137 = vmatprep.subr.mxu0 0.0
    %3138 = vmatpush1.xpose.msra.mxu0 0.0
    %3139 = vmatprep.subr.mxu0 0.0
    %3140 = vmatpush1.xpose.msra.mxu0 0.0
    %3141 = vmatprep.subr.mxu0 0.0
    %3142 = vmatpush1.xpose.msra.mxu0 0.0
    %3143 = vmatprep.subr.mxu0 0.0
    %3144 = vmatpush1.xpose.msra.mxu0 0.0
    %3145 = vmatprep.subr.mxu0 0.0
    %3146 = vmatpush1.xpose.msra.mxu0 0.0
    %3147 = vmatprep.subr.mxu0 0.0
    %3148 = vmatpush1.xpose.msra.mxu0 0.0
    %3149 = vmatprep.subr.mxu0 0.0
    %3150 = vmatpush1.xpose.msra.mxu0 0.0
    %3151 = vmatprep.subr.mxu0 0.0
    %3152 = vmatpush1.xpose.msra.mxu0 0.0
    %3153 = vmatprep.subr.mxu0 0.0
    %3154 = vmatpush1.xpose.msra.mxu0 0.0
    %3155 = vmatprep.subr.mxu0 0.0
    %3156 = vmatpush1.xpose.msra.mxu0 0.0
    %3157 = vmatprep.subr.mxu0 0.0
    %3158 = vmatpush1.xpose.msra.mxu0 0.0
    %3159 = vmatprep.mubr.f32.mxu0 0.0
    %3160 = vmatmul.mubr.f32.gmra.mrb[0].mxu0 %v3087
    %v3161 = vpop.f32.mrb[0].mxu0
    %v3162 = vadd.f32 0.0, %v3161
    %v3163 = vpop.f32.mrb[0].mxu0
    %3164 = vmatprep.mubr.f32.mxu0 0.0
    %3165 = vmatmul.mubr.f32.gmra.mrb[0].mxu0 %v3089
    %v3166 = vpop.f32.mrb[0].mxu0
    %v3167 = vadd.f32 0.0, %v3166
    %v3168 = vpop.f32.mrb[0].mxu0
    %3169 = vdwg.mxu0
    %v3170 = vsel %vm518, %v3162, -inf
    %3171 = vmax.xlane.f32.xlu0 %v3170
    %v3172 = vpop.xlane.xlu0 %3171
    %v3173 = vsel %vm522, %v3167, -inf
    %3174 = vmax.xlane.f32.xlu0 %v3173
    %v3175 = vpop.xlane.xlu0 %3174
    %v3176 = vsub.f32 %v3162, %v3172
    %v3177 = vsub.f32 %v3167, %v3175
    %v3178 = vmul.f32 %v3176, 1.442695
    %v3179 = vpow.pop %v3178
    %v3180 = vmul.f32 %v3177, 1.442695
    %v3181 = vpow.pop %v3180
    %v3182 = vsel %vm518, %v3179, 0.0
    %3183 = vadd.xlane.f32.xlu0 %v3182
    %v3184 = vpop.xlane.xlu0 %3183
    %v3185 = vsel %vm522, %v3181, 0.0
    %3186 = vadd.xlane.f32.xlu0 %v3185
    %v3187 = vpop.xlane.xlu0 %3186
    %v3188 = vrcp.pop %v3184
    %v3189 = vrcp.pop %v3187
    %v3190 = vmul.f32 %v3179, %v3188
    %v3191 = vmul.f32 %v3181, %v3189
    %3192 = vrot.lane.b32.xlu0 %v2662, 48
    %v3193 = vpop.permute.xlu0 %3192
    %3194 = vrot.lane.b32.xlu0 %v2667, 48
    %v3195 = vpop.permute.xlu0 %3194
    %v3198 = vsel %vm518, %v3190, 0
    %v3201 = vsel %vm518, %v3191, 0
    %v3203 = vsel %vm242, %v3195, 0
    %3205 = vmatprep.subr.mxu0 0.0
    %3206 = vmatpush1.msra.mxu0 %v3193
    %3207 = vmatprep.subr.mxu0 0.0
    %3208 = vmatpush1.msra.mxu0 %v3203
    %3209 = vmatprep.subr.mxu0 0.0
    %3210 = vmatpush1.msra.mxu0 0.0
    %3211 = vmatprep.subr.mxu0 0.0
    %3212 = vmatpush1.msra.mxu0 0.0
    %3213 = vmatprep.subr.mxu0 0.0
    %3214 = vmatpush1.msra.mxu0 0.0
    %3215 = vmatprep.subr.mxu0 0.0
    %3216 = vmatpush1.msra.mxu0 0.0
    %3217 = vmatprep.subr.mxu0 0.0
    %3218 = vmatpush1.msra.mxu0 0.0
    %3219 = vmatprep.subr.mxu0 0.0
    %3220 = vmatpush1.msra.mxu0 0.0
    %3221 = vmatprep.subr.mxu0 0.0
    %3222 = vmatpush1.msra.mxu0 0.0
    %3223 = vmatprep.subr.mxu0 0.0
    %3224 = vmatpush1.msra.mxu0 0.0
    %3225 = vmatprep.subr.mxu0 0.0
    %3226 = vmatpush1.msra.mxu0 0.0
    %3227 = vmatprep.subr.mxu0 0.0
    %3228 = vmatpush1.msra.mxu0 0.0
    %3229 = vmatprep.subr.mxu0 0.0
    %3230 = vmatpush1.msra.mxu0 0.0
    %3231 = vmatprep.subr.mxu0 0.0
    %3232 = vmatpush1.msra.mxu0 0.0
    %3233 = vmatprep.subr.mxu0 0.0
    %3234 = vmatpush1.msra.mxu0 0.0
    %3235 = vmatprep.subr.mxu0 0.0
    %3236 = vmatpush1.msra.mxu0 0.0
    %3237 = vmatprep.subr.mxu0 0.0
    %3238 = vmatpush1.msra.mxu0 0.0
    %3239 = vmatprep.subr.mxu0 0.0
    %3240 = vmatpush1.msra.mxu0 0.0
    %3241 = vmatprep.subr.mxu0 0.0
    %3242 = vmatpush1.msra.mxu0 0.0
    %3243 = vmatprep.subr.mxu0 0.0
    %3244 = vmatpush1.msra.mxu0 0.0
    %3245 = vmatprep.subr.mxu0 0.0
    %3246 = vmatpush1.msra.mxu0 0.0
    %3247 = vmatprep.subr.mxu0 0.0
    %3248 = vmatpush1.msra.mxu0 0.0
    %3249 = vmatprep.subr.mxu0 0.0
    %3250 = vmatpush1.msra.mxu0 0.0
    %3251 = vmatprep.subr.mxu0 0.0
    %3252 = vmatpush1.msra.mxu0 0.0
    %3253 = vmatprep.subr.mxu0 0.0
    %3254 = vmatpush1.msra.mxu0 0.0
    %3255 = vmatprep.subr.mxu0 0.0
    %3256 = vmatpush1.msra.mxu0 0.0
    %3257 = vmatprep.subr.mxu0 0.0
    %3258 = vmatpush1.msra.mxu0 0.0
    %3259 = vmatprep.subr.mxu0 0.0
    %3260 = vmatpush1.msra.mxu0 0.0
    %3261 = vmatprep.subr.mxu0 0.0
    %3262 = vmatpush1.msra.mxu0 0.0
    %3263 = vmatprep.subr.mxu0 0.0
    %3264 = vmatpush1.msra.mxu0 0.0
    %3265 = vmatprep.subr.mxu0 0.0
    %3266 = vmatpush1.msra.mxu0 0.0
    %3267 = vmatprep.subr.mxu0 0.0
    %3268 = vmatpush1.msra.mxu0 0.0
    %3269 = vmatprep.mubr.f32.mxu0 0.0
    %3270 = vmatmul.mubr.f32.gmra.mrb[0].mxu0 %v3198
    %v3271 = vpop.f32.mrb[0].mxu0
    %v3272 = vadd.f32 0.0, %v3271
    %v3273 = vpop.f32.mrb[0].mxu0
    %3274 = vmatprep.mubr.f32.mxu0 0.0
    %3275 = vmatmul.mubr.f32.gmra.mrb[0].mxu0 %v3201
    %v3276 = vpop.f32.mrb[0].mxu0
    %v3277 = vadd.f32 0.0, %v3276
    %v3278 = vpop.f32.mrb[0].mxu0
    %3279 = vdwg.mxu0
    %3280 = vrot.lane.b32.xlu0 %v2675, 104
    %v3281 = vpop.permute.xlu0 %3280
    %3282 = vrot.lane.b32.xlu0 %v2676, 104
    %v3283 = vpop.permute.xlu0 %3282
    %3284 = vrot.lane.b32.xlu0 %v2662, 72
    %v3285 = vpop.permute.xlu0 %3284
    %3286 = vrot.lane.b32.xlu0 %v2667, 72
    %v3287 = vpop.permute.xlu0 %3286
    %v3288 = vsel %vm432, %v3281, 0
    %v3290 = vsel %vm432, %v3283, 0
    %v3292 = vsel %vm432, %v3285, 0
    %v3294 = vsel %vm432, %v3287, 0
    %3296 = vmatprep.subr.mxu0 0.0
    %3297 = vmatpush1.xpose.msra.mxu0 %v3292
    %3298 = vmatprep.subr.mxu0 0.0
    %3299 = vmatpush1.xpose.msra.mxu0 %v3294
    %3300 = vmatprep.subr.mxu0 0.0
    %3301 = vmatpush1.xpose.msra.mxu0 0.0
    %3302 = vmatprep.subr.mxu0 0.0
    %3303 = vmatpush1.xpose.msra.mxu0 0.0
    %3304 = vmatprep.subr.mxu0 0.0
    %3305 = vmatpush1.xpose.msra.mxu0 0.0
    %3306 = vmatprep.subr.mxu0 0.0
    %3307 = vmatpush1.xpose.msra.mxu0 0.0
    %3308 = vmatprep.subr.mxu0 0.0
    %3309 = vmatpush1.xpose.msra.mxu0 0.0
    %3310 = vmatprep.subr.mxu0 0.0
    %3311 = vmatpush1.xpose.msra.mxu0 0.0
    %3312 = vmatprep.subr.mxu0 0.0
    %3313 = vmatpush1.xpose.msra.mxu0 0.0
    %3314 = vmatprep.subr.mxu0 0.0
    %3315 = vmatpush1.xpose.msra.mxu0 0.0
    %3316 = vmatprep.subr.mxu0 0.0
    %3317 = vmatpush1.xpose.msra.mxu0 0.0
    %3318 = vmatprep.subr.mxu0 0.0
    %3319 = vmatpush1.xpose.msra.mxu0 0.0
    %3320 = vmatprep.subr.mxu0 0.0
    %3321 = vmatpush1.xpose.msra.mxu0 0.0
    %3322 = vmatprep.subr.mxu0 0.0
    %3323 = vmatpush1.xpose.msra.mxu0 0.0
    %3324 = vmatprep.subr.mxu0 0.0
    %3325 = vmatpush1.xpose.msra.mxu0 0.0
    %3326 = vmatprep.subr.mxu0 0.0
    %3327 = vmatpush1.xpose.msra.mxu0 0.0
    %3328 = vmatprep.subr.mxu0 0.0
    %3329 = vmatpush1.xpose.msra.mxu0 0.0
    %3330 = vmatprep.subr.mxu0 0.0
    %3331 = vmatpush1.xpose.msra.mxu0 0.0
    %3332 = vmatprep.subr.mxu0 0.0
    %3333 = vmatpush1.xpose.msra.mxu0 0.0
    %3334 = vmatprep.subr.mxu0 0.0
    %3335 = vmatpush1.xpose.msra.mxu0 0.0
    %3336 = vmatprep.subr.mxu0 0.0
    %3337 = vmatpush1.xpose.msra.mxu0 0.0
    %3338 = vmatprep.subr.mxu0 0.0
    %3339 = vmatpush1.xpose.msra.mxu0 0.0
    %3340 = vmatprep.subr.mxu0 0.0
    %3341 = vmatpush1.xpose.msra.mxu0 0.0
    %3342 = vmatprep.subr.mxu0 0.0
    %3343 = vmatpush1.xpose.msra.mxu0 0.0
    %3344 = vmatprep.subr.mxu0 0.0
    %3345 = vmatpush1.xpose.msra.mxu0 0.0
    %3346 = vmatprep.subr.mxu0 0.0
    %3347 = vmatpush1.xpose.msra.mxu0 0.0
    %3348 = vmatprep.subr.mxu0 0.0
    %3349 = vmatpush1.xpose.msra.mxu0 0.0
    %3350 = vmatprep.subr.mxu0 0.0
    %3351 = vmatpush1.xpose.msra.mxu0 0.0
    %3352 = vmatprep.subr.mxu0 0.0
    %3353 = vmatpush1.xpose.msra.mxu0 0.0
    %3354 = vmatprep.subr.mxu0 0.0
    %3355 = vmatpush1.xpose.msra.mxu0 0.0
    %3356 = vmatprep.subr.mxu0 0.0
    %3357 = vmatpush1.xpose.msra.mxu0 0.0
    %3358 = vmatprep.subr.mxu0 0.0
    %3359 = vmatpush1.xpose.msra.mxu0 0.0
    %3360 = vmatprep.mubr.f32.mxu0 0.0
    %3361 = vmatmul.mubr.f32.gmra.mrb[0].mxu0 %v3288
    %v3362 = vpop.f32.mrb[0].mxu0
    %v3363 = vadd.f32 0.0, %v3362
    %v3364 = vpop.f32.mrb[0].mxu0
    %3365 = vmatprep.mubr.f32.mxu0 0.0
    %3366 = vmatmul.mubr.f32.gmra.mrb[0].mxu0 %v3290
    %v3367 = vpop.f32.mrb[0].mxu0
    %v3368 = vadd.f32 0.0, %v3367
    %v3369 = vpop.f32.mrb[0].mxu0
    %3370 = vdwg.mxu0
    %v3371 = vsel %vm518, %v3363, -inf
    %3372 = vmax.xlane.f32.xlu0 %v3371
    %v3373 = vpop.xlane.xlu0 %3372
    %v3374 = vsel %vm522, %v3368, -inf
    %3375 = vmax.xlane.f32.xlu0 %v3374
    %v3376 = vpop.xlane.xlu0 %3375
    %v3377 = vsub.f32 %v3363, %v3373
    %v3378 = vsub.f32 %v3368, %v3376
    %v3379 = vmul.f32 %v3377, 1.442695
    %v3380 = vpow.pop %v3379
    %v3381 = vmul.f32 %v3378, 1.442695
    %v3382 = vpow.pop %v3381
    %v3383 = vsel %vm518, %v3380, 0.0
    %3384 = vadd.xlane.f32.xlu0 %v3383
    %v3385 = vpop.xlane.xlu0 %3384
    %v3386 = vsel %vm522, %v3382, 0.0
    %3387 = vadd.xlane.f32.xlu0 %v3386
    %v3388 = vpop.xlane.xlu0 %3387
    %v3389 = vrcp.pop %v3385
    %v3390 = vrcp.pop %v3388
    %v3391 = vmul.f32 %v3380, %v3389
    %v3392 = vmul.f32 %v3382, %v3390
    %3393 = vrot.lane.b32.xlu0 %v2662, 40
    %v3394 = vpop.permute.xlu0 %3393
    %3395 = vrot.lane.b32.xlu0 %v2667, 40
    %v3396 = vpop.permute.xlu0 %3395
    %v3399 = vsel %vm518, %v3391, 0
    %v3402 = vsel %vm518, %v3392, 0
    %v3404 = vsel %vm242, %v3396, 0
    %3406 = vmatprep.subr.mxu0 0.0
    %3407 = vmatpush1.msra.mxu0 %v3394
    %3408 = vmatprep.subr.mxu0 0.0
    %3409 = vmatpush1.msra.mxu0 %v3404
    %3410 = vmatprep.subr.mxu0 0.0
    %3411 = vmatpush1.msra.mxu0 0.0
    %3412 = vmatprep.subr.mxu0 0.0
    %3413 = vmatpush1.msra.mxu0 0.0
    %3414 = vmatprep.subr.mxu0 0.0
    %3415 = vmatpush1.msra.mxu0 0.0
    %3416 = vmatprep.subr.mxu0 0.0
    %3417 = vmatpush1.msra.mxu0 0.0
    %3418 = vmatprep.subr.mxu0 0.0
    %3419 = vmatpush1.msra.mxu0 0.0
    %3420 = vmatprep.subr.mxu0 0.0
    %3421 = vmatpush1.msra.mxu0 0.0
    %3422 = vmatprep.subr.mxu0 0.0
    %3423 = vmatpush1.msra.mxu0 0.0
    %3424 = vmatprep.subr.mxu0 0.0
    %3425 = vmatpush1.msra.mxu0 0.0
    %3426 = vmatprep.subr.mxu0 0.0
    %3427 = vmatpush1.msra.mxu0 0.0
    %3428 = vmatprep.subr.mxu0 0.0
    %3429 = vmatpush1.msra.mxu0 0.0
    %3430 = vmatprep.subr.mxu0 0.0
    %3431 = vmatpush1.msra.mxu0 0.0
    %3432 = vmatprep.subr.mxu0 0.0
    %3433 = vmatpush1.msra.mxu0 0.0
    %3434 = vmatprep.subr.mxu0 0.0
    %3435 = vmatpush1.msra.mxu0 0.0
    %3436 = vmatprep.subr.mxu0 0.0
    %3437 = vmatpush1.msra.mxu0 0.0
    %3438 = vmatprep.subr.mxu0 0.0
    %3439 = vmatpush1.msra.mxu0 0.0
    %3440 = vmatprep.subr.mxu0 0.0
    %3441 = vmatpush1.msra.mxu0 0.0
    %3442 = vmatprep.subr.mxu0 0.0
    %3443 = vmatpush1.msra.mxu0 0.0
    %3444 = vmatprep.subr.mxu0 0.0
    %3445 = vmatpush1.msra.mxu0 0.0
    %3446 = vmatprep.subr.mxu0 0.0
    %3447 = vmatpush1.msra.mxu0 0.0
    %3448 = vmatprep.subr.mxu0 0.0
    %3449 = vmatpush1.msra.mxu0 0.0
    %3450 = vmatprep.subr.mxu0 0.0
    %3451 = vmatpush1.msra.mxu0 0.0
    %3452 = vmatprep.subr.mxu0 0.0
    %3453 = vmatpush1.msra.mxu0 0.0
    %3454 = vmatprep.subr.mxu0 0.0
    %3455 = vmatpush1.msra.mxu0 0.0
    %3456 = vmatprep.subr.mxu0 0.0
    %3457 = vmatpush1.msra.mxu0 0.0
    %3458 = vmatprep.subr.mxu0 0.0
    %3459 = vmatpush1.msra.mxu0 0.0
    %3460 = vmatprep.subr.mxu0 0.0
    %3461 = vmatpush1.msra.mxu0 0.0
    %3462 = vmatprep.subr.mxu0 0.0
    %3463 = vmatpush1.msra.mxu0 0.0
    %3464 = vmatprep.subr.mxu0 0.0
    %3465 = vmatpush1.msra.mxu0 0.0
    %3466 = vmatprep.subr.mxu0 0.0
    %3467 = vmatpush1.msra.mxu0 0.0
    %3468 = vmatprep.subr.mxu0 0.0
    %3469 = vmatpush1.msra.mxu0 0.0
    %3470 = vmatprep.mubr.f32.mxu0 0.0
    %3471 = vmatmul.mubr.f32.gmra.mrb[0].mxu0 %v3399
    %v3472 = vpop.f32.mrb[0].mxu0
    %v3473 = vadd.f32 0.0, %v3472
    %v3474 = vpop.f32.mrb[0].mxu0
    %3475 = vmatprep.mubr.f32.mxu0 0.0
    %3476 = vmatmul.mubr.f32.gmra.mrb[0].mxu0 %v3402
    %v3477 = vpop.f32.mrb[0].mxu0
    %v3478 = vadd.f32 0.0, %v3477
    %v3479 = vpop.f32.mrb[0].mxu0
    %3480 = vdwg.mxu0
    %3483 = vrot.lane.b32.xlu0 %v3071, 8
    %v3484 = vpop.permute.xlu0 %3483
    %3485 = vrot.lane.b32.xlu0 %v3076, 8
    %v3486 = vpop.permute.xlu0 %3485
    %3491 = vrot.lane.b32.xlu0 %v3272, 16
    %v3492 = vpop.permute.xlu0 %3491
    %3493 = vrot.lane.b32.xlu0 %v3277, 16
    %v3494 = vpop.permute.xlu0 %3493
    %3499 = vrot.lane.b32.xlu0 %v3473, 24
    %v3500 = vpop.permute.xlu0 %3499
    %3501 = vrot.lane.b32.xlu0 %v3478, 24
    %v3502 = vpop.permute.xlu0 %3501
    %v3505 = vsel %vm432, %v2870, %v3484
    %v3506 = vsel %vm432, %v2875, %v3486
    %v3507 = vsel %vm1259, %v3505, %v3492
    %v3508 = vsel %vm1259, %v3506, %v3494
    %v3509 = vsel %vm1262, %v3507, %v3500
    %v3510 = vsel %vm1262, %v3508, %v3502
    %v3511 = vmul.f32 %v2672, 0.35355338
    %v3513 = vrot.slane %v2676, 1
    %v3514 = vrot.slane %v3511, 1
    %v3515 = vsel %vm1267, %v3513, %v3514
    %v3517 = vrot.slane %v2667, 1
    %v3518 = vrot.slane %v2672, 1
    %v3519 = vsel %vm1267, %v3517, %v3518
    %3520 = vrot.lane.b32.xlu0 %v3519, 96
    %v3521 = vpop.permute.xlu0 %3520
    %3522 = vrot.lane.b32.xlu0 %v3518, 96
    %v3523 = vpop.permute.xlu0 %3522
    %v3524 = vsel %vm432, %v3515, 0
    %v3526 = vsel %vm432, %v3514, 0
    %v3528 = vsel %vm432, %v3521, 0
    %v3530 = vsel %vm432, %v3523, 0
    %3532 = vmatprep.subr.mxu0 0.0
    %3533 = vmatpush1.xpose.msra.mxu0 %v3528
    %3534 = vmatprep.subr.mxu0 0.0
    %3535 = vmatpush1.xpose.msra.mxu0 %v3530
    %3536 = vmatprep.subr.mxu0 0.0
    %3537 = vmatpush1.xpose.msra.mxu0 0.0
    %3538 = vmatprep.subr.mxu0 0.0
    %3539 = vmatpush1.xpose.msra.mxu0 0.0
    %3540 = vmatprep.subr.mxu0 0.0
    %3541 = vmatpush1.xpose.msra.mxu0 0.0
    %3542 = vmatprep.subr.mxu0 0.0
    %3543 = vmatpush1.xpose.msra.mxu0 0.0
    %3544 = vmatprep.subr.mxu0 0.0
    %3545 = vmatpush1.xpose.msra.mxu0 0.0
    %3546 = vmatprep.subr.mxu0 0.0
    %3547 = vmatpush1.xpose.msra.mxu0 0.0
    %3548 = vmatprep.subr.mxu0 0.0
    %3549 = vmatpush1.xpose.msra.mxu0 0.0
    %3550 = vmatprep.subr.mxu0 0.0
    %3551 = vmatpush1.xpose.msra.mxu0 0.0
    %3552 = vmatprep.subr.mxu0 0.0
    %3553 = vmatpush1.xpose.msra.mxu0 0.0
    %3554 = vmatprep.subr.mxu0 0.0
    %3555 = vmatpush1.xpose.msra.mxu0 0.0
    %3556 = vmatprep.subr.mxu0 0.0
    %3557 = vmatpush1.xpose.msra.mxu0 0.0
    %3558 = vmatprep.subr.mxu0 0.0
    %3559 = vmatpush1.xpose.msra.mxu0 0.0
    %3560 = vmatprep.subr.mxu0 0.0
    %3561 = vmatpush1.xpose.msra.mxu0 0.0
    %3562 = vmatprep.subr.mxu0 0.0
    %3563 = vmatpush1.xpose.msra.mxu0 0.0
    %3564 = vmatprep.subr.mxu0 0.0
    %3565 = vmatpush1.xpose.msra.mxu0 0.0
    %3566 = vmatprep.subr.mxu0 0.0
    %3567 = vmatpush1.xpose.msra.mxu0 0.0
    %3568 = vmatprep.subr.mxu0 0.0
    %3569 = vmatpush1.xpose.msra.mxu0 0.0
    %3570 = vmatprep.subr.mxu0 0.0
    %3571 = vmatpush1.xpose.msra.mxu0 0.0
    %3572 = vmatprep.subr.mxu0 0.0
    %3573 = vmatpush1.xpose.msra.mxu0 0.0
    %3574 = vmatprep.subr.mxu0 0.0
    %3575 = vmatpush1.xpose.msra.mxu0 0.0
    %3576 = vmatprep.subr.mxu0 0.0
    %3577 = vmatpush1.xpose.msra.mxu0 0.0
    %3578 = vmatprep.subr.mxu0 0.0
    %3579 = vmatpush1.xpose.msra.mxu0 0.0
    %3580 = vmatprep.subr.mxu0 0.0
    %3581 = vmatpush1.xpose.msra.mxu0 0.0
    %3582 = vmatprep.subr.mxu0 0.0
    %3583 = vmatpush1.xpose.msra.mxu0 0.0
    %3584 = vmatprep.subr.mxu0 0.0
    %3585 = vmatpush1.xpose.msra.mxu0 0.0
    %3586 = vmatprep.subr.mxu0 0.0
    %3587 = vmatpush1.xpose.msra.mxu0 0.0
    %3588 = vmatprep.subr.mxu0 0.0
    %3589 = vmatpush1.xpose.msra.mxu0 0.0
    %3590 = vmatprep.subr.mxu0 0.0
    %3591 = vmatpush1.xpose.msra.mxu0 0.0
    %3592 = vmatprep.subr.mxu0 0.0
    %3593 = vmatpush1.xpose.msra.mxu0 0.0
    %3594 = vmatprep.subr.mxu0 0.0
    %3595 = vmatpush1.xpose.msra.mxu0 0.0
    %3596 = vmatprep.mubr.f32.mxu0 0.0
    %3597 = vmatmul.mubr.f32.gmra.mrb[0].mxu0 %v3524
    %v3598 = vpop.f32.mrb[0].mxu0
    %v3599 = vadd.f32 0.0, %v3598
    %v3600 = vpop.f32.mrb[0].mxu0
    %3601 = vmatprep.mubr.f32.mxu0 0.0
    %3602 = vmatmul.mubr.f32.gmra.mrb[0].mxu0 %v3526
    %v3603 = vpop.f32.mrb[0].mxu0
    %v3604 = vadd.f32 0.0, %v3603
    %v3605 = vpop.f32.mrb[0].mxu0
    %3606 = vdwg.mxu0
    %v3607 = vsel %vm518, %v3599, -inf
    %3608 = vmax.xlane.f32.xlu0 %v3607
    %v3609 = vpop.xlane.xlu0 %3608
    %v3610 = vsel %vm522, %v3604, -inf
    %3611 = vmax.xlane.f32.xlu0 %v3610
    %v3612 = vpop.xlane.xlu0 %3611
    %v3613 = vsub.f32 %v3599, %v3609
    %v3614 = vsub.f32 %v3604, %v3612
    %v3615 = vmul.f32 %v3613, 1.442695
    %v3616 = vpow.pop %v3615
    %v3617 = vmul.f32 %v3614, 1.442695
    %v3618 = vpow.pop %v3617
    %v3619 = vsel %vm518, %v3616, 0.0
    %3620 = vadd.xlane.f32.xlu0 %v3619
    %v3621 = vpop.xlane.xlu0 %3620
    %v3622 = vsel %vm522, %v3618, 0.0
    %3623 = vadd.xlane.f32.xlu0 %v3622
    %v3624 = vpop.xlane.xlu0 %3623
    %v3625 = vrcp.pop %v3621
    %v3626 = vrcp.pop %v3624
    %v3627 = vmul.f32 %v3616, %v3625
    %v3628 = vmul.f32 %v3618, %v3626
    %3629 = vrot.lane.b32.xlu0 %v3519, 64
    %v3630 = vpop.permute.xlu0 %3629
    %3631 = vrot.lane.b32.xlu0 %v3518, 64
    %v3632 = vpop.permute.xlu0 %3631
    %v3635 = vsel %vm518, %v3627, 0
    %v3638 = vsel %vm518, %v3628, 0
    %v3640 = vsel %vm242, %v3632, 0
    %3642 = vmatprep.subr.mxu0 0.0
    %3643 = vmatpush1.msra.mxu0 %v3630
    %3644 = vmatprep.subr.mxu0 0.0
    %3645 = vmatpush1.msra.mxu0 %v3640
    %3646 = vmatprep.subr.mxu0 0.0
    %3647 = vmatpush1.msra.mxu0 0.0
    %3648 = vmatprep.subr.mxu0 0.0
    %3649 = vmatpush1.msra.mxu0 0.0
    %3650 = vmatprep.subr.mxu0 0.0
    %3651 = vmatpush1.msra.mxu0 0.0
    %3652 = vmatprep.subr.mxu0 0.0
    %3653 = vmatpush1.msra.mxu0 0.0
    %3654 = vmatprep.subr.mxu0 0.0
    %3655 = vmatpush1.msra.mxu0 0.0
    %3656 = vmatprep.subr.mxu0 0.0
    %3657 = vmatpush1.msra.mxu0 0.0
    %3658 = vmatprep.subr.mxu0 0.0
    %3659 = vmatpush1.msra.mxu0 0.0
    %3660 = vmatprep.subr.mxu0 0.0
    %3661 = vmatpush1.msra.mxu0 0.0
    %3662 = vmatprep.subr.mxu0 0.0
    %3663 = vmatpush1.msra.mxu0 0.0
    %3664 = vmatprep.subr.mxu0 0.0
    %3665 = vmatpush1.msra.mxu0 0.0
    %3666 = vmatprep.subr.mxu0 0.0
    %3667 = vmatpush1.msra.mxu0 0.0
    %3668 = vmatprep.subr.mxu0 0.0
    %3669 = vmatpush1.msra.mxu0 0.0
    %3670 = vmatprep.subr.mxu0 0.0
    %3671 = vmatpush1.msra.mxu0 0.0
    %3672 = vmatprep.subr.mxu0 0.0
    %3673 = vmatpush1.msra.mxu0 0.0
    %3674 = vmatprep.subr.mxu0 0.0
    %3675 = vmatpush1.msra.mxu0 0.0
    %3676 = vmatprep.subr.mxu0 0.0
    %3677 = vmatpush1.msra.mxu0 0.0
    %3678 = vmatprep.subr.mxu0 0.0
    %3679 = vmatpush1.msra.mxu0 0.0
    %3680 = vmatprep.subr.mxu0 0.0
    %3681 = vmatpush1.msra.mxu0 0.0
    %3682 = vmatprep.subr.mxu0 0.0
    %3683 = vmatpush1.msra.mxu0 0.0
    %3684 = vmatprep.subr.mxu0 0.0
    %3685 = vmatpush1.msra.mxu0 0.0
    %3686 = vmatprep.subr.mxu0 0.0
    %3687 = vmatpush1.msra.mxu0 0.0
    %3688 = vmatprep.subr.mxu0 0.0
    %3689 = vmatpush1.msra.mxu0 0.0
    %3690 = vmatprep.subr.mxu0 0.0
    %3691 = vmatpush1.msra.mxu0 0.0
    %3692 = vmatprep.subr.mxu0 0.0
    %3693 = vmatpush1.msra.mxu0 0.0
    %3694 = vmatprep.subr.mxu0 0.0
    %3695 = vmatpush1.msra.mxu0 0.0
    %3696 = vmatprep.subr.mxu0 0.0
    %3697 = vmatpush1.msra.mxu0 0.0
    %3698 = vmatprep.subr.mxu0 0.0
    %3699 = vmatpush1.msra.mxu0 0.0
    %3700 = vmatprep.subr.mxu0 0.0
    %3701 = vmatpush1.msra.mxu0 0.0
    %3702 = vmatprep.subr.mxu0 0.0
    %3703 = vmatpush1.msra.mxu0 0.0
    %3704 = vmatprep.subr.mxu0 0.0
    %3705 = vmatpush1.msra.mxu0 0.0
    %3706 = vmatprep.mubr.f32.mxu0 0.0
    %3707 = vmatmul.mubr.f32.gmra.mrb[0].mxu0 %v3635
    %v3708 = vpop.f32.mrb[0].mxu0
    %v3709 = vadd.f32 0.0, %v3708
    %v3710 = vpop.f32.mrb[0].mxu0
    %3711 = vmatprep.mubr.f32.mxu0 0.0
    %3712 = vmatmul.mubr.f32.gmra.mrb[0].mxu0 %v3638
    %v3713 = vpop.f32.mrb[0].mxu0
    %v3714 = vadd.f32 0.0, %v3713
    %v3715 = vpop.f32.mrb[0].mxu0
    %3716 = vdwg.mxu0
    %3717 = vrot.lane.b32.xlu0 %v3515, 120
    %v3718 = vpop.permute.xlu0 %3717
    %3719 = vrot.lane.b32.xlu0 %v3514, 120
    %v3720 = vpop.permute.xlu0 %3719
    %3721 = vrot.lane.b32.xlu0 %v3519, 88
    %v3722 = vpop.permute.xlu0 %3721
    %3723 = vrot.lane.b32.xlu0 %v3518, 88
    %v3724 = vpop.permute.xlu0 %3723
    %v3725 = vsel %vm432, %v3718, 0
    %v3727 = vsel %vm432, %v3720, 0
    %v3729 = vsel %vm432, %v3722, 0
    %v3731 = vsel %vm432, %v3724, 0
    %3733 = vmatprep.subr.mxu0 0.0
    %3734 = vmatpush1.xpose.msra.mxu0 %v3729
    %3735 = vmatprep.subr.mxu0 0.0
    %3736 = vmatpush1.xpose.msra.mxu0 %v3731
    %3737 = vmatprep.subr.mxu0 0.0
    %3738 = vmatpush1.xpose.msra.mxu0 0.0
    %3739 = vmatprep.subr.mxu0 0.0
    %3740 = vmatpush1.xpose.msra.mxu0 0.0
    %3741 = vmatprep.subr.mxu0 0.0
    %3742 = vmatpush1.xpose.msra.mxu0 0.0
    %3743 = vmatprep.subr.mxu0 0.0
    %3744 = vmatpush1.xpose.msra.mxu0 0.0
    %3745 = vmatprep.subr.mxu0 0.0
    %3746 = vmatpush1.xpose.msra.mxu0 0.0
    %3747 = vmatprep.subr.mxu0 0.0
    %3748 = vmatpush1.xpose.msra.mxu0 0.0
    %3749 = vmatprep.subr.mxu0 0.0
    %3750 = vmatpush1.xpose.msra.mxu0 0.0
    %3751 = vmatprep.subr.mxu0 0.0
    %3752 = vmatpush1.xpose.msra.mxu0 0.0
    %3753 = vmatprep.subr.mxu0 0.0
    %3754 = vmatpush1.xpose.msra.mxu0 0.0
    %3755 = vmatprep.subr.mxu0 0.0
    %3756 = vmatpush1.xpose.msra.mxu0 0.0
    %3757 = vmatprep.subr.mxu0 0.0
    %3758 = vmatpush1.xpose.msra.mxu0 0.0
    %3759 = vmatprep.subr.mxu0 0.0
    %3760 = vmatpush1.xpose.msra.mxu0 0.0
    %3761 = vmatprep.subr.mxu0 0.0
    %3762 = vmatpush1.xpose.msra.mxu0 0.0
    %3763 = vmatprep.subr.mxu0 0.0
    %3764 = vmatpush1.xpose.msra.mxu0 0.0
    %3765 = vmatprep.subr.mxu0 0.0
    %3766 = vmatpush1.xpose.msra.mxu0 0.0
    %3767 = vmatprep.subr.mxu0 0.0
    %3768 = vmatpush1.xpose.msra.mxu0 0.0
    %3769 = vmatprep.subr.mxu0 0.0
    %3770 = vmatpush1.xpose.msra.mxu0 0.0
    %3771 = vmatprep.subr.mxu0 0.0
    %3772 = vmatpush1.xpose.msra.mxu0 0.0
    %3773 = vmatprep.subr.mxu0 0.0
    %3774 = vmatpush1.xpose.msra.mxu0 0.0
    %3775 = vmatprep.subr.mxu0 0.0
    %3776 = vmatpush1.xpose.msra.mxu0 0.0
    %3777 = vmatprep.subr.mxu0 0.0
    %3778 = vmatpush1.xpose.msra.mxu0 0.0
    %3779 = vmatprep.subr.mxu0 0.0
    %3780 = vmatpush1.xpose.msra.mxu0 0.0
    %3781 = vmatprep.subr.mxu0 0.0
    %3782 = vmatpush1.xpose.msra.mxu0 0.0
    %3783 = vmatprep.subr.mxu0 0.0
    %3784 = vmatpush1.xpose.msra.mxu0 0.0
    %3785 = vmatprep.subr.mxu0 0.0
    %3786 = vmatpush1.xpose.msra.mxu0 0.0
    %3787 = vmatprep.subr.mxu0 0.0
    %3788 = vmatpush1.xpose.msra.mxu0 0.0
    %3789 = vmatprep.subr.mxu0 0.0
    %3790 = vmatpush1.xpose.msra.mxu0 0.0
    %3791 = vmatprep.subr.mxu0 0.0
    %3792 = vmatpush1.xpose.msra.mxu0 0.0
    %3793 = vmatprep.subr.mxu0 0.0
    %3794 = vmatpush1.xpose.msra.mxu0 0.0
    %3795 = vmatprep.subr.mxu0 0.0
    %3796 = vmatpush1.xpose.msra.mxu0 0.0
    %3797 = vmatprep.mubr.f32.mxu0 0.0
    %3798 = vmatmul.mubr.f32.gmra.mrb[0].mxu0 %v3725
    %v3799 = vpop.f32.mrb[0].mxu0
    %v3800 = vadd.f32 0.0, %v3799
    %v3801 = vpop.f32.mrb[0].mxu0
    %3802 = vmatprep.mubr.f32.mxu0 0.0
    %3803 = vmatmul.mubr.f32.gmra.mrb[0].mxu0 %v3727
    %v3804 = vpop.f32.mrb[0].mxu0
    %v3805 = vadd.f32 0.0, %v3804
    %v3806 = vpop.f32.mrb[0].mxu0
    %3807 = vdwg.mxu0
    %v3808 = vsel %vm518, %v3800, -inf
    %3809 = vmax.xlane.f32.xlu0 %v3808
    %v3810 = vpop.xlane.xlu0 %3809
    %v3811 = vsel %vm522, %v3805, -inf
    %3812 = vmax.xlane.f32.xlu0 %v3811
    %v3813 = vpop.xlane.xlu0 %3812
    %v3814 = vsub.f32 %v3800, %v3810
    %v3815 = vsub.f32 %v3805, %v3813
    %v3816 = vmul.f32 %v3814, 1.442695
    %v3817 = vpow.pop %v3816
    %v3818 = vmul.f32 %v3815, 1.442695
    %v3819 = vpow.pop %v3818
    %v3820 = vsel %vm518, %v3817, 0.0
    %3821 = vadd.xlane.f32.xlu0 %v3820
    %v3822 = vpop.xlane.xlu0 %3821
    %v3823 = vsel %vm522, %v3819, 0.0
    %3824 = vadd.xlane.f32.xlu0 %v3823
    %v3825 = vpop.xlane.xlu0 %3824
    %v3826 = vrcp.pop %v3822
    %v3827 = vrcp.pop %v3825
    %v3828 = vmul.f32 %v3817, %v3826
    %v3829 = vmul.f32 %v3819, %v3827
    %3830 = vrot.lane.b32.xlu0 %v3519, 56
    %v3831 = vpop.permute.xlu0 %3830
    %3832 = vrot.lane.b32.xlu0 %v3518, 56
    %v3833 = vpop.permute.xlu0 %3832
    %v3836 = vsel %vm518, %v3828, 0
    %v3839 = vsel %vm518, %v3829, 0
    %v3841 = vsel %vm242, %v3833, 0
    %3843 = vmatprep.subr.mxu0 0.0
    %3844 = vmatpush1.msra.mxu0 %v3831
    %3845 = vmatprep.subr.mxu0 0.0
    %3846 = vmatpush1.msra.mxu0 %v3841
    %3847 = vmatprep.subr.mxu0 0.0
    %3848 = vmatpush1.msra.mxu0 0.0
    %3849 = vmatprep.subr.mxu0 0.0
    %3850 = vmatpush1.msra.mxu0 0.0
    %3851 = vmatprep.subr.mxu0 0.0
    %3852 = vmatpush1.msra.mxu0 0.0
    %3853 = vmatprep.subr.mxu0 0.0
    %3854 = vmatpush1.msra.mxu0 0.0
    %3855 = vmatprep.subr.mxu0 0.0
    %3856 = vmatpush1.msra.mxu0 0.0
    %3857 = vmatprep.subr.mxu0 0.0
    %3858 = vmatpush1.msra.mxu0 0.0
    %3859 = vmatprep.subr.mxu0 0.0
    %3860 = vmatpush1.msra.mxu0 0.0
    %3861 = vmatprep.subr.mxu0 0.0
    %3862 = vmatpush1.msra.mxu0 0.0
    %3863 = vmatprep.subr.mxu0 0.0
    %3864 = vmatpush1.msra.mxu0 0.0
    %3865 = vmatprep.subr.mxu0 0.0
    %3866 = vmatpush1.msra.mxu0 0.0
    %3867 = vmatprep.subr.mxu0 0.0
    %3868 = vmatpush1.msra.mxu0 0.0
    %3869 = vmatprep.subr.mxu0 0.0
    %3870 = vmatpush1.msra.mxu0 0.0
    %3871 = vmatprep.subr.mxu0 0.0
    %3872 = vmatpush1.msra.mxu0 0.0
    %3873 = vmatprep.subr.mxu0 0.0
    %3874 = vmatpush1.msra.mxu0 0.0
    %3875 = vmatprep.subr.mxu0 0.0
    %3876 = vmatpush1.msra.mxu0 0.0
    %3877 = vmatprep.subr.mxu0 0.0
    %3878 = vmatpush1.msra.mxu0 0.0
    %3879 = vmatprep.subr.mxu0 0.0
    %3880 = vmatpush1.msra.mxu0 0.0
    %3881 = vmatprep.subr.mxu0 0.0
    %3882 = vmatpush1.msra.mxu0 0.0
    %3883 = vmatprep.subr.mxu0 0.0
    %3884 = vmatpush1.msra.mxu0 0.0
    %3885 = vmatprep.subr.mxu0 0.0
    %3886 = vmatpush1.msra.mxu0 0.0
    %3887 = vmatprep.subr.mxu0 0.0
    %3888 = vmatpush1.msra.mxu0 0.0
    %3889 = vmatprep.subr.mxu0 0.0
    %3890 = vmatpush1.msra.mxu0 0.0
    %3891 = vmatprep.subr.mxu0 0.0
    %3892 = vmatpush1.msra.mxu0 0.0
    %3893 = vmatprep.subr.mxu0 0.0
    %3894 = vmatpush1.msra.mxu0 0.0
    %3895 = vmatprep.subr.mxu0 0.0
    %3896 = vmatpush1.msra.mxu0 0.0
    %3897 = vmatprep.subr.mxu0 0.0
    %3898 = vmatpush1.msra.mxu0 0.0
    %3899 = vmatprep.subr.mxu0 0.0
    %3900 = vmatpush1.msra.mxu0 0.0
    %3901 = vmatprep.subr.mxu0 0.0
    %3902 = vmatpush1.msra.mxu0 0.0
    %3903 = vmatprep.subr.mxu0 0.0
    %3904 = vmatpush1.msra.mxu0 0.0
    %3905 = vmatprep.subr.mxu0 0.0
    %3906 = vmatpush1.msra.mxu0 0.0
    %3907 = vmatprep.mubr.f32.mxu0 0.0
    %3908 = vmatmul.mubr.f32.gmra.mrb[0].mxu0 %v3836
    %v3909 = vpop.f32.mrb[0].mxu0
    %v3910 = vadd.f32 0.0, %v3909
    %v3911 = vpop.f32.mrb[0].mxu0
    %3912 = vmatprep.mubr.f32.mxu0 0.0
    %3913 = vmatmul.mubr.f32.gmra.mrb[0].mxu0 %v3839
    %v3914 = vpop.f32.mrb[0].mxu0
    %v3915 = vadd.f32 0.0, %v3914
    %v3916 = vpop.f32.mrb[0].mxu0
    %3917 = vdwg.mxu0
    %3918 = vrot.lane.b32.xlu0 %v3515, 112
    %v3919 = vpop.permute.xlu0 %3918
    %3920 = vrot.lane.b32.xlu0 %v3514, 112
    %v3921 = vpop.permute.xlu0 %3920
    %3922 = vrot.lane.b32.xlu0 %v3519, 80
    %v3923 = vpop.permute.xlu0 %3922
    %3924 = vrot.lane.b32.xlu0 %v3518, 80
    %v3925 = vpop.permute.xlu0 %3924
    %v3926 = vsel %vm432, %v3919, 0
    %v3928 = vsel %vm432, %v3921, 0
    %v3930 = vsel %vm432, %v3923, 0
    %v3932 = vsel %vm432, %v3925, 0
    %3934 = vmatprep.subr.mxu0 0.0
    %3935 = vmatpush1.xpose.msra.mxu0 %v3930
    %3936 = vmatprep.subr.mxu0 0.0
    %3937 = vmatpush1.xpose.msra.mxu0 %v3932
    %3938 = vmatprep.subr.mxu0 0.0
    %3939 = vmatpush1.xpose.msra.mxu0 0.0
    %3940 = vmatprep.subr.mxu0 0.0
    %3941 = vmatpush1.xpose.msra.mxu0 0.0
    %3942 = vmatprep.subr.mxu0 0.0
    %3943 = vmatpush1.xpose.msra.mxu0 0.0
    %3944 = vmatprep.subr.mxu0 0.0
    %3945 = vmatpush1.xpose.msra.mxu0 0.0
    %3946 = vmatprep.subr.mxu0 0.0
    %3947 = vmatpush1.xpose.msra.mxu0 0.0
    %3948 = vmatprep.subr.mxu0 0.0
    %3949 = vmatpush1.xpose.msra.mxu0 0.0
    %3950 = vmatprep.subr.mxu0 0.0
    %3951 = vmatpush1.xpose.msra.mxu0 0.0
    %3952 = vmatprep.subr.mxu0 0.0
    %3953 = vmatpush1.xpose.msra.mxu0 0.0
    %3954 = vmatprep.subr.mxu0 0.0
    %3955 = vmatpush1.xpose.msra.mxu0 0.0
    %3956 = vmatprep.subr.mxu0 0.0
    %3957 = vmatpush1.xpose.msra.mxu0 0.0
    %3958 = vmatprep.subr.mxu0 0.0
    %3959 = vmatpush1.xpose.msra.mxu0 0.0
    %3960 = vmatprep.subr.mxu0 0.0
    %3961 = vmatpush1.xpose.msra.mxu0 0.0
    %3962 = vmatprep.subr.mxu0 0.0
    %3963 = vmatpush1.xpose.msra.mxu0 0.0
    %3964 = vmatprep.subr.mxu0 0.0
    %3965 = vmatpush1.xpose.msra.mxu0 0.0
    %3966 = vmatprep.subr.mxu0 0.0
    %3967 = vmatpush1.xpose.msra.mxu0 0.0
    %3968 = vmatprep.subr.mxu0 0.0
    %3969 = vmatpush1.xpose.msra.mxu0 0.0
    %3970 = vmatprep.subr.mxu0 0.0
    %3971 = vmatpush1.xpose.msra.mxu0 0.0
    %3972 = vmatprep.subr.mxu0 0.0
    %3973 = vmatpush1.xpose.msra.mxu0 0.0
    %3974 = vmatprep.subr.mxu0 0.0
    %3975 = vmatpush1.xpose.msra.mxu0 0.0
    %3976 = vmatprep.subr.mxu0 0.0
    %3977 = vmatpush1.xpose.msra.mxu0 0.0
    %3978 = vmatprep.subr.mxu0 0.0
    %3979 = vmatpush1.xpose.msra.mxu0 0.0
    %3980 = vmatprep.subr.mxu0 0.0
    %3981 = vmatpush1.xpose.msra.mxu0 0.0
    %3982 = vmatprep.subr.mxu0 0.0
    %3983 = vmatpush1.xpose.msra.mxu0 0.0
    %3984 = vmatprep.subr.mxu0 0.0
    %3985 = vmatpush1.xpose.msra.mxu0 0.0
    %3986 = vmatprep.subr.mxu0 0.0
    %3987 = vmatpush1.xpose.msra.mxu0 0.0
    %3988 = vmatprep.subr.mxu0 0.0
    %3989 = vmatpush1.xpose.msra.mxu0 0.0
    %3990 = vmatprep.subr.mxu0 0.0
    %3991 = vmatpush1.xpose.msra.mxu0 0.0
    %3992 = vmatprep.subr.mxu0 0.0
    %3993 = vmatpush1.xpose.msra.mxu0 0.0
    %3994 = vmatprep.subr.mxu0 0.0
    %3995 = vmatpush1.xpose.msra.mxu0 0.0
    %3996 = vmatprep.subr.mxu0 0.0
    %3997 = vmatpush1.xpose.msra.mxu0 0.0
    %3998 = vmatprep.mubr.f32.mxu0 0.0
    %3999 = vmatmul.mubr.f32.gmra.mrb[0].mxu0 %v3926
    %v4000 = vpop.f32.mrb[0].mxu0
    %v4001 = vadd.f32 0.0, %v4000
    %v4002 = vpop.f32.mrb[0].mxu0
    %4003 = vmatprep.mubr.f32.mxu0 0.0
    %4004 = vmatmul.mubr.f32.gmra.mrb[0].mxu0 %v3928
    %v4005 = vpop.f32.mrb[0].mxu0
    %v4006 = vadd.f32 0.0, %v4005
    %v4007 = vpop.f32.mrb[0].mxu0
    %4008 = vdwg.mxu0
    %v4009 = vsel %vm518, %v4001, -inf
    %4010 = vmax.xlane.f32.xlu0 %v4009
    %v4011 = vpop.xlane.xlu0 %4010
    %v4012 = vsel %vm522, %v4006, -inf
    %4013 = vmax.xlane.f32.xlu0 %v4012
    %v4014 = vpop.xlane.xlu0 %4013
    %v4015 = vsub.f32 %v4001, %v4011
    %v4016 = vsub.f32 %v4006, %v4014
    %v4017 = vmul.f32 %v4015, 1.442695
    %v4018 = vpow.pop %v4017
    %v4019 = vmul.f32 %v4016, 1.442695
    %v4020 = vpow.pop %v4019
    %v4021 = vsel %vm518, %v4018, 0.0
    %4022 = vadd.xlane.f32.xlu0 %v4021
    %v4023 = vpop.xlane.xlu0 %4022
    %v4024 = vsel %vm522, %v4020, 0.0
    %4025 = vadd.xlane.f32.xlu0 %v4024
    %v4026 = vpop.xlane.xlu0 %4025
    %v4027 = vrcp.pop %v4023
    %v4028 = vrcp.pop %v4026
    %v4029 = vmul.f32 %v4018, %v4027
    %v4030 = vmul.f32 %v4020, %v4028
    %4031 = vrot.lane.b32.xlu0 %v3519, 48
    %v4032 = vpop.permute.xlu0 %4031
    %4033 = vrot.lane.b32.xlu0 %v3518, 48
    %v4034 = vpop.permute.xlu0 %4033
    %v4037 = vsel %vm518, %v4029, 0
    %v4040 = vsel %vm518, %v4030, 0
    %v4042 = vsel %vm242, %v4034, 0
    %4044 = vmatprep.subr.mxu0 0.0
    %4045 = vmatpush1.msra.mxu0 %v4032
    %4046 = vmatprep.subr.mxu0 0.0
    %4047 = vmatpush1.msra.mxu0 %v4042
    %4048 = vmatprep.subr.mxu0 0.0
    %4049 = vmatpush1.msra.mxu0 0.0
    %4050 = vmatprep.subr.mxu0 0.0
    %4051 = vmatpush1.msra.mxu0 0.0
    %4052 = vmatprep.subr.mxu0 0.0
    %4053 = vmatpush1.msra.mxu0 0.0
    %4054 = vmatprep.subr.mxu0 0.0
    %4055 = vmatpush1.msra.mxu0 0.0
    %4056 = vmatprep.subr.mxu0 0.0
    %4057 = vmatpush1.msra.mxu0 0.0
    %4058 = vmatprep.subr.mxu0 0.0
    %4059 = vmatpush1.msra.mxu0 0.0
    %4060 = vmatprep.subr.mxu0 0.0
    %4061 = vmatpush1.msra.mxu0 0.0
    %4062 = vmatprep.subr.mxu0 0.0
    %4063 = vmatpush1.msra.mxu0 0.0
    %4064 = vmatprep.subr.mxu0 0.0
    %4065 = vmatpush1.msra.mxu0 0.0
    %4066 = vmatprep.subr.mxu0 0.0
    %4067 = vmatpush1.msra.mxu0 0.0
    %4068 = vmatprep.subr.mxu0 0.0
    %4069 = vmatpush1.msra.mxu0 0.0
    %4070 = vmatprep.subr.mxu0 0.0
    %4071 = vmatpush1.msra.mxu0 0.0
    %4072 = vmatprep.subr.mxu0 0.0
    %4073 = vmatpush1.msra.mxu0 0.0
    %4074 = vmatprep.subr.mxu0 0.0
    %4075 = vmatpush1.msra.mxu0 0.0
    %4076 = vmatprep.subr.mxu0 0.0
    %4077 = vmatpush1.msra.mxu0 0.0
    %4078 = vmatprep.subr.mxu0 0.0
    %4079 = vmatpush1.msra.mxu0 0.0
    %4080 = vmatprep.subr.mxu0 0.0
    %4081 = vmatpush1.msra.mxu0 0.0
    %4082 = vmatprep.subr.mxu0 0.0
    %4083 = vmatpush1.msra.mxu0 0.0
    %4084 = vmatprep.subr.mxu0 0.0
    %4085 = vmatpush1.msra.mxu0 0.0
    %4086 = vmatprep.subr.mxu0 0.0
    %4087 = vmatpush1.msra.mxu0 0.0
    %4088 = vmatprep.subr.mxu0 0.0
    %4089 = vmatpush1.msra.mxu0 0.0
    %4090 = vmatprep.subr.mxu0 0.0
    %4091 = vmatpush1.msra.mxu0 0.0
    %4092 = vmatprep.subr.mxu0 0.0
    %4093 = vmatpush1.msra.mxu0 0.0
    %4094 = vmatprep.subr.mxu0 0.0
    %4095 = vmatpush1.msra.mxu0 0.0
    %4096 = vmatprep.subr.mxu0 0.0
    %4097 = vmatpush1.msra.mxu0 0.0
    %4098 = vmatprep.subr.mxu0 0.0
    %4099 = vmatpush1.msra.mxu0 0.0
    %4100 = vmatprep.subr.mxu0 0.0
    %4101 = vmatpush1.msra.mxu0 0.0
    %4102 = vmatprep.subr.mxu0 0.0
    %4103 = vmatpush1.msra.mxu0 0.0
    %4104 = vmatprep.subr.mxu0 0.0
    %4105 = vmatpush1.msra.mxu0 0.0
    %4106 = vmatprep.subr.mxu0 0.0
    %4107 = vmatpush1.msra.mxu0 0.0
    %4108 = vmatprep.mubr.f32.mxu0 0.0
    %4109 = vmatmul.mubr.f32.gmra.mrb[0].mxu0 %v4037
    %v4110 = vpop.f32.mrb[0].mxu0
    %v4111 = vadd.f32 0.0, %v4110
    %v4112 = vpop.f32.mrb[0].mxu0
    %4113 = vmatprep.mubr.f32.mxu0 0.0
    %4114 = vmatmul.mubr.f32.gmra.mrb[0].mxu0 %v4040
    %v4115 = vpop.f32.mrb[0].mxu0
    %v4116 = vadd.f32 0.0, %v4115
    %v4117 = vpop.f32.mrb[0].mxu0
    %4118 = vdwg.mxu0
    %4119 = vrot.lane.b32.xlu0 %v3515, 104
    %v4120 = vpop.permute.xlu0 %4119
    %4121 = vrot.lane.b32.xlu0 %v3514, 104
    %v4122 = vpop.permute.xlu0 %4121
    %4123 = vrot.lane.b32.xlu0 %v3519, 72
    %v4124 = vpop.permute.xlu0 %4123
    %4125 = vrot.lane.b32.xlu0 %v3518, 72
    %v4126 = vpop.permute.xlu0 %4125
    %v4127 = vsel %vm432, %v4120, 0
    %v4129 = vsel %vm432, %v4122, 0
    %v4131 = vsel %vm432, %v4124, 0
    %v4133 = vsel %vm432, %v4126, 0
    %4135 = vmatprep.subr.mxu0 0.0
    %4136 = vmatpush1.xpose.msra.mxu0 %v4131
    %4137 = vmatprep.subr.mxu0 0.0
    %4138 = vmatpush1.xpose.msra.mxu0 %v4133
    %4139 = vmatprep.subr.mxu0 0.0
    %4140 = vmatpush1.xpose.msra.mxu0 0.0
    %4141 = vmatprep.subr.mxu0 0.0
    %4142 = vmatpush1.xpose.msra.mxu0 0.0
    %4143 = vmatprep.subr.mxu0 0.0
    %4144 = vmatpush1.xpose.msra.mxu0 0.0
    %4145 = vmatprep.subr.mxu0 0.0
    %4146 = vmatpush1.xpose.msra.mxu0 0.0
    %4147 = vmatprep.subr.mxu0 0.0
    %4148 = vmatpush1.xpose.msra.mxu0 0.0
    %4149 = vmatprep.subr.mxu0 0.0
    %4150 = vmatpush1.xpose.msra.mxu0 0.0
    %4151 = vmatprep.subr.mxu0 0.0
    %4152 = vmatpush1.xpose.msra.mxu0 0.0
    %4153 = vmatprep.subr.mxu0 0.0
    %4154 = vmatpush1.xpose.msra.mxu0 0.0
    %4155 = vmatprep.subr.mxu0 0.0
    %4156 = vmatpush1.xpose.msra.mxu0 0.0
    %4157 = vmatprep.subr.mxu0 0.0
    %4158 = vmatpush1.xpose.msra.mxu0 0.0
    %4159 = vmatprep.subr.mxu0 0.0
    %4160 = vmatpush1.xpose.msra.mxu0 0.0
    %4161 = vmatprep.subr.mxu0 0.0
    %4162 = vmatpush1.xpose.msra.mxu0 0.0
    %4163 = vmatprep.subr.mxu0 0.0
    %4164 = vmatpush1.xpose.msra.mxu0 0.0
    %4165 = vmatprep.subr.mxu0 0.0
    %4166 = vmatpush1.xpose.msra.mxu0 0.0
    %4167 = vmatprep.subr.mxu0 0.0
    %4168 = vmatpush1.xpose.msra.mxu0 0.0
    %4169 = vmatprep.subr.mxu0 0.0
    %4170 = vmatpush1.xpose.msra.mxu0 0.0
    %4171 = vmatprep.subr.mxu0 0.0
    %4172 = vmatpush1.xpose.msra.mxu0 0.0
    %4173 = vmatprep.subr.mxu0 0.0
    %4174 = vmatpush1.xpose.msra.mxu0 0.0
    %4175 = vmatprep.subr.mxu0 0.0
    %4176 = vmatpush1.xpose.msra.mxu0 0.0
    %4177 = vmatprep.subr.mxu0 0.0
    %4178 = vmatpush1.xpose.msra.mxu0 0.0
    %4179 = vmatprep.subr.mxu0 0.0
    %4180 = vmatpush1.xpose.msra.mxu0 0.0
    %4181 = vmatprep.subr.mxu0 0.0
    %4182 = vmatpush1.xpose.msra.mxu0 0.0
    %4183 = vmatprep.subr.mxu0 0.0
    %4184 = vmatpush1.xpose.msra.mxu0 0.0
    %4185 = vmatprep.subr.mxu0 0.0
    %4186 = vmatpush1.xpose.msra.mxu0 0.0
    %4187 = vmatprep.subr.mxu0 0.0
    %4188 = vmatpush1.xpose.msra.mxu0 0.0
    %4189 = vmatprep.subr.mxu0 0.0
    %4190 = vmatpush1.xpose.msra.mxu0 0.0
    %4191 = vmatprep.subr.mxu0 0.0
    %4192 = vmatpush1.xpose.msra.mxu0 0.0
    %4193 = vmatprep.subr.mxu0 0.0
    %4194 = vmatpush1.xpose.msra.mxu0 0.0
    %4195 = vmatprep.subr.mxu0 0.0
    %4196 = vmatpush1.xpose.msra.mxu0 0.0
    %4197 = vmatprep.subr.mxu0 0.0
    %4198 = vmatpush1.xpose.msra.mxu0 0.0
    %4199 = vmatprep.mubr.f32.mxu0 0.0
    %4200 = vmatmul.mubr.f32.gmra.mrb[0].mxu0 %v4127
    %v4201 = vpop.f32.mrb[0].mxu0
    %v4202 = vadd.f32 0.0, %v4201
    %v4203 = vpop.f32.mrb[0].mxu0
    %4204 = vmatprep.mubr.f32.mxu0 0.0
    %4205 = vmatmul.mubr.f32.gmra.mrb[0].mxu0 %v4129
    %v4206 = vpop.f32.mrb[0].mxu0
    %v4207 = vadd.f32 0.0, %v4206
    %v4208 = vpop.f32.mrb[0].mxu0
    %4209 = vdwg.mxu0
    %v4210 = vsel %vm518, %v4202, -inf
    %4211 = vmax.xlane.f32.xlu0 %v4210
    %v4212 = vpop.xlane.xlu0 %4211
    %v4213 = vsel %vm522, %v4207, -inf
    %4214 = vmax.xlane.f32.xlu0 %v4213
    %v4215 = vpop.xlane.xlu0 %4214
    %v4216 = vsub.f32 %v4202, %v4212
    %v4217 = vsub.f32 %v4207, %v4215
    %v4218 = vmul.f32 %v4216, 1.442695
    %v4219 = vpow.pop %v4218
    %v4220 = vmul.f32 %v4217, 1.442695
    %v4221 = vpow.pop %v4220
    %v4222 = vsel %vm518, %v4219, 0.0
    %4223 = vadd.xlane.f32.xlu0 %v4222
    %v4224 = vpop.xlane.xlu0 %4223
    %v4225 = vsel %vm522, %v4221, 0.0
    %4226 = vadd.xlane.f32.xlu0 %v4225
    %v4227 = vpop.xlane.xlu0 %4226
    %v4228 = vrcp.pop %v4224
    %v4229 = vrcp.pop %v4227
    %v4230 = vmul.f32 %v4219, %v4228
    %v4231 = vmul.f32 %v4221, %v4229
    %4232 = vrot.lane.b32.xlu0 %v3519, 40
    %v4233 = vpop.permute.xlu0 %4232
    %4234 = vrot.lane.b32.xlu0 %v3518, 40
    %v4235 = vpop.permute.xlu0 %4234
    %v4238 = vsel %vm518, %v4230, 0
    %v4241 = vsel %vm518, %v4231, 0
    %v4243 = vsel %vm242, %v4235, 0
    %4245 = vmatprep.subr.mxu0 0.0
    %4246 = vmatpush1.msra.mxu0 %v4233
    %4247 = vmatprep.subr.mxu0 0.0
    %4248 = vmatpush1.msra.mxu0 %v4243
    %4249 = vmatprep.subr.mxu0 0.0
    %4250 = vmatpush1.msra.mxu0 0.0
    %4251 = vmatprep.subr.mxu0 0.0
    %4252 = vmatpush1.msra.mxu0 0.0
    %4253 = vmatprep.subr.mxu0 0.0
    %4254 = vmatpush1.msra.mxu0 0.0
    %4255 = vmatprep.subr.mxu0 0.0
    %4256 = vmatpush1.msra.mxu0 0.0
    %4257 = vmatprep.subr.mxu0 0.0
    %4258 = vmatpush1.msra.mxu0 0.0
    %4259 = vmatprep.subr.mxu0 0.0
    %4260 = vmatpush1.msra.mxu0 0.0
    %4261 = vmatprep.subr.mxu0 0.0
    %4262 = vmatpush1.msra.mxu0 0.0
    %4263 = vmatprep.subr.mxu0 0.0
    %4264 = vmatpush1.msra.mxu0 0.0
    %4265 = vmatprep.subr.mxu0 0.0
    %4266 = vmatpush1.msra.mxu0 0.0
    %4267 = vmatprep.subr.mxu0 0.0
    %4268 = vmatpush1.msra.mxu0 0.0
    %4269 = vmatprep.subr.mxu0 0.0
    %4270 = vmatpush1.msra.mxu0 0.0
    %4271 = vmatprep.subr.mxu0 0.0
    %4272 = vmatpush1.msra.mxu0 0.0
    %4273 = vmatprep.subr.mxu0 0.0
    %4274 = vmatpush1.msra.mxu0 0.0
    %4275 = vmatprep.subr.mxu0 0.0
    %4276 = vmatpush1.msra.mxu0 0.0
    %4277 = vmatprep.subr.mxu0 0.0
    %4278 = vmatpush1.msra.mxu0 0.0
    %4279 = vmatprep.subr.mxu0 0.0
    %4280 = vmatpush1.msra.mxu0 0.0
    %4281 = vmatprep.subr.mxu0 0.0
    %4282 = vmatpush1.msra.mxu0 0.0
    %4283 = vmatprep.subr.mxu0 0.0
    %4284 = vmatpush1.msra.mxu0 0.0
    %4285 = vmatprep.subr.mxu0 0.0
    %4286 = vmatpush1.msra.mxu0 0.0
    %4287 = vmatprep.subr.mxu0 0.0
    %4288 = vmatpush1.msra.mxu0 0.0
    %4289 = vmatprep.subr.mxu0 0.0
    %4290 = vmatpush1.msra.mxu0 0.0
    %4291 = vmatprep.subr.mxu0 0.0
    %4292 = vmatpush1.msra.mxu0 0.0
    %4293 = vmatprep.subr.mxu0 0.0
    %4294 = vmatpush1.msra.mxu0 0.0
    %4295 = vmatprep.subr.mxu0 0.0
    %4296 = vmatpush1.msra.mxu0 0.0
    %4297 = vmatprep.subr.mxu0 0.0
    %4298 = vmatpush1.msra.mxu0 0.0
    %4299 = vmatprep.subr.mxu0 0.0
    %4300 = vmatpush1.msra.mxu0 0.0
    %4301 = vmatprep.subr.mxu0 0.0
    %4302 = vmatpush1.msra.mxu0 0.0
    %4303 = vmatprep.subr.mxu0 0.0
    %4304 = vmatpush1.msra.mxu0 0.0
    %4305 = vmatprep.subr.mxu0 0.0
    %4306 = vmatpush1.msra.mxu0 0.0
    %4307 = vmatprep.subr.mxu0 0.0
    %4308 = vmatpush1.msra.mxu0 0.0
    %4309 = vmatprep.mubr.f32.mxu0 0.0
    %4310 = vmatmul.mubr.f32.gmra.mrb[0].mxu0 %v4238
    %v4311 = vpop.f32.mrb[0].mxu0
    %v4312 = vadd.f32 0.0, %v4311
    %v4313 = vpop.f32.mrb[0].mxu0
    %4314 = vmatprep.mubr.f32.mxu0 0.0
    %4315 = vmatmul.mubr.f32.gmra.mrb[0].mxu0 %v4241
    %v4316 = vpop.f32.mrb[0].mxu0
    %v4317 = vadd.f32 0.0, %v4316
    %v4318 = vpop.f32.mrb[0].mxu0
    %4319 = vdwg.mxu0
    %4322 = vrot.lane.b32.xlu0 %v3910, 8
    %v4323 = vpop.permute.xlu0 %4322
    %4324 = vrot.lane.b32.xlu0 %v3915, 8
    %v4325 = vpop.permute.xlu0 %4324
    %4330 = vrot.lane.b32.xlu0 %v4111, 16
    %v4331 = vpop.permute.xlu0 %4330
    %4332 = vrot.lane.b32.xlu0 %v4116, 16
    %v4333 = vpop.permute.xlu0 %4332
    %4338 = vrot.lane.b32.xlu0 %v4312, 24
    %v4339 = vpop.permute.xlu0 %4338
    %4340 = vrot.lane.b32.xlu0 %v4317, 24
    %v4341 = vpop.permute.xlu0 %4340
    %v4344 = vsel %vm432, %v3709, %v4323
    %v4345 = vsel %vm432, %v3714, %v4325
    %v4346 = vsel %vm1259, %v4344, %v4331
    %v4347 = vsel %vm1259, %v4345, %v4333
    %v4348 = vsel %vm1262, %v4346, %v4339
    %v4349 = vsel %vm1262, %v4347, %v4341
    %v4352 = vrot.slane %v4348, 7
    %v4353 = vrot.slane %v4349, 7
    %v4354 = vsel %vm242, %v4352, %v4353
    %v4356 = vsel %vm242, %v3510, %v4352
    %s4357 = scalar_lea.vmem [#allocation7], 32
    %v4358 = vld [vmem:[%s4357] sm:$0xff]
    %v4359 = vld [vmem:[%s4357 + $0x8] sm:$0xff]
    %v4360 = vld [vmem:[%s4357 + $0x10] sm:$0xff]
    %v4361 = vld [vmem:[%s4357 + $0x18] sm:$0xff]
    %v4363 = vsel %vm264, %v3509, 0
    %v4366 = vsel %vm264, %v4356, 0
    %v4368 = vsel %vm264, %v4354, 0
    %4370 = vmatprep.subr.mxu0 0.0
    %4371 = vmatpush1.msra.mxu0 %v4358
    %4372 = vmatprep.subr.mxu0 0.0
    %4373 = vmatpush1.msra.mxu0 %v4359
    %4374 = vmatprep.subr.mxu0 0.0
    %4375 = vmatpush1.msra.mxu0 %v4360
    %4376 = vmatprep.subr.mxu0 0.0
    %4377 = vmatpush1.msra.mxu0 %v4361
    %4378 = vmatprep.subr.mxu0 0.0
    %4379 = vmatpush1.msra.mxu0 0.0
    %4380 = vmatprep.subr.mxu0 0.0
    %4381 = vmatpush1.msra.mxu0 0.0
    %4382 = vmatprep.subr.mxu0 0.0
    %4383 = vmatpush1.msra.mxu0 0.0
    %4384 = vmatprep.subr.mxu0 0.0
    %4385 = vmatpush1.msra.mxu0 0.0
    %4386 = vmatprep.subr.mxu0 0.0
    %4387 = vmatpush1.msra.mxu0 0.0
    %4388 = vmatprep.subr.mxu0 0.0
    %4389 = vmatpush1.msra.mxu0 0.0
    %4390 = vmatprep.subr.mxu0 0.0
    %4391 = vmatpush1.msra.mxu0 0.0
    %4392 = vmatprep.subr.mxu0 0.0
    %4393 = vmatpush1.msra.mxu0 0.0
    %4394 = vmatprep.subr.mxu0 0.0
    %4395 = vmatpush1.msra.mxu0 0.0
    %4396 = vmatprep.subr.mxu0 0.0
    %4397 = vmatpush1.msra.mxu0 0.0
    %4398 = vmatprep.subr.mxu0 0.0
    %4399 = vmatpush1.msra.mxu0 0.0
    %4400 = vmatprep.subr.mxu0 0.0
    %4401 = vmatpush1.msra.mxu0 0.0
    %4402 = vmatprep.subr.mxu0 0.0
    %4403 = vmatpush1.msra.mxu0 0.0
    %4404 = vmatprep.subr.mxu0 0.0
    %4405 = vmatpush1.msra.mxu0 0.0
    %4406 = vmatprep.subr.mxu0 0.0
    %4407 = vmatpush1.msra.mxu0 0.0
    %4408 = vmatprep.subr.mxu0 0.0
    %4409 = vmatpush1.msra.mxu0 0.0
    %4410 = vmatprep.subr.mxu0 0.0
    %4411 = vmatpush1.msra.mxu0 0.0
    %4412 = vmatprep.subr.mxu0 0.0
    %4413 = vmatpush1.msra.mxu0 0.0
    %4414 = vmatprep.subr.mxu0 0.0
    %4415 = vmatpush1.msra.mxu0 0.0
    %4416 = vmatprep.subr.mxu0 0.0
    %4417 = vmatpush1.msra.mxu0 0.0
    %4418 = vmatprep.subr.mxu0 0.0
    %4419 = vmatpush1.msra.mxu0 0.0
    %4420 = vmatprep.subr.mxu0 0.0
    %4421 = vmatpush1.msra.mxu0 0.0
    %4422 = vmatprep.subr.mxu0 0.0
    %4423 = vmatpush1.msra.mxu0 0.0
    %4424 = vmatprep.subr.mxu0 0.0
    %4425 = vmatpush1.msra.mxu0 0.0
    %4426 = vmatprep.subr.mxu0 0.0
    %4427 = vmatpush1.msra.mxu0 0.0
    %4428 = vmatprep.subr.mxu0 0.0
    %4429 = vmatpush1.msra.mxu0 0.0
    %4430 = vmatprep.subr.mxu0 0.0
    %4431 = vmatpush1.msra.mxu0 0.0
    %4432 = vmatprep.subr.mxu0 0.0
    %4433 = vmatpush1.msra.mxu0 0.0
    %4434 = vmatprep.mubr.f32.mxu0 0.0
    %4435 = vmatmul.mubr.f32.gmra.mrb[0].mxu0 %v4363
    %v4436 = vpop.f32.mrb[0].mxu0
    %v4437 = vadd.f32 0.0, %v4436
    %v4438 = vpop.f32.mrb[0].mxu0
    %4439 = vmatprep.mubr.f32.mxu0 0.0
    %4440 = vmatmul.mubr.f32.gmra.mrb[0].mxu0 %v4366
    %v4441 = vpop.f32.mrb[0].mxu0
    %v4442 = vadd.f32 0.0, %v4441
    %v4443 = vpop.f32.mrb[0].mxu0
    %4444 = vmatprep.mubr.f32.mxu0 0.0
    %4445 = vmatmul.mubr.f32.gmra.mrb[0].mxu0 %v4368
    %v4446 = vpop.f32.mrb[0].mxu0
    %v4447 = vadd.f32 0.0, %v4446
    %v4448 = vpop.f32.mrb[0].mxu0
    %4449 = vdwg.mxu0
    %v4450 = vadd.f32 %v2509, %v4437
    %v4451 = vadd.f32 %v2510, %v4442
    %v4452 = vadd.f32 %v2511, %v4447
    %s4453 = scalar_lea.vmem %s10, 1
    %v4454 = vld [vmem:[%s4453] sm:$0x1]
    %v4456 = vlaneseq
    %v4457 = vshrl.u32 %v4456, 7
    %v4458 = vsub.s32 0, %v4457
    %v4459 = vrot.slane %v4454, %v4458
    %v4461 = vadd.f32 %v4450, %v4459
    %v4462 = vadd.f32 %v4451, %v4459
    %v4463 = vadd.f32 %v4452, %v4459
    %s4464 = scalar_lea.vmem %s11, 1
    %v4465 = vld [vmem:[%s4464] sm:$0x1]
    %s4466 = scalar_lea.vmem %s12, 1
    %v4467 = vld [vmem:[%s4466] sm:$0x1]
    %v4468 = vsel %vm264, %v4461, 0.0
    %4469 = vadd.xlane.f32.xlu0 %v4468
    %v4470 = vpop.xlane.xlu0 %4469
    %v4471 = vsel %vm264, %v4462, 0.0
    %4472 = vadd.xlane.f32.xlu0 %v4471
    %v4473 = vpop.xlane.xlu0 %4472
    %v4474 = vsel %vm271, %v4463, 0.0
    %4475 = vadd.xlane.f32.xlu0 %v4474
    %v4476 = vpop.xlane.xlu0 %4475
    %v4477 = vmul.f32 %v4470, %v275
    %v4478 = vmul.f32 %v4473, %v275
    %v4479 = vmul.f32 %v4476, %v275
    %v4480 = vsub.f32 %v4461, %v4477
    %v4481 = vsub.f32 %v4462, %v4478
    %v4482 = vsub.f32 %v4463, %v4479
    %v4483 = vmul.f32 %v4480, %v4480
    %v4484 = vmul.f32 %v4481, %v4481
    %v4485 = vmul.f32 %v4482, %v4482
    %v4486 = vsel %vm264, %v4483, 0.0
    %4487 = vadd.xlane.f32.xlu0 %v4486
    %v4488 = vpop.xlane.xlu0 %4487
    %v4489 = vsel %vm264, %v4484, 0.0
    %4490 = vadd.xlane.f32.xlu0 %v4489
    %v4491 = vpop.xlane.xlu0 %4490
    %v4492 = vsel %vm271, %v4485, 0.0
    %4493 = vadd.xlane.f32.xlu0 %v4492
    %v4494 = vpop.xlane.xlu0 %4493
    %v4495 = vmul.f32 %v4488, %v275
    %v4496 = vmul.f32 %v4491, %v275
    %v4497 = vmul.f32 %v4494, %v275
    %v4498 = vadd.f32 %v4495, 1e-05
    %v4499 = vadd.f32 %v4496, 1e-05
    %v4500 = vadd.f32 %v4497, 1e-05
    %v4501 = vrsqrt.pop %v4498
    %v4502 = vrsqrt.pop %v4499
    %v4503 = vrsqrt.pop %v4500
    %v4504 = vmul.f32 %v4480, %v4501
    %v4505 = vmul.f32 %v4481, %v4502
    %v4506 = vmul.f32 %v4482, %v4503
    %v4508 = vlaneseq
    %v4509 = vshrl.u32 %v4508, 7
    %v4510 = vsub.s32 0, %v4509
    %v4511 = vrot.slane %v4465, %v4510
    %v4513 = vmul.f32 %v4504, %v4511
    %v4514 = vmul.f32 %v4505, %v4511
    %v4515 = vmul.f32 %v4506, %v4511
    %v4517 = vlaneseq
    %v4518 = vshrl.u32 %v4517, 7
    %v4519 = vsub.s32 0, %v4518
    %v4520 = vrot.slane %v4467, %v4519
    %v4522 = vadd.f32 %v4513, %v4520
    %v4523 = vadd.f32 %v4514, %v4520
    %v4524 = vadd.f32 %v4515, %v4520
    %s4525 = scalar_lea.vmem [#allocation8], 32
    %v4526 = vld [vmem:[%s4525] sm:$0xff]
    %v4527 = vld [vmem:[%s4525 + $0x8] sm:$0xff]
    %v4528 = vld [vmem:[%s4525 + $0x10] sm:$0xff]
    %v4529 = vld [vmem:[%s4525 + $0x18] sm:$0xff]
    %s4530 = scalar_lea.vmem %s14, 1
    %v4531 = vld [vmem:[%s4530] sm:$0x1]
    %v4533 = vlaneseq
    %v4534 = vshrl.u32 %v4533, 7
    %v4535 = vsub.s32 0, %v4534
    %v4536 = vrot.slane %v4531, %v4535
    %v4539 = vsel %vm264, %v4522, 0
    %v4542 = vsel %vm264, %v4523, 0
    %v4545 = vsel %vm264, %v4524, 0
    %4547 = vmatprep.subr.mxu0 0.0
    %4548 = vmatpush1.msra.mxu0 %v4526
    %4549 = vmatprep.subr.mxu0 0.0
    %4550 = vmatpush1.msra.mxu0 %v4527
    %4551 = vmatprep.subr.mxu0 0.0
    %4552 = vmatpush1.msra.mxu0 %v4528
    %4553 = vmatprep.subr.mxu0 0.0
    %4554 = vmatpush1.msra.mxu0 %v4529
    %4555 = vmatprep.subr.mxu0 0.0
    %4556 = vmatpush1.msra.mxu0 0.0
    %4557 = vmatprep.subr.mxu0 0.0
    %4558 = vmatpush1.msra.mxu0 0.0
    %4559 = vmatprep.subr.mxu0 0.0
    %4560 = vmatpush1.msra.mxu0 0.0
    %4561 = vmatprep.subr.mxu0 0.0
    %4562 = vmatpush1.msra.mxu0 0.0
    %4563 = vmatprep.subr.mxu0 0.0
    %4564 = vmatpush1.msra.mxu0 0.0
    %4565 = vmatprep.subr.mxu0 0.0
    %4566 = vmatpush1.msra.mxu0 0.0
    %4567 = vmatprep.subr.mxu0 0.0
    %4568 = vmatpush1.msra.mxu0 0.0
    %4569 = vmatprep.subr.mxu0 0.0
    %4570 = vmatpush1.msra.mxu0 0.0
    %4571 = vmatprep.subr.mxu0 0.0
    %4572 = vmatpush1.msra.mxu0 0.0
    %4573 = vmatprep.subr.mxu0 0.0
    %4574 = vmatpush1.msra.mxu0 0.0
    %4575 = vmatprep.subr.mxu0 0.0
    %4576 = vmatpush1.msra.mxu0 0.0
    %4577 = vmatprep.subr.mxu0 0.0
    %4578 = vmatpush1.msra.mxu0 0.0
    %4579 = vmatprep.subr.mxu0 0.0
    %4580 = vmatpush1.msra.mxu0 0.0
    %4581 = vmatprep.subr.mxu0 0.0
    %4582 = vmatpush1.msra.mxu0 0.0
    %4583 = vmatprep.subr.mxu0 0.0
    %4584 = vmatpush1.msra.mxu0 0.0
    %4585 = vmatprep.subr.mxu0 0.0
    %4586 = vmatpush1.msra.mxu0 0.0
    %4587 = vmatprep.subr.mxu0 0.0
    %4588 = vmatpush1.msra.mxu0 0.0
    %4589 = vmatprep.subr.mxu0 0.0
    %4590 = vmatpush1.msra.mxu0 0.0
    %4591 = vmatprep.subr.mxu0 0.0
    %4592 = vmatpush1.msra.mxu0 0.0
    %4593 = vmatprep.subr.mxu0 0.0
    %4594 = vmatpush1.msra.mxu0 0.0
    %4595 = vmatprep.subr.mxu0 0.0
    %4596 = vmatpush1.msra.mxu0 0.0
    %4597 = vmatprep.subr.mxu0 0.0
    %4598 = vmatpush1.msra.mxu0 0.0
    %4599 = vmatprep.subr.mxu0 0.0
    %4600 = vmatpush1.msra.mxu0 0.0
    %4601 = vmatprep.subr.mxu0 0.0
    %4602 = vmatpush1.msra.mxu0 0.0
    %4603 = vmatprep.subr.mxu0 0.0
    %4604 = vmatpush1.msra.mxu0 0.0
    %4605 = vmatprep.subr.mxu0 0.0
    %4606 = vmatpush1.msra.mxu0 0.0
    %4607 = vmatprep.subr.mxu0 0.0
    %4608 = vmatpush1.msra.mxu0 0.0
    %4609 = vmatprep.subr.mxu0 0.0
    %4610 = vmatpush1.msra.mxu0 0.0
    %4611 = vmatprep.mubr.f32.mxu0 0.0
    %4612 = vmatmul.mubr.f32.gmra.mrb[0].mxu0 %v4539
    %v4613 = vpop.f32.mrb[0].mxu0
    %v4614 = vadd.f32 %v4536, %v4613
    %v4615 = vpop.f32.mrb[0].mxu0
    %4616 = vmatprep.mubr.f32.mxu0 0.0
    %4617 = vmatmul.mubr.f32.gmra.mrb[0].mxu0 %v4542
    %v4618 = vpop.f32.mrb[0].mxu0
    %v4619 = vadd.f32 %v4536, %v4618
    %v4620 = vpop.f32.mrb[0].mxu0
    %4621 = vmatprep.mubr.f32.mxu0 0.0
    %4622 = vmatmul.mubr.f32.gmra.mrb[0].mxu0 %v4545
    %v4623 = vpop.f32.mrb[0].mxu0
    %v4624 = vadd.f32 %v4536, %v4623
    %v4625 = vpop.f32.mrb[0].mxu0
    %4626 = vdwg.mxu0
    %v4627 = vmul.f32 %v4614, %v4614
    %v4628 = vmul.f32 %v4619, %v4619
    %v4629 = vmul.f32 %v4624, %v4624
    %v4630 = vmul.f32 %v4614, %v4627
    %v4631 = vmul.f32 %v4619, %v4628
    %v4632 = vmul.f32 %v4624, %v4629
    %v4633 = vmul.f32 %v4630, 0.044715
    %v4634 = vmul.f32 %v4631, 0.044715
    %v4635 = vmul.f32 %v4632, 0.044715
    %v4636 = vadd.f32 %v4614, %v4633
    %v4637 = vadd.f32 %v4619, %v4634
    %v4638 = vadd.f32 %v4624, %v4635
    %v4639 = vmul.f32 %v4636, 0.7978846
    %v4640 = vmul.f32 %v4637, 0.7978846
    %v4641 = vmul.f32 %v4638, 0.7978846
    %v4642 = vtanh.pop %v4639
    %v4643 = vtanh.pop %v4640
    %v4644 = vtanh.pop %v4641
    %v4645 = vadd.f32 %v4642, 1.0
    %v4646 = vadd.f32 %v4643, 1.0
    %v4647 = vadd.f32 %v4644, 1.0
    %v4648 = vmul.f32 %v4645, 0.5
    %v4649 = vmul.f32 %v4646, 0.5
    %v4650 = vmul.f32 %v4647, 0.5
    %v4651 = vmul.f32 %v4614, %v4648
    %v4652 = vmul.f32 %v4619, %v4649
    %v4653 = vmul.f32 %v4624, %v4650
    %s4654 = scalar_lea.vmem %s15, 128
    %v4655 = vld [vmem:[%s4654] sm:$0xff]
    %v4656 = vld [vmem:[%s4654 + $0x8] sm:$0xff]
    %v4657 = vld [vmem:[%s4654 + $0x10] sm:$0xff]
    %v4658 = vld [vmem:[%s4654 + $0x18] sm:$0xff]
    %v4659 = vld [vmem:[%s4654 + $0x20] sm:$0xff]
    %v4660 = vld [vmem:[%s4654 + $0x28] sm:$0xff]
    %v4661 = vld [vmem:[%s4654 + $0x30] sm:$0xff]
    %v4662 = vld [vmem:[%s4654 + $0x38] sm:$0xff]
    %v4663 = vld [vmem:[%s4654 + $0x40] sm:$0xff]
    %v4664 = vld [vmem:[%s4654 + $0x48] sm:$0xff]
    %v4665 = vld [vmem:[%s4654 + $0x50] sm:$0xff]
    %v4666 = vld [vmem:[%s4654 + $0x58] sm:$0xff]
    %v4667 = vld [vmem:[%s4654 + $0x60] sm:$0xff]
    %v4668 = vld [vmem:[%s4654 + $0x68] sm:$0xff]
    %v4669 = vld [vmem:[%s4654 + $0x70] sm:$0xff]
    %v4670 = vld [vmem:[%s4654 + $0x78] sm:$0xff]
    %4671 = vmatprep.subr.mxu0 0.0
    %4672 = vmatpush1.msra.mxu0 %v4655
    %4673 = vmatprep.subr.mxu0 0.0
    %4674 = vmatpush1.msra.mxu0 %v4656
    %4675 = vmatprep.subr.mxu0 0.0
    %4676 = vmatpush1.msra.mxu0 %v4657
    %4677 = vmatprep.subr.mxu0 0.0
    %4678 = vmatpush1.msra.mxu0 %v4658
    %4679 = vmatprep.subr.mxu0 0.0
    %4680 = vmatpush1.msra.mxu0 %v4659
    %4681 = vmatprep.subr.mxu0 0.0
    %4682 = vmatpush1.msra.mxu0 %v4660
    %4683 = vmatprep.subr.mxu0 0.0
    %4684 = vmatpush1.msra.mxu0 %v4661
    %4685 = vmatprep.subr.mxu0 0.0
    %4686 = vmatpush1.msra.mxu0 %v4662
    %4687 = vmatprep.subr.mxu0 0.0
    %4688 = vmatpush1.msra.mxu0 %v4663
    %4689 = vmatprep.subr.mxu0 0.0
    %4690 = vmatpush1.msra.mxu0 %v4664
    %4691 = vmatprep.subr.mxu0 0.0
    %4692 = vmatpush1.msra.mxu0 %v4665
    %4693 = vmatprep.subr.mxu0 0.0
    %4694 = vmatpush1.msra.mxu0 %v4666
    %4695 = vmatprep.subr.mxu0 0.0
    %4696 = vmatpush1.msra.mxu0 %v4667
    %4697 = vmatprep.subr.mxu0 0.0
    %4698 = vmatpush1.msra.mxu0 %v4668
    %4699 = vmatprep.subr.mxu0 0.0
    %4700 = vmatpush1.msra.mxu0 %v4669
    %4701 = vmatprep.subr.mxu0 0.0
    %4702 = vmatpush1.msra.mxu0 %v4670
    %4703 = vmatprep.subr.mxu0 0.0
    %4704 = vmatpush1.msra.mxu0 0.0
    %4705 = vmatprep.subr.mxu0 0.0
    %4706 = vmatpush1.msra.mxu0 0.0
    %4707 = vmatprep.subr.mxu0 0.0
    %4708 = vmatpush1.msra.mxu0 0.0
    %4709 = vmatprep.subr.mxu0 0.0
    %4710 = vmatpush1.msra.mxu0 0.0
    %4711 = vmatprep.subr.mxu0 0.0
    %4712 = vmatpush1.msra.mxu0 0.0
    %4713 = vmatprep.subr.mxu0 0.0
    %4714 = vmatpush1.msra.mxu0 0.0
    %4715 = vmatprep.subr.mxu0 0.0
    %4716 = vmatpush1.msra.mxu0 0.0
    %4717 = vmatprep.subr.mxu0 0.0
    %4718 = vmatpush1.msra.mxu0 0.0
    %4719 = vmatprep.subr.mxu0 0.0
    %4720 = vmatpush1.msra.mxu0 0.0
    %4721 = vmatprep.subr.mxu0 0.0
    %4722 = vmatpush1.msra.mxu0 0.0
    %4723 = vmatprep.subr.mxu0 0.0
    %4724 = vmatpush1.msra.mxu0 0.0
    %4725 = vmatprep.subr.mxu0 0.0
    %4726 = vmatpush1.msra.mxu0 0.0
    %4727 = vmatprep.subr.mxu0 0.0
    %4728 = vmatpush1.msra.mxu0 0.0
    %4729 = vmatprep.subr.mxu0 0.0
    %4730 = vmatpush1.msra.mxu0 0.0
    %4731 = vmatprep.subr.mxu0 0.0
    %4732 = vmatpush1.msra.mxu0 0.0
    %4733 = vmatprep.subr.mxu0 0.0
    %4734 = vmatpush1.msra.mxu0 0.0
    %4735 = vmatprep.mubr.f32.mxu0 0.0
    %4736 = vmatmul.mubr.f32.gmra.mrb[0].mxu0 %v4651
    %v4737 = vpop.f32.mrb[0].mxu0
    %v4738 = vadd.f32 0.0, %v4737
    %v4739 = vpop.f32.mrb[0].mxu0
    %4740 = vmatprep.mubr.f32.mxu0 0.0
    %4741 = vmatmul.mubr.f32.gmra.mrb[0].mxu0 %v4652
    %v4742 = vpop.f32.mrb[0].mxu0
    %v4743 = vadd.f32 0.0, %v4742
    %v4744 = vpop.f32.mrb[0].mxu0
    %4745 = vmatprep.mubr.f32.mxu0 0.0
    %4746 = vmatmul.mubr.f32.gmra.mrb[0].mxu0 %v4653
    %v4747 = vpop.f32.mrb[0].mxu0
    %v4748 = vpop.f32.mrb[0].mxu0
    %4749 = vdwg.mxu0
    %v4750 = vadd.f32 %v4461, %v4738
    %v4751 = vadd.f32 %v4462, %v4743
    %s4752 = scalar_lea.vmem %s16, 1
    %v4753 = vld [vmem:[%s4752] sm:$0x1]
    %v4755 = vlaneseq
    %v4756 = vshrl.u32 %v4755, 7
    %v4757 = vsub.s32 0, %v4756
    %v4758 = vrot.slane %v4753, %v4757
    %v4760 = vadd.f32 %v4750, %v4758
    %v4761 = vadd.f32 %v4751, %v4758
    %v4762 = vsel %vm242, %v4760, %v4761
    %v4763 = vld [vmem:[%s17] sm:$0x1]
    %v4764 = vld [vmem:[%s18] sm:$0x1]
    %v4765 = vsel %vm271, %v4762, 0.0
    %4766 = vadd.xlane.f32.xlu0 %v4765
    %v4767 = vpop.xlane.xlu0 %4766
    %v4768 = vmul.f32 %v4767, %v275
    %v4769 = vsub.f32 %v4762, %v4768
    %v4770 = vmul.f32 %v4769, %v4769
    %v4771 = vsel %vm271, %v4770, 0.0
    %4772 = vadd.xlane.f32.xlu0 %v4771
    %v4773 = vpop.xlane.xlu0 %4772
    %v4774 = vmul.f32 %v4773, %v275
    %v4775 = vadd.f32 %v4774, 1e-05
    %v4776 = vrsqrt.pop %v4775
    %v4777 = vmul.f32 %v4769, %v4776
    %v4779 = vlaneseq
    %v4780 = vshrl.u32 %v4779, 7
    %v4781 = vsub.s32 0, %v4780
    %v4782 = vrot.slane %v4763, %v4781
    %v4784 = vmul.f32 %v4777, %v4782
    %v4786 = vlaneseq
    %v4787 = vshrl.u32 %v4786, 7
    %v4788 = vsub.s32 0, %v4787
    %v4789 = vrot.slane %v4764, %v4788
    %v4791 = vadd.f32 %v4784, %v4789
    %v4792 = vld [vmem:[#allocation10] sm:$0xff]
    %v4793 = vld [vmem:[#allocation10 + $0x8] sm:$0xff]
    %v4794 = vld [vmem:[#allocation10 + $0x10] sm:$0xff]
    %v4795 = vld [vmem:[#allocation10 + $0x18] sm:$0xff]
    %v4796 = vld [vmem:[%s20] sm:$0x1]
    %v4798 = vlaneseq
    %v4799 = vshrl.u32 %v4798, 7
    %v4800 = vsub.s32 0, %v4799
    %v4801 = vrot.slane %v4796, %v4800
    %v4804 = vsel %vm264, %v4791, 0
    %4806 = vmatprep.subr.mxu0 0.0
    %4807 = vmatpush1.msra.mxu0 %v4792
    %4808 = vmatprep.subr.mxu0 0.0
    %4809 = vmatpush1.msra.mxu0 %v4793
    %4810 = vmatprep.subr.mxu0 0.0
    %4811 = vmatpush1.msra.mxu0 %v4794
    %4812 = vmatprep.subr.mxu0 0.0
    %4813 = vmatpush1.msra.mxu0 %v4795
    %4814 = vmatprep.subr.mxu0 0.0
    %4815 = vmatpush1.msra.mxu0 0.0
    %4816 = vmatprep.subr.mxu0 0.0
    %4817 = vmatpush1.msra.mxu0 0.0
    %4818 = vmatprep.subr.mxu0 0.0
    %4819 = vmatpush1.msra.mxu0 0.0
    %4820 = vmatprep.subr.mxu0 0.0
    %4821 = vmatpush1.msra.mxu0 0.0
    %4822 = vmatprep.subr.mxu0 0.0
    %4823 = vmatpush1.msra.mxu0 0.0
    %4824 = vmatprep.subr.mxu0 0.0
    %4825 = vmatpush1.msra.mxu0 0.0
    %4826 = vmatprep.subr.mxu0 0.0
    %4827 = vmatpush1.msra.mxu0 0.0
    %4828 = vmatprep.subr.mxu0 0.0
    %4829 = vmatpush1.msra.mxu0 0.0
    %4830 = vmatprep.subr.mxu0 0.0
    %4831 = vmatpush1.msra.mxu0 0.0
    %4832 = vmatprep.subr.mxu0 0.0
    %4833 = vmatpush1.msra.mxu0 0.0
    %4834 = vmatprep.subr.mxu0 0.0
    %4835 = vmatpush1.msra.mxu0 0.0
    %4836 = vmatprep.subr.mxu0 0.0
    %4837 = vmatpush1.msra.mxu0 0.0
    %4838 = vmatprep.subr.mxu0 0.0
    %4839 = vmatpush1.msra.mxu0 0.0
    %4840 = vmatprep.subr.mxu0 0.0
    %4841 = vmatpush1.msra.mxu0 0.0
    %4842 = vmatprep.subr.mxu0 0.0
    %4843 = vmatpush1.msra.mxu0 0.0
    %4844 = vmatprep.subr.mxu0 0.0
    %4845 = vmatpush1.msra.mxu0 0.0
    %4846 = vmatprep.subr.mxu0 0.0
    %4847 = vmatpush1.msra.mxu0 0.0
    %4848 = vmatprep.subr.mxu0 0.0
    %4849 = vmatpush1.msra.mxu0 0.0
    %4850 = vmatprep.subr.mxu0 0.0
    %4851 = vmatpush1.msra.mxu0 0.0
    %4852 = vmatprep.subr.mxu0 0.0
    %4853 = vmatpush1.msra.mxu0 0.0
    %4854 = vmatprep.subr.mxu0 0.0
    %4855 = vmatpush1.msra.mxu0 0.0
    %4856 = vmatprep.subr.mxu0 0.0
    %4857 = vmatpush1.msra.mxu0 0.0
    %4858 = vmatprep.subr.mxu0 0.0
    %4859 = vmatpush1.msra.mxu0 0.0
    %4860 = vmatprep.subr.mxu0 0.0
    %4861 = vmatpush1.msra.mxu0 0.0
    %4862 = vmatprep.subr.mxu0 0.0
    %4863 = vmatpush1.msra.mxu0 0.0
    %4864 = vmatprep.subr.mxu0 0.0
    %4865 = vmatpush1.msra.mxu0 0.0
    %4866 = vmatprep.subr.mxu0 0.0
    %4867 = vmatpush1.msra.mxu0 0.0
    %4868 = vmatprep.subr.mxu0 0.0
    %4869 = vmatpush1.msra.mxu0 0.0
    %4870 = vmatprep.mubr.f32.mxu0 0.0
    %4871 = vmatmul.mubr.f32.gmra.mrb[0].mxu0 %v4804
    %v4872 = vpop.f32.mrb[0].mxu0
    %v4873 = vadd.f32 %v4801, %v4872
    %v4874 = vpop.f32.mrb[0].mxu0
    %4875 = vdwg.mxu0
    %vm4876 = vcmask 9216
    %4877 = vst.msk [vmem:[#allocation11] sm:$0x3] %vm4876, %v4873
    // Predicated region
    $region106: #{vit_forward.1} parent=1 // pred_check
      _
    $region107: #{vit_forward.1} parent=1 // pred_check_branch
      %4879 = sbr.rel (0) target = $region109
    $region108: #{vit_forward.1} parent=1 // pred_region
      %s4881 = ssub.s32 32, 32
      %4882 = vsyncadd [#allocation4], %s4881
      %s4884 = sshll.u32 [#allocation11], 4
      %s4885 = int_to_ptr.vmem [resolvable:$true] %s4884
      %4887 = dma.vmem_to_hbm [thread:$0]  %s4885, 32, %s21, [#allocation4]
    $region109: #{vit_forward.1} parent=1 // pred_fallthru
      _
    // Predicated region
    $region110: #{vit_forward.1} parent=1 // pred_check
      _
    $region111: #{vit_forward.1} parent=1 // pred_check_branch
      %4889 = sbr.rel (0) target = $region113
    $region112: #{vit_forward.1} parent=1 // pred_region
      %4890 = dma.done [#allocation4], 32
    $region113: #{vit_forward.1} parent=1 // pred_fallthru
      _
    %4891 = vsyncpa [#allocation3], 1
    %4892 = vsyncpa [#allocation6], 1
    %4893 = vsyncpa [#allocation9], 1
    %4894 = vsyncpa [#allocation4], 1

</llo_original>
